<compile_context>
chip_gen: v7x
topology: tpu7x:2x2x1
jax: 0.10.0
libtpu: 0.0.40
codegen_flags: <defaults>
</compile_context>

<pallas_src>
import functools

import jax
import jax.numpy as jnp
from jax.experimental import pallas as pl
from jax.experimental.pallas import tpu as pltpu

KSIZE = 7
PAD = 3
EPS = 1e-6
INV_SQRT2 = 0.7071067811865476


def convnext_block(x_nchw, params, *, matmul_dtype=jnp.bfloat16):
    """ConvNeXt block forward.  x_nchw: (B, C, H, W) float32 (PyTorch layout)."""
    dww, dwb, lnw, lnb, w1, b1, w2, b2, gamma = params
    B, C, H, W = x_nchw.shape
    WC = W * C                       # lane-dense flattened (W, C) axis
    WPC = (W + 2 * PAD) * C          # padded flat width
    HP = H + 2 * PAD
    if WC % 128 != 0:
        # TODO(synk): pad channels (or tile W) so W*C is a lane multiple.
        raise NotImplementedError("W*C must be a multiple of 128 for the lane-dense layout")

    # NCHW -> NHWC -> (B, H, W*C).  The NCHW<->NHWC transposes remain only
    # because the module contract is NCHW; an NHWC-resident model drops them.
    x_flat = jnp.transpose(x_nchw, (0, 2, 3, 1)).reshape(B, H, WC)

    # ---- parameter preprocessing into the flat lane-dense layout (tiny) ----
    dww_flat = jnp.tile(dww.reshape(KSIZE * KSIZE, C), (1, W))        # (49, W*C)
    dwb_flat = jnp.tile(dwb, (1, W))                                  # (1, W*C)
    lnw_flat = jnp.tile(lnw, (1, W))
    lnb_flat = jnp.tile(lnb, (1, W))
    b1_flat = jnp.tile(b1, (1, W))                                    # (1, W*4C)
    b2_flat = jnp.tile(b2, (1, W))
    gamma_flat = jnp.tile(gamma, (1, W))
    eye_w = jnp.eye(W, dtype=jnp.float32)
    # Per-pixel channel mean as a block-diagonal matmul: reduce + broadcast over
    # each C-lane group in one MXU pass (kept f32 for LN-stat accuracy).
    mavg = jnp.kron(eye_w, jnp.full((C, C), 1.0 / C, jnp.float32))    # (W*C, W*C)
    # Pointwise convs as block-diagonal matmuls in the flat layout.
    w1_big = jnp.kron(eye_w, w1).astype(matmul_dtype)                 # (W*C, W*4C)
    w2_big = jnp.kron(eye_w, w2).astype(matmul_dtype)                 # (W*4C, W*C)

    def kernel(x_ref, dww_ref, dwb_ref, lnw_ref, lnb_ref, mavg_ref,
               w1_ref, b1_ref, w2_ref, b2_ref, gamma_ref, out_ref, xpad_ref):
        x = x_ref[0]                                      # (H, W*C), lane-dense

        # Zero-padded conv halo built in VMEM scratch (no padded HBM copy).
        xpad_ref[...] = jnp.zeros_like(xpad_ref)
        xpad_ref[pl.ds(PAD, H), pl.ds(PAD * C, WC)] = x
        xpad = xpad_ref[...]                              # (H+6, (W+6)*C)

        # ---- depthwise 7x7, padding=3, groups=C (VPU MACs) ----
        acc = jnp.zeros((H, WC), jnp.float32)
        for kh in range(KSIZE):
            row = xpad[kh:kh + H, :]
            for kw in range(KSIZE):
                off = kw * C
                acc = acc + row[:, off:off + WC] * dww_ref[kh * KSIZE + kw, :]
        acc = acc + dwb_ref[0]

        # ---- LayerNorm over channels (eps=1e-6), single-pass statistics ----
        mean = jnp.dot(acc, mavg_ref[...], preferred_element_type=jnp.float32)
        mean_sq = jnp.dot(acc * acc, mavg_ref[...], preferred_element_type=jnp.float32)
        var = mean_sq - mean * mean
        xn = (acc - mean) * jax.lax.rsqrt(var + EPS)
        xn = xn * lnw_ref[0] + lnb_ref[0]

        # ---- pointwise MLP: Linear(C->4C) -> exact GELU -> Linear(4C->C) ----
        h = jnp.dot(xn.astype(matmul_dtype), w1_ref[...],
                    preferred_element_type=jnp.float32) + b1_ref[0]
        h = 0.5 * h * (1.0 + jax.lax.erf(h * INV_SQRT2))  # PyTorch-default exact GELU
        y = jnp.dot(h.astype(matmul_dtype), w2_ref[...],
                    preferred_element_type=jnp.float32) + b2_ref[0]

        # ---- layer scale + residual (residual reused from x in VMEM) ----
        out_ref[0] = y * gamma_ref[0] + x

    out_flat = pl.pallas_call(
        kernel,
        out_shape=jax.ShapeDtypeStruct((B, H, WC), jnp.float32),
        grid=(B,),
        in_specs=[
            pl.BlockSpec((1, H, WC), lambda b: (b, 0, 0)),            # x (flat)
            pl.BlockSpec((KSIZE * KSIZE, WC), lambda b: (0, 0)),      # dw weights
            pl.BlockSpec((1, WC), lambda b: (0, 0)),                  # dw bias
            pl.BlockSpec((1, WC), lambda b: (0, 0)),                  # ln weight
            pl.BlockSpec((1, WC), lambda b: (0, 0)),                  # ln bias
            pl.BlockSpec((WC, WC), lambda b: (0, 0)),                 # channel-avg mat
            pl.BlockSpec((WC, 4 * WC), lambda b: (0, 0)),             # pwconv1
            pl.BlockSpec((1, 4 * WC), lambda b: (0, 0)),              # b1
            pl.BlockSpec((4 * WC, WC), lambda b: (0, 0)),             # pwconv2
            pl.BlockSpec((1, WC), lambda b: (0, 0)),                  # b2
            pl.BlockSpec((1, WC), lambda b: (0, 0)),                  # gamma
        ],
        out_specs=pl.BlockSpec((1, H, WC), lambda b: (b, 0, 0)),
        scratch_shapes=[pltpu.VMEM((HP, WPC), jnp.float32)],
        compiler_params=pltpu.CompilerParams(dimension_semantics=("parallel",)),
    )(x_flat, dww_flat, dwb_flat, lnw_flat, lnb_flat, mavg, w1_big,
      b1_flat, w2_big, b2_flat, gamma_flat)

    out_nhwc = out_flat.reshape(B, H, W, C)
    return jnp.transpose(out_nhwc, (0, 3, 1, 2))


def ref_forward(x, params):
    """Pure-JAX reference matching the PyTorch module semantics (NCHW in/out)."""
    dww, dwb, lnw, lnb, w1, b1, w2, b2, gamma = params
    C = x.shape[1]
    w_oihw = jnp.transpose(dww, (2, 0, 1))[:, None, :, :]             # (C,1,7,7)
    conv = jax.lax.conv_general_dilated(
        x, w_oihw, window_strides=(1, 1), padding=((PAD, PAD), (PAD, PAD)),
        feature_group_count=C, dimension_numbers=("NCHW", "OIHW", "NCHW"))
    conv = conv + dwb.reshape(1, C, 1, 1)
    h = jnp.transpose(conv, (0, 2, 3, 1))
    mean = h.mean(-1, keepdims=True)
    var = ((h - mean) ** 2).mean(-1, keepdims=True)
    h = (h - mean) / jnp.sqrt(var + 1e-6) * lnw[0] + lnb[0]
    h = h @ w1 + b1[0]
    h = jax.nn.gelu(h, approximate=False)
    h = h @ w2 + b2[0]
    h = h * gamma[0]
    return x + jnp.transpose(h, (0, 3, 1, 2))


def init_params(key, dim, layer_scale_init_value=1e-6):
    k = jax.random.split(key, 7)
    dww = 0.1 * jax.random.normal(k[0], (KSIZE, KSIZE, dim), jnp.float32)
    dwb = 0.1 * jax.random.normal(k[1], (1, dim), jnp.float32)
    lnw = jnp.ones((1, dim), jnp.float32)
    lnb = jnp.zeros((1, dim), jnp.float32)
    w1 = 0.1 * jax.random.normal(k[2], (dim, 4 * dim), jnp.float32)    # (in, out)
    b1 = 0.1 * jax.random.normal(k[3], (1, 4 * dim), jnp.float32)
    w2 = 0.1 * jax.random.normal(k[4], (4 * dim, dim), jnp.float32)    # (in, out)
    b2 = 0.1 * jax.random.normal(k[5], (1, dim), jnp.float32)
    gamma = layer_scale_init_value * jnp.ones((1, dim), jnp.float32)
    return (dww, dwb, lnw, lnb, w1, b1, w2, b2, gamma)


if __name__ == "__main__":
    B, C, H, W = 2, 8, 16, 16           # W * C = 128 -> lane-dense flat layout
    key = jax.random.PRNGKey(0)
    kx, kp = jax.random.split(key)
    x = jax.random.normal(kx, (B, C, H, W), jnp.float32)   # NCHW, like PyTorch

    fwd_bf16 = jax.jit(convnext_block)                                     # bf16 MXU operands
    fwd_f32 = jax.jit(functools.partial(convnext_block, matmul_dtype=jnp.float32))

    # 1) Production config (bf16 matmul operands), module-default layer scale.
    params = init_params(kp, C, layer_scale_init_value=1e-6)
    out = jax.block_until_ready(fwd_bf16(x, params))
    ref = jax.block_until_ready(ref_forward(x, params))
    assert out.shape == (B, C, H, W)
    assert jnp.allclose(out, ref, atol=1e-4, rtol=1e-4), float(jnp.max(jnp.abs(out - ref)))

    # 2) Exactness check of the full conv/LN/MLP branch: f32 matmul operands and
    #    layer scale 1.0 so the branch is not hidden behind gamma=1e-6.
    params1 = init_params(kp, C, layer_scale_init_value=1.0)
    out1 = jax.block_until_ready(fwd_f32(x, params1))
    ref1 = jax.block_until_ready(ref_forward(x, params1))
    assert jnp.allclose(out1, ref1, atol=1e-3, rtol=1e-3), float(jnp.max(jnp.abs(out1 - ref1)))

    print("KERNEL_OK")
</pallas_src>

<mosaic_0001>
module attributes {stable_mosaic.version = 11 : i64} {
  func.func @kernel(%arg0: i32, %arg1: memref<1x16x128xf32, #tpu.memory_space<vmem>>, %arg2: memref<49x128xf32, #tpu.memory_space<vmem>>, %arg3: memref<1x128xf32, #tpu.memory_space<vmem>>, %arg4: memref<1x128xf32, #tpu.memory_space<vmem>>, %arg5: memref<1x128xf32, #tpu.memory_space<vmem>>, %arg6: memref<128x128xf32, #tpu.memory_space<vmem>>, %arg7: memref<128x512xbf16, #tpu.memory_space<vmem>>, %arg8: memref<1x512xf32, #tpu.memory_space<vmem>>, %arg9: memref<512x128xbf16, #tpu.memory_space<vmem>>, %arg10: memref<1x128xf32, #tpu.memory_space<vmem>>, %arg11: memref<1x128xf32, #tpu.memory_space<vmem>>, %arg12: memref<1x16x128xf32, #tpu.memory_space<vmem>>, %arg13: memref<22x176xf32, #tpu.memory_space<vmem>>) attributes {dimension_semantics = [#tpu.dimension_semantics<parallel>], iteration_bounds = array<i64: 2>, scalar_prefetch = 0 : i64, scratch_operands = 1 : i64, tpu.core_type = #tpu.core_type<tc>, window_params = [{transform_indices = @transform_0, window_bounds = array<i64: 1, 16, 128>}, {pipeline_mode = #tpu.pipeline_mode<synchronous>, transform_indices = @transform_1, window_bounds = array<i64: 49, 128>}, {pipeline_mode = #tpu.pipeline_mode<synchronous>, transform_indices = @transform_2, window_bounds = array<i64: 1, 128>}, {pipeline_mode = #tpu.pipeline_mode<synchronous>, transform_indices = @transform_3, window_bounds = array<i64: 1, 128>}, {pipeline_mode = #tpu.pipeline_mode<synchronous>, transform_indices = @transform_4, window_bounds = array<i64: 1, 128>}, {pipeline_mode = #tpu.pipeline_mode<synchronous>, transform_indices = @transform_5, window_bounds = array<i64: 128, 128>}, {pipeline_mode = #tpu.pipeline_mode<synchronous>, transform_indices = @transform_6, window_bounds = array<i64: 128, 512>}, {pipeline_mode = #tpu.pipeline_mode<synchronous>, transform_indices = @transform_7, window_bounds = array<i64: 1, 512>}, {pipeline_mode = #tpu.pipeline_mode<synchronous>, transform_indices = @transform_8, window_bounds = array<i64: 512, 128>}, {pipeline_mode = #tpu.pipeline_mode<synchronous>, transform_indices = @transform_9, window_bounds = array<i64: 1, 128>}, {pipeline_mode = #tpu.pipeline_mode<synchronous>, transform_indices = @transform_10, window_bounds = array<i64: 1, 128>}, {transform_indices = @transform_11, window_bounds = array<i64: 1, 16, 128>}]} {
    %c0 = arith.constant 0 : index
    %c0_0 = arith.constant 0 : index
    %c0_1 = arith.constant 0 : index
    %0 = vector.load %arg1[%c0, %c0_0, %c0_1] : memref<1x16x128xf32, #tpu.memory_space<vmem>>, vector<1x16x128xf32>
    %1 = vector.shape_cast %0 : vector<1x16x128xf32> to vector<16x128xf32>
    %cst = arith.constant 0.000000e+00 : f32
    %2 = vector.broadcast %cst : f32 to vector<22x176xf32>
    %c0_2 = arith.constant 0 : index
    %c0_3 = arith.constant 0 : index
    %3 = vector.load %arg13[%c0_2, %c0_3] : memref<22x176xf32, #tpu.memory_space<vmem>>, vector<22x176xf32>
    tpu.vector_store %arg13[%c0_2, %c0_3], %2 {strides = array<i32>} : memref<22x176xf32, #tpu.memory_space<vmem>>, vector<22x176xf32>,
    %c3 = arith.constant 3 : index
    %c24 = arith.constant 24 : index
    %4 = vector.load %arg13[%c3, %c24] : memref<22x176xf32, #tpu.memory_space<vmem>>, vector<16x128xf32>
    tpu.vector_store %arg13[%c3, %c24], %1 {strides = array<i32>} : memref<22x176xf32, #tpu.memory_space<vmem>>, vector<16x128xf32>,
    %c0_4 = arith.constant 0 : index
    %c0_5 = arith.constant 0 : index
    %5 = vector.load %arg13[%c0_4, %c0_5] : memref<22x176xf32, #tpu.memory_space<vmem>>, vector<22x176xf32>
    %cst_6 = arith.constant 0.000000e+00 : f32
    %6 = vector.broadcast %cst_6 : f32 to vector<16x128xf32>
    %7 = vector.extract_strided_slice %5 {offsets = [0, 0], sizes = [16, 176], strides = [1, 1]} : vector<22x176xf32> to vector<16x176xf32>
    %8 = vector.extract_strided_slice %7 {offsets = [0, 0], sizes = [16, 128], strides = [1, 1]} : vector<16x176xf32> to vector<16x128xf32>
    %c0_7 = arith.constant 0 : index
    %c0_8 = arith.constant 0 : index
    %9 = vector.load %arg2[%c0_7, %c0_8] : memref<49x128xf32, #tpu.memory_space<vmem>>, vector<1x128xf32>
    %10 = vector.shape_cast %9 : vector<1x128xf32> to vector<128xf32>
    %11 = vector.shape_cast %10 : vector<128xf32> to vector<1x128xf32>
    %12 = vector.broadcast %11 : vector<1x128xf32> to vector<16x128xf32>
    %13 = arith.mulf %8, %12 : vector<16x128xf32>
    %14 = arith.addf %6, %13 : vector<16x128xf32>
    %15 = vector.extract_strided_slice %7 {offsets = [0, 8], sizes = [16, 128], strides = [1, 1]} : vector<16x176xf32> to vector<16x128xf32>
    %c1 = arith.constant 1 : index
    %c0_9 = arith.constant 0 : index
    %16 = vector.load %arg2[%c1, %c0_9] : memref<49x128xf32, #tpu.memory_space<vmem>>, vector<1x128xf32>
    %17 = vector.shape_cast %16 : vector<1x128xf32> to vector<128xf32>
    %18 = vector.shape_cast %17 : vector<128xf32> to vector<1x128xf32>
    %19 = vector.broadcast %18 : vector<1x128xf32> to vector<16x128xf32>
    %20 = arith.mulf %15, %19 : vector<16x128xf32>
    %21 = arith.addf %14, %20 : vector<16x128xf32>
    %22 = vector.extract_strided_slice %7 {offsets = [0, 16], sizes = [16, 128], strides = [1, 1]} : vector<16x176xf32> to vector<16x128xf32>
    %c2 = arith.constant 2 : index
    %c0_10 = arith.constant 0 : index
    %23 = vector.load %arg2[%c2, %c0_10] : memref<49x128xf32, #tpu.memory_space<vmem>>, vector<1x128xf32>
    %24 = vector.shape_cast %23 : vector<1x128xf32> to vector<128xf32>
    %25 = vector.shape_cast %24 : vector<128xf32> to vector<1x128xf32>
    %26 = vector.broadcast %25 : vector<1x128xf32> to vector<16x128xf32>
    %27 = arith.mulf %22, %26 : vector<16x128xf32>
    %28 = arith.addf %21, %27 : vector<16x128xf32>
    %29 = vector.extract_strided_slice %7 {offsets = [0, 24], sizes = [16, 128], strides = [1, 1]} : vector<16x176xf32> to vector<16x128xf32>
    %c3_11 = arith.constant 3 : index
    %c0_12 = arith.constant 0 : index
    %30 = vector.load %arg2[%c3_11, %c0_12] : memref<49x128xf32, #tpu.memory_space<vmem>>, vector<1x128xf32>
    %31 = vector.shape_cast %30 : vector<1x128xf32> to vector<128xf32>
    %32 = vector.shape_cast %31 : vector<128xf32> to vector<1x128xf32>
    %33 = vector.broadcast %32 : vector<1x128xf32> to vector<16x128xf32>
    %34 = arith.mulf %29, %33 : vector<16x128xf32>
    %35 = arith.addf %28, %34 : vector<16x128xf32>
    %36 = vector.extract_strided_slice %7 {offsets = [0, 32], sizes = [16, 128], strides = [1, 1]} : vector<16x176xf32> to vector<16x128xf32>
    %c4 = arith.constant 4 : index
    %c0_13 = arith.constant 0 : index
    %37 = vector.load %arg2[%c4, %c0_13] : memref<49x128xf32, #tpu.memory_space<vmem>>, vector<1x128xf32>
    %38 = vector.shape_cast %37 : vector<1x128xf32> to vector<128xf32>
    %39 = vector.shape_cast %38 : vector<128xf32> to vector<1x128xf32>
    %40 = vector.broadcast %39 : vector<1x128xf32> to vector<16x128xf32>
    %41 = arith.mulf %36, %40 : vector<16x128xf32>
    %42 = arith.addf %35, %41 : vector<16x128xf32>
    %43 = vector.extract_strided_slice %7 {offsets = [0, 40], sizes = [16, 128], strides = [1, 1]} : vector<16x176xf32> to vector<16x128xf32>
    %c5 = arith.constant 5 : index
    %c0_14 = arith.constant 0 : index
    %44 = vector.load %arg2[%c5, %c0_14] : memref<49x128xf32, #tpu.memory_space<vmem>>, vector<1x128xf32>
    %45 = vector.shape_cast %44 : vector<1x128xf32> to vector<128xf32>
    %46 = vector.shape_cast %45 : vector<128xf32> to vector<1x128xf32>
    %47 = vector.broadcast %46 : vector<1x128xf32> to vector<16x128xf32>
    %48 = arith.mulf %43, %47 : vector<16x128xf32>
    %49 = arith.addf %42, %48 : vector<16x128xf32>
    %50 = vector.extract_strided_slice %7 {offsets = [0, 48], sizes = [16, 128], strides = [1, 1]} : vector<16x176xf32> to vector<16x128xf32>
    %c6 = arith.constant 6 : index
    %c0_15 = arith.constant 0 : index
    %51 = vector.load %arg2[%c6, %c0_15] : memref<49x128xf32, #tpu.memory_space<vmem>>, vector<1x128xf32>
    %52 = vector.shape_cast %51 : vector<1x128xf32> to vector<128xf32>
    %53 = vector.shape_cast %52 : vector<128xf32> to vector<1x128xf32>
    %54 = vector.broadcast %53 : vector<1x128xf32> to vector<16x128xf32>
    %55 = arith.mulf %50, %54 : vector<16x128xf32>
    %56 = arith.addf %49, %55 : vector<16x128xf32>
    %57 = vector.extract_strided_slice %5 {offsets = [1, 0], sizes = [16, 176], strides = [1, 1]} : vector<22x176xf32> to vector<16x176xf32>
    %58 = vector.extract_strided_slice %57 {offsets = [0, 0], sizes = [16, 128], strides = [1, 1]} : vector<16x176xf32> to vector<16x128xf32>
    %c7 = arith.constant 7 : index
    %c0_16 = arith.constant 0 : index
    %59 = vector.load %arg2[%c7, %c0_16] : memref<49x128xf32, #tpu.memory_space<vmem>>, vector<1x128xf32>
    %60 = vector.shape_cast %59 : vector<1x128xf32> to vector<128xf32>
    %61 = vector.shape_cast %60 : vector<128xf32> to vector<1x128xf32>
    %62 = vector.broadcast %61 : vector<1x128xf32> to vector<16x128xf32>
    %63 = arith.mulf %58, %62 : vector<16x128xf32>
    %64 = arith.addf %56, %63 : vector<16x128xf32>
    %65 = vector.extract_strided_slice %57 {offsets = [0, 8], sizes = [16, 128], strides = [1, 1]} : vector<16x176xf32> to vector<16x128xf32>
    %c8 = arith.constant 8 : index
    %c0_17 = arith.constant 0 : index
    %66 = vector.load %arg2[%c8, %c0_17] : memref<49x128xf32, #tpu.memory_space<vmem>>, vector<1x128xf32>
    %67 = vector.shape_cast %66 : vector<1x128xf32> to vector<128xf32>
    %68 = vector.shape_cast %67 : vector<128xf32> to vector<1x128xf32>
    %69 = vector.broadcast %68 : vector<1x128xf32> to vector<16x128xf32>
    %70 = arith.mulf %65, %69 : vector<16x128xf32>
    %71 = arith.addf %64, %70 : vector<16x128xf32>
    %72 = vector.extract_strided_slice %57 {offsets = [0, 16], sizes = [16, 128], strides = [1, 1]} : vector<16x176xf32> to vector<16x128xf32>
    %c9 = arith.constant 9 : index
    %c0_18 = arith.constant 0 : index
    %73 = vector.load %arg2[%c9, %c0_18] : memref<49x128xf32, #tpu.memory_space<vmem>>, vector<1x128xf32>
    %74 = vector.shape_cast %73 : vector<1x128xf32> to vector<128xf32>
    %75 = vector.shape_cast %74 : vector<128xf32> to vector<1x128xf32>
    %76 = vector.broadcast %75 : vector<1x128xf32> to vector<16x128xf32>
    %77 = arith.mulf %72, %76 : vector<16x128xf32>
    %78 = arith.addf %71, %77 : vector<16x128xf32>
    %79 = vector.extract_strided_slice %57 {offsets = [0, 24], sizes = [16, 128], strides = [1, 1]} : vector<16x176xf32> to vector<16x128xf32>
    %c10 = arith.constant 10 : index
    %c0_19 = arith.constant 0 : index
    %80 = vector.load %arg2[%c10, %c0_19] : memref<49x128xf32, #tpu.memory_space<vmem>>, vector<1x128xf32>
    %81 = vector.shape_cast %80 : vector<1x128xf32> to vector<128xf32>
    %82 = vector.shape_cast %81 : vector<128xf32> to vector<1x128xf32>
    %83 = vector.broadcast %82 : vector<1x128xf32> to vector<16x128xf32>
    %84 = arith.mulf %79, %83 : vector<16x128xf32>
    %85 = arith.addf %78, %84 : vector<16x128xf32>
    %86 = vector.extract_strided_slice %57 {offsets = [0, 32], sizes = [16, 128], strides = [1, 1]} : vector<16x176xf32> to vector<16x128xf32>
    %c11 = arith.constant 11 : index
    %c0_20 = arith.constant 0 : index
    %87 = vector.load %arg2[%c11, %c0_20] : memref<49x128xf32, #tpu.memory_space<vmem>>, vector<1x128xf32>
    %88 = vector.shape_cast %87 : vector<1x128xf32> to vector<128xf32>
    %89 = vector.shape_cast %88 : vector<128xf32> to vector<1x128xf32>
    %90 = vector.broadcast %89 : vector<1x128xf32> to vector<16x128xf32>
    %91 = arith.mulf %86, %90 : vector<16x128xf32>
    %92 = arith.addf %85, %91 : vector<16x128xf32>
    %93 = vector.extract_strided_slice %57 {offsets = [0, 40], sizes = [16, 128], strides = [1, 1]} : vector<16x176xf32> to vector<16x128xf32>
    %c12 = arith.constant 12 : index
    %c0_21 = arith.constant 0 : index
    %94 = vector.load %arg2[%c12, %c0_21] : memref<49x128xf32, #tpu.memory_space<vmem>>, vector<1x128xf32>
    %95 = vector.shape_cast %94 : vector<1x128xf32> to vector<128xf32>
    %96 = vector.shape_cast %95 : vector<128xf32> to vector<1x128xf32>
    %97 = vector.broadcast %96 : vector<1x128xf32> to vector<16x128xf32>
    %98 = arith.mulf %93, %97 : vector<16x128xf32>
    %99 = arith.addf %92, %98 : vector<16x128xf32>
    %100 = vector.extract_strided_slice %57 {offsets = [0, 48], sizes = [16, 128], strides = [1, 1]} : vector<16x176xf32> to vector<16x128xf32>
    %c13 = arith.constant 13 : index
    %c0_22 = arith.constant 0 : index
    %101 = vector.load %arg2[%c13, %c0_22] : memref<49x128xf32, #tpu.memory_space<vmem>>, vector<1x128xf32>
    %102 = vector.shape_cast %101 : vector<1x128xf32> to vector<128xf32>
    %103 = vector.shape_cast %102 : vector<128xf32> to vector<1x128xf32>
    %104 = vector.broadcast %103 : vector<1x128xf32> to vector<16x128xf32>
    %105 = arith.mulf %100, %104 : vector<16x128xf32>
    %106 = arith.addf %99, %105 : vector<16x128xf32>
    %107 = vector.extract_strided_slice %5 {offsets = [2, 0], sizes = [16, 176], strides = [1, 1]} : vector<22x176xf32> to vector<16x176xf32>
    %108 = vector.extract_strided_slice %107 {offsets = [0, 0], sizes = [16, 128], strides = [1, 1]} : vector<16x176xf32> to vector<16x128xf32>
    %c14 = arith.constant 14 : index
    %c0_23 = arith.constant 0 : index
    %109 = vector.load %arg2[%c14, %c0_23] : memref<49x128xf32, #tpu.memory_space<vmem>>, vector<1x128xf32>
    %110 = vector.shape_cast %109 : vector<1x128xf32> to vector<128xf32>
    %111 = vector.shape_cast %110 : vector<128xf32> to vector<1x128xf32>
    %112 = vector.broadcast %111 : vector<1x128xf32> to vector<16x128xf32>
    %113 = arith.mulf %108, %112 : vector<16x128xf32>
    %114 = arith.addf %106, %113 : vector<16x128xf32>
    %115 = vector.extract_strided_slice %107 {offsets = [0, 8], sizes = [16, 128], strides = [1, 1]} : vector<16x176xf32> to vector<16x128xf32>
    %c15 = arith.constant 15 : index
    %c0_24 = arith.constant 0 : index
    %116 = vector.load %arg2[%c15, %c0_24] : memref<49x128xf32, #tpu.memory_space<vmem>>, vector<1x128xf32>
    %117 = vector.shape_cast %116 : vector<1x128xf32> to vector<128xf32>
    %118 = vector.shape_cast %117 : vector<128xf32> to vector<1x128xf32>
    %119 = vector.broadcast %118 : vector<1x128xf32> to vector<16x128xf32>
    %120 = arith.mulf %115, %119 : vector<16x128xf32>
    %121 = arith.addf %114, %120 : vector<16x128xf32>
    %122 = vector.extract_strided_slice %107 {offsets = [0, 16], sizes = [16, 128], strides = [1, 1]} : vector<16x176xf32> to vector<16x128xf32>
    %c16 = arith.constant 16 : index
    %c0_25 = arith.constant 0 : index
    %123 = vector.load %arg2[%c16, %c0_25] : memref<49x128xf32, #tpu.memory_space<vmem>>, vector<1x128xf32>
    %124 = vector.shape_cast %123 : vector<1x128xf32> to vector<128xf32>
    %125 = vector.shape_cast %124 : vector<128xf32> to vector<1x128xf32>
    %126 = vector.broadcast %125 : vector<1x128xf32> to vector<16x128xf32>
    %127 = arith.mulf %122, %126 : vector<16x128xf32>
    %128 = arith.addf %121, %127 : vector<16x128xf32>
    %129 = vector.extract_strided_slice %107 {offsets = [0, 24], sizes = [16, 128], strides = [1, 1]} : vector<16x176xf32> to vector<16x128xf32>
    %c17 = arith.constant 17 : index
    %c0_26 = arith.constant 0 : index
    %130 = vector.load %arg2[%c17, %c0_26] : memref<49x128xf32, #tpu.memory_space<vmem>>, vector<1x128xf32>
    %131 = vector.shape_cast %130 : vector<1x128xf32> to vector<128xf32>
    %132 = vector.shape_cast %131 : vector<128xf32> to vector<1x128xf32>
    %133 = vector.broadcast %132 : vector<1x128xf32> to vector<16x128xf32>
    %134 = arith.mulf %129, %133 : vector<16x128xf32>
    %135 = arith.addf %128, %134 : vector<16x128xf32>
    %136 = vector.extract_strided_slice %107 {offsets = [0, 32], sizes = [16, 128], strides = [1, 1]} : vector<16x176xf32> to vector<16x128xf32>
    %c18 = arith.constant 18 : index
    %c0_27 = arith.constant 0 : index
    %137 = vector.load %arg2[%c18, %c0_27] : memref<49x128xf32, #tpu.memory_space<vmem>>, vector<1x128xf32>
    %138 = vector.shape_cast %137 : vector<1x128xf32> to vector<128xf32>
    %139 = vector.shape_cast %138 : vector<128xf32> to vector<1x128xf32>
    %140 = vector.broadcast %139 : vector<1x128xf32> to vector<16x128xf32>
    %141 = arith.mulf %136, %140 : vector<16x128xf32>
    %142 = arith.addf %135, %141 : vector<16x128xf32>
    %143 = vector.extract_strided_slice %107 {offsets = [0, 40], sizes = [16, 128], strides = [1, 1]} : vector<16x176xf32> to vector<16x128xf32>
    %c19 = arith.constant 19 : index
    %c0_28 = arith.constant 0 : index
    %144 = vector.load %arg2[%c19, %c0_28] : memref<49x128xf32, #tpu.memory_space<vmem>>, vector<1x128xf32>
    %145 = vector.shape_cast %144 : vector<1x128xf32> to vector<128xf32>
    %146 = vector.shape_cast %145 : vector<128xf32> to vector<1x128xf32>
    %147 = vector.broadcast %146 : vector<1x128xf32> to vector<16x128xf32>
    %148 = arith.mulf %143, %147 : vector<16x128xf32>
    %149 = arith.addf %142, %148 : vector<16x128xf32>
    %150 = vector.extract_strided_slice %107 {offsets = [0, 48], sizes = [16, 128], strides = [1, 1]} : vector<16x176xf32> to vector<16x128xf32>
    %c20 = arith.constant 20 : index
    %c0_29 = arith.constant 0 : index
    %151 = vector.load %arg2[%c20, %c0_29] : memref<49x128xf32, #tpu.memory_space<vmem>>, vector<1x128xf32>
    %152 = vector.shape_cast %151 : vector<1x128xf32> to vector<128xf32>
    %153 = vector.shape_cast %152 : vector<128xf32> to vector<1x128xf32>
    %154 = vector.broadcast %153 : vector<1x128xf32> to vector<16x128xf32>
    %155 = arith.mulf %150, %154 : vector<16x128xf32>
    %156 = arith.addf %149, %155 : vector<16x128xf32>
    %157 = vector.extract_strided_slice %5 {offsets = [3, 0], sizes = [16, 176], strides = [1, 1]} : vector<22x176xf32> to vector<16x176xf32>
    %158 = vector.extract_strided_slice %157 {offsets = [0, 0], sizes = [16, 128], strides = [1, 1]} : vector<16x176xf32> to vector<16x128xf32>
    %c21 = arith.constant 21 : index
    %c0_30 = arith.constant 0 : index
    %159 = vector.load %arg2[%c21, %c0_30] : memref<49x128xf32, #tpu.memory_space<vmem>>, vector<1x128xf32>
    %160 = vector.shape_cast %159 : vector<1x128xf32> to vector<128xf32>
    %161 = vector.shape_cast %160 : vector<128xf32> to vector<1x128xf32>
    %162 = vector.broadcast %161 : vector<1x128xf32> to vector<16x128xf32>
    %163 = arith.mulf %158, %162 : vector<16x128xf32>
    %164 = arith.addf %156, %163 : vector<16x128xf32>
    %165 = vector.extract_strided_slice %157 {offsets = [0, 8], sizes = [16, 128], strides = [1, 1]} : vector<16x176xf32> to vector<16x128xf32>
    %c22 = arith.constant 22 : index
    %c0_31 = arith.constant 0 : index
    %166 = vector.load %arg2[%c22, %c0_31] : memref<49x128xf32, #tpu.memory_space<vmem>>, vector<1x128xf32>
    %167 = vector.shape_cast %166 : vector<1x128xf32> to vector<128xf32>
    %168 = vector.shape_cast %167 : vector<128xf32> to vector<1x128xf32>
    %169 = vector.broadcast %168 : vector<1x128xf32> to vector<16x128xf32>
    %170 = arith.mulf %165, %169 : vector<16x128xf32>
    %171 = arith.addf %164, %170 : vector<16x128xf32>
    %172 = vector.extract_strided_slice %157 {offsets = [0, 16], sizes = [16, 128], strides = [1, 1]} : vector<16x176xf32> to vector<16x128xf32>
    %c23 = arith.constant 23 : index
    %c0_32 = arith.constant 0 : index
    %173 = vector.load %arg2[%c23, %c0_32] : memref<49x128xf32, #tpu.memory_space<vmem>>, vector<1x128xf32>
    %174 = vector.shape_cast %173 : vector<1x128xf32> to vector<128xf32>
    %175 = vector.shape_cast %174 : vector<128xf32> to vector<1x128xf32>
    %176 = vector.broadcast %175 : vector<1x128xf32> to vector<16x128xf32>
    %177 = arith.mulf %172, %176 : vector<16x128xf32>
    %178 = arith.addf %171, %177 : vector<16x128xf32>
    %179 = vector.extract_strided_slice %157 {offsets = [0, 24], sizes = [16, 128], strides = [1, 1]} : vector<16x176xf32> to vector<16x128xf32>
    %c24_33 = arith.constant 24 : index
    %c0_34 = arith.constant 0 : index
    %180 = vector.load %arg2[%c24_33, %c0_34] : memref<49x128xf32, #tpu.memory_space<vmem>>, vector<1x128xf32>
    %181 = vector.shape_cast %180 : vector<1x128xf32> to vector<128xf32>
    %182 = vector.shape_cast %181 : vector<128xf32> to vector<1x128xf32>
    %183 = vector.broadcast %182 : vector<1x128xf32> to vector<16x128xf32>
    %184 = arith.mulf %179, %183 : vector<16x128xf32>
    %185 = arith.addf %178, %184 : vector<16x128xf32>
    %186 = vector.extract_strided_slice %157 {offsets = [0, 32], sizes = [16, 128], strides = [1, 1]} : vector<16x176xf32> to vector<16x128xf32>
    %c25 = arith.constant 25 : index
    %c0_35 = arith.constant 0 : index
    %187 = vector.load %arg2[%c25, %c0_35] : memref<49x128xf32, #tpu.memory_space<vmem>>, vector<1x128xf32>
    %188 = vector.shape_cast %187 : vector<1x128xf32> to vector<128xf32>
    %189 = vector.shape_cast %188 : vector<128xf32> to vector<1x128xf32>
    %190 = vector.broadcast %189 : vector<1x128xf32> to vector<16x128xf32>
    %191 = arith.mulf %186, %190 : vector<16x128xf32>
    %192 = arith.addf %185, %191 : vector<16x128xf32>
    %193 = vector.extract_strided_slice %157 {offsets = [0, 40], sizes = [16, 128], strides = [1, 1]} : vector<16x176xf32> to vector<16x128xf32>
    %c26 = arith.constant 26 : index
    %c0_36 = arith.constant 0 : index
    %194 = vector.load %arg2[%c26, %c0_36] : memref<49x128xf32, #tpu.memory_space<vmem>>, vector<1x128xf32>
    %195 = vector.shape_cast %194 : vector<1x128xf32> to vector<128xf32>
    %196 = vector.shape_cast %195 : vector<128xf32> to vector<1x128xf32>
    %197 = vector.broadcast %196 : vector<1x128xf32> to vector<16x128xf32>
    %198 = arith.mulf %193, %197 : vector<16x128xf32>
    %199 = arith.addf %192, %198 : vector<16x128xf32>
    %200 = vector.extract_strided_slice %157 {offsets = [0, 48], sizes = [16, 128], strides = [1, 1]} : vector<16x176xf32> to vector<16x128xf32>
    %c27 = arith.constant 27 : index
    %c0_37 = arith.constant 0 : index
    %201 = vector.load %arg2[%c27, %c0_37] : memref<49x128xf32, #tpu.memory_space<vmem>>, vector<1x128xf32>
    %202 = vector.shape_cast %201 : vector<1x128xf32> to vector<128xf32>
    %203 = vector.shape_cast %202 : vector<128xf32> to vector<1x128xf32>
    %204 = vector.broadcast %203 : vector<1x128xf32> to vector<16x128xf32>
    %205 = arith.mulf %200, %204 : vector<16x128xf32>
    %206 = arith.addf %199, %205 : vector<16x128xf32>
    %207 = vector.extract_strided_slice %5 {offsets = [4, 0], sizes = [16, 176], strides = [1, 1]} : vector<22x176xf32> to vector<16x176xf32>
    %208 = vector.extract_strided_slice %207 {offsets = [0, 0], sizes = [16, 128], strides = [1, 1]} : vector<16x176xf32> to vector<16x128xf32>
    %c28 = arith.constant 28 : index
    %c0_38 = arith.constant 0 : index
    %209 = vector.load %arg2[%c28, %c0_38] : memref<49x128xf32, #tpu.memory_space<vmem>>, vector<1x128xf32>
    %210 = vector.shape_cast %209 : vector<1x128xf32> to vector<128xf32>
    %211 = vector.shape_cast %210 : vector<128xf32> to vector<1x128xf32>
    %212 = vector.broadcast %211 : vector<1x128xf32> to vector<16x128xf32>
    %213 = arith.mulf %208, %212 : vector<16x128xf32>
    %214 = arith.addf %206, %213 : vector<16x128xf32>
    %215 = vector.extract_strided_slice %207 {offsets = [0, 8], sizes = [16, 128], strides = [1, 1]} : vector<16x176xf32> to vector<16x128xf32>
    %c29 = arith.constant 29 : index
    %c0_39 = arith.constant 0 : index
    %216 = vector.load %arg2[%c29, %c0_39] : memref<49x128xf32, #tpu.memory_space<vmem>>, vector<1x128xf32>
    %217 = vector.shape_cast %216 : vector<1x128xf32> to vector<128xf32>
    %218 = vector.shape_cast %217 : vector<128xf32> to vector<1x128xf32>
    %219 = vector.broadcast %218 : vector<1x128xf32> to vector<16x128xf32>
    %220 = arith.mulf %215, %219 : vector<16x128xf32>
    %221 = arith.addf %214, %220 : vector<16x128xf32>
    %222 = vector.extract_strided_slice %207 {offsets = [0, 16], sizes = [16, 128], strides = [1, 1]} : vector<16x176xf32> to vector<16x128xf32>
    %c30 = arith.constant 30 : index
    %c0_40 = arith.constant 0 : index
    %223 = vector.load %arg2[%c30, %c0_40] : memref<49x128xf32, #tpu.memory_space<vmem>>, vector<1x128xf32>
    %224 = vector.shape_cast %223 : vector<1x128xf32> to vector<128xf32>
    %225 = vector.shape_cast %224 : vector<128xf32> to vector<1x128xf32>
    %226 = vector.broadcast %225 : vector<1x128xf32> to vector<16x128xf32>
    %227 = arith.mulf %222, %226 : vector<16x128xf32>
    %228 = arith.addf %221, %227 : vector<16x128xf32>
    %229 = vector.extract_strided_slice %207 {offsets = [0, 24], sizes = [16, 128], strides = [1, 1]} : vector<16x176xf32> to vector<16x128xf32>
    %c31 = arith.constant 31 : index
    %c0_41 = arith.constant 0 : index
    %230 = vector.load %arg2[%c31, %c0_41] : memref<49x128xf32, #tpu.memory_space<vmem>>, vector<1x128xf32>
    %231 = vector.shape_cast %230 : vector<1x128xf32> to vector<128xf32>
    %232 = vector.shape_cast %231 : vector<128xf32> to vector<1x128xf32>
    %233 = vector.broadcast %232 : vector<1x128xf32> to vector<16x128xf32>
    %234 = arith.mulf %229, %233 : vector<16x128xf32>
    %235 = arith.addf %228, %234 : vector<16x128xf32>
    %236 = vector.extract_strided_slice %207 {offsets = [0, 32], sizes = [16, 128], strides = [1, 1]} : vector<16x176xf32> to vector<16x128xf32>
    %c32 = arith.constant 32 : index
    %c0_42 = arith.constant 0 : index
    %237 = vector.load %arg2[%c32, %c0_42] : memref<49x128xf32, #tpu.memory_space<vmem>>, vector<1x128xf32>
    %238 = vector.shape_cast %237 : vector<1x128xf32> to vector<128xf32>
    %239 = vector.shape_cast %238 : vector<128xf32> to vector<1x128xf32>
    %240 = vector.broadcast %239 : vector<1x128xf32> to vector<16x128xf32>
    %241 = arith.mulf %236, %240 : vector<16x128xf32>
    %242 = arith.addf %235, %241 : vector<16x128xf32>
    %243 = vector.extract_strided_slice %207 {offsets = [0, 40], sizes = [16, 128], strides = [1, 1]} : vector<16x176xf32> to vector<16x128xf32>
    %c33 = arith.constant 33 : index
    %c0_43 = arith.constant 0 : index
    %244 = vector.load %arg2[%c33, %c0_43] : memref<49x128xf32, #tpu.memory_space<vmem>>, vector<1x128xf32>
    %245 = vector.shape_cast %244 : vector<1x128xf32> to vector<128xf32>
    %246 = vector.shape_cast %245 : vector<128xf32> to vector<1x128xf32>
    %247 = vector.broadcast %246 : vector<1x128xf32> to vector<16x128xf32>
    %248 = arith.mulf %243, %247 : vector<16x128xf32>
    %249 = arith.addf %242, %248 : vector<16x128xf32>
    %250 = vector.extract_strided_slice %207 {offsets = [0, 48], sizes = [16, 128], strides = [1, 1]} : vector<16x176xf32> to vector<16x128xf32>
    %c34 = arith.constant 34 : index
    %c0_44 = arith.constant 0 : index
    %251 = vector.load %arg2[%c34, %c0_44] : memref<49x128xf32, #tpu.memory_space<vmem>>, vector<1x128xf32>
    %252 = vector.shape_cast %251 : vector<1x128xf32> to vector<128xf32>
    %253 = vector.shape_cast %252 : vector<128xf32> to vector<1x128xf32>
    %254 = vector.broadcast %253 : vector<1x128xf32> to vector<16x128xf32>
    %255 = arith.mulf %250, %254 : vector<16x128xf32>
    %256 = arith.addf %249, %255 : vector<16x128xf32>
    %257 = vector.extract_strided_slice %5 {offsets = [5, 0], sizes = [16, 176], strides = [1, 1]} : vector<22x176xf32> to vector<16x176xf32>
    %258 = vector.extract_strided_slice %257 {offsets = [0, 0], sizes = [16, 128], strides = [1, 1]} : vector<16x176xf32> to vector<16x128xf32>
    %c35 = arith.constant 35 : index
    %c0_45 = arith.constant 0 : index
    %259 = vector.load %arg2[%c35, %c0_45] : memref<49x128xf32, #tpu.memory_space<vmem>>, vector<1x128xf32>
    %260 = vector.shape_cast %259 : vector<1x128xf32> to vector<128xf32>
    %261 = vector.shape_cast %260 : vector<128xf32> to vector<1x128xf32>
    %262 = vector.broadcast %261 : vector<1x128xf32> to vector<16x128xf32>
    %263 = arith.mulf %258, %262 : vector<16x128xf32>
    %264 = arith.addf %256, %263 : vector<16x128xf32>
    %265 = vector.extract_strided_slice %257 {offsets = [0, 8], sizes = [16, 128], strides = [1, 1]} : vector<16x176xf32> to vector<16x128xf32>
    %c36 = arith.constant 36 : index
    %c0_46 = arith.constant 0 : index
    %266 = vector.load %arg2[%c36, %c0_46] : memref<49x128xf32, #tpu.memory_space<vmem>>, vector<1x128xf32>
    %267 = vector.shape_cast %266 : vector<1x128xf32> to vector<128xf32>
    %268 = vector.shape_cast %267 : vector<128xf32> to vector<1x128xf32>
    %269 = vector.broadcast %268 : vector<1x128xf32> to vector<16x128xf32>
    %270 = arith.mulf %265, %269 : vector<16x128xf32>
    %271 = arith.addf %264, %270 : vector<16x128xf32>
    %272 = vector.extract_strided_slice %257 {offsets = [0, 16], sizes = [16, 128], strides = [1, 1]} : vector<16x176xf32> to vector<16x128xf32>
    %c37 = arith.constant 37 : index
    %c0_47 = arith.constant 0 : index
    %273 = vector.load %arg2[%c37, %c0_47] : memref<49x128xf32, #tpu.memory_space<vmem>>, vector<1x128xf32>
    %274 = vector.shape_cast %273 : vector<1x128xf32> to vector<128xf32>
    %275 = vector.shape_cast %274 : vector<128xf32> to vector<1x128xf32>
    %276 = vector.broadcast %275 : vector<1x128xf32> to vector<16x128xf32>
    %277 = arith.mulf %272, %276 : vector<16x128xf32>
    %278 = arith.addf %271, %277 : vector<16x128xf32>
    %279 = vector.extract_strided_slice %257 {offsets = [0, 24], sizes = [16, 128], strides = [1, 1]} : vector<16x176xf32> to vector<16x128xf32>
    %c38 = arith.constant 38 : index
    %c0_48 = arith.constant 0 : index
    %280 = vector.load %arg2[%c38, %c0_48] : memref<49x128xf32, #tpu.memory_space<vmem>>, vector<1x128xf32>
    %281 = vector.shape_cast %280 : vector<1x128xf32> to vector<128xf32>
    %282 = vector.shape_cast %281 : vector<128xf32> to vector<1x128xf32>
    %283 = vector.broadcast %282 : vector<1x128xf32> to vector<16x128xf32>
    %284 = arith.mulf %279, %283 : vector<16x128xf32>
    %285 = arith.addf %278, %284 : vector<16x128xf32>
    %286 = vector.extract_strided_slice %257 {offsets = [0, 32], sizes = [16, 128], strides = [1, 1]} : vector<16x176xf32> to vector<16x128xf32>
    %c39 = arith.constant 39 : index
    %c0_49 = arith.constant 0 : index
    %287 = vector.load %arg2[%c39, %c0_49] : memref<49x128xf32, #tpu.memory_space<vmem>>, vector<1x128xf32>
    %288 = vector.shape_cast %287 : vector<1x128xf32> to vector<128xf32>
    %289 = vector.shape_cast %288 : vector<128xf32> to vector<1x128xf32>
    %290 = vector.broadcast %289 : vector<1x128xf32> to vector<16x128xf32>
    %291 = arith.mulf %286, %290 : vector<16x128xf32>
    %292 = arith.addf %285, %291 : vector<16x128xf32>
    %293 = vector.extract_strided_slice %257 {offsets = [0, 40], sizes = [16, 128], strides = [1, 1]} : vector<16x176xf32> to vector<16x128xf32>
    %c40 = arith.constant 40 : index
    %c0_50 = arith.constant 0 : index
    %294 = vector.load %arg2[%c40, %c0_50] : memref<49x128xf32, #tpu.memory_space<vmem>>, vector<1x128xf32>
    %295 = vector.shape_cast %294 : vector<1x128xf32> to vector<128xf32>
    %296 = vector.shape_cast %295 : vector<128xf32> to vector<1x128xf32>
    %297 = vector.broadcast %296 : vector<1x128xf32> to vector<16x128xf32>
    %298 = arith.mulf %293, %297 : vector<16x128xf32>
    %299 = arith.addf %292, %298 : vector<16x128xf32>
    %300 = vector.extract_strided_slice %257 {offsets = [0, 48], sizes = [16, 128], strides = [1, 1]} : vector<16x176xf32> to vector<16x128xf32>
    %c41 = arith.constant 41 : index
    %c0_51 = arith.constant 0 : index
    %301 = vector.load %arg2[%c41, %c0_51] : memref<49x128xf32, #tpu.memory_space<vmem>>, vector<1x128xf32>
    %302 = vector.shape_cast %301 : vector<1x128xf32> to vector<128xf32>
    %303 = vector.shape_cast %302 : vector<128xf32> to vector<1x128xf32>
    %304 = vector.broadcast %303 : vector<1x128xf32> to vector<16x128xf32>
    %305 = arith.mulf %300, %304 : vector<16x128xf32>
    %306 = arith.addf %299, %305 : vector<16x128xf32>
    %307 = vector.extract_strided_slice %5 {offsets = [6, 0], sizes = [16, 176], strides = [1, 1]} : vector<22x176xf32> to vector<16x176xf32>
    %308 = vector.extract_strided_slice %307 {offsets = [0, 0], sizes = [16, 128], strides = [1, 1]} : vector<16x176xf32> to vector<16x128xf32>
    %c42 = arith.constant 42 : index
    %c0_52 = arith.constant 0 : index
    %309 = vector.load %arg2[%c42, %c0_52] : memref<49x128xf32, #tpu.memory_space<vmem>>, vector<1x128xf32>
    %310 = vector.shape_cast %309 : vector<1x128xf32> to vector<128xf32>
    %311 = vector.shape_cast %310 : vector<128xf32> to vector<1x128xf32>
    %312 = vector.broadcast %311 : vector<1x128xf32> to vector<16x128xf32>
    %313 = arith.mulf %308, %312 : vector<16x128xf32>
    %314 = arith.addf %306, %313 : vector<16x128xf32>
    %315 = vector.extract_strided_slice %307 {offsets = [0, 8], sizes = [16, 128], strides = [1, 1]} : vector<16x176xf32> to vector<16x128xf32>
    %c43 = arith.constant 43 : index
    %c0_53 = arith.constant 0 : index
    %316 = vector.load %arg2[%c43, %c0_53] : memref<49x128xf32, #tpu.memory_space<vmem>>, vector<1x128xf32>
    %317 = vector.shape_cast %316 : vector<1x128xf32> to vector<128xf32>
    %318 = vector.shape_cast %317 : vector<128xf32> to vector<1x128xf32>
    %319 = vector.broadcast %318 : vector<1x128xf32> to vector<16x128xf32>
    %320 = arith.mulf %315, %319 : vector<16x128xf32>
    %321 = arith.addf %314, %320 : vector<16x128xf32>
    %322 = vector.extract_strided_slice %307 {offsets = [0, 16], sizes = [16, 128], strides = [1, 1]} : vector<16x176xf32> to vector<16x128xf32>
    %c44 = arith.constant 44 : index
    %c0_54 = arith.constant 0 : index
    %323 = vector.load %arg2[%c44, %c0_54] : memref<49x128xf32, #tpu.memory_space<vmem>>, vector<1x128xf32>
    %324 = vector.shape_cast %323 : vector<1x128xf32> to vector<128xf32>
    %325 = vector.shape_cast %324 : vector<128xf32> to vector<1x128xf32>
    %326 = vector.broadcast %325 : vector<1x128xf32> to vector<16x128xf32>
    %327 = arith.mulf %322, %326 : vector<16x128xf32>
    %328 = arith.addf %321, %327 : vector<16x128xf32>
    %329 = vector.extract_strided_slice %307 {offsets = [0, 24], sizes = [16, 128], strides = [1, 1]} : vector<16x176xf32> to vector<16x128xf32>
    %c45 = arith.constant 45 : index
    %c0_55 = arith.constant 0 : index
    %330 = vector.load %arg2[%c45, %c0_55] : memref<49x128xf32, #tpu.memory_space<vmem>>, vector<1x128xf32>
    %331 = vector.shape_cast %330 : vector<1x128xf32> to vector<128xf32>
    %332 = vector.shape_cast %331 : vector<128xf32> to vector<1x128xf32>
    %333 = vector.broadcast %332 : vector<1x128xf32> to vector<16x128xf32>
    %334 = arith.mulf %329, %333 : vector<16x128xf32>
    %335 = arith.addf %328, %334 : vector<16x128xf32>
    %336 = vector.extract_strided_slice %307 {offsets = [0, 32], sizes = [16, 128], strides = [1, 1]} : vector<16x176xf32> to vector<16x128xf32>
    %c46 = arith.constant 46 : index
    %c0_56 = arith.constant 0 : index
    %337 = vector.load %arg2[%c46, %c0_56] : memref<49x128xf32, #tpu.memory_space<vmem>>, vector<1x128xf32>
    %338 = vector.shape_cast %337 : vector<1x128xf32> to vector<128xf32>
    %339 = vector.shape_cast %338 : vector<128xf32> to vector<1x128xf32>
    %340 = vector.broadcast %339 : vector<1x128xf32> to vector<16x128xf32>
    %341 = arith.mulf %336, %340 : vector<16x128xf32>
    %342 = arith.addf %335, %341 : vector<16x128xf32>
    %343 = vector.extract_strided_slice %307 {offsets = [0, 40], sizes = [16, 128], strides = [1, 1]} : vector<16x176xf32> to vector<16x128xf32>
    %c47 = arith.constant 47 : index
    %c0_57 = arith.constant 0 : index
    %344 = vector.load %arg2[%c47, %c0_57] : memref<49x128xf32, #tpu.memory_space<vmem>>, vector<1x128xf32>
    %345 = vector.shape_cast %344 : vector<1x128xf32> to vector<128xf32>
    %346 = vector.shape_cast %345 : vector<128xf32> to vector<1x128xf32>
    %347 = vector.broadcast %346 : vector<1x128xf32> to vector<16x128xf32>
    %348 = arith.mulf %343, %347 : vector<16x128xf32>
    %349 = arith.addf %342, %348 : vector<16x128xf32>
    %350 = vector.extract_strided_slice %307 {offsets = [0, 48], sizes = [16, 128], strides = [1, 1]} : vector<16x176xf32> to vector<16x128xf32>
    %c48 = arith.constant 48 : index
    %c0_58 = arith.constant 0 : index
    %351 = vector.load %arg2[%c48, %c0_58] : memref<49x128xf32, #tpu.memory_space<vmem>>, vector<1x128xf32>
    %352 = vector.shape_cast %351 : vector<1x128xf32> to vector<128xf32>
    %353 = vector.shape_cast %352 : vector<128xf32> to vector<1x128xf32>
    %354 = vector.broadcast %353 : vector<1x128xf32> to vector<16x128xf32>
    %355 = arith.mulf %350, %354 : vector<16x128xf32>
    %356 = arith.addf %349, %355 : vector<16x128xf32>
    %c0_59 = arith.constant 0 : index
    %c0_60 = arith.constant 0 : index
    %357 = vector.load %arg3[%c0_59, %c0_60] : memref<1x128xf32, #tpu.memory_space<vmem>>, vector<1x128xf32>
    %358 = vector.shape_cast %357 : vector<1x128xf32> to vector<128xf32>
    %359 = vector.shape_cast %358 : vector<128xf32> to vector<1x128xf32>
    %360 = vector.broadcast %359 : vector<1x128xf32> to vector<16x128xf32>
    %361 = arith.addf %356, %360 : vector<16x128xf32>
    %c0_61 = arith.constant 0 : index
    %c0_62 = arith.constant 0 : index
    %362 = vector.load %arg6[%c0_61, %c0_62] : memref<128x128xf32, #tpu.memory_space<vmem>>, vector<128x128xf32>
    %cst_63 = arith.constant dense<0.000000e+00> : vector<16x128xf32>
    %363 = tpu.matmul %361, %362, %cst_63 {dimension_numbers = #tpu.dot_dimension_numbers<[1], [0], [0], [1], [0, 0, 1, 1], [], []>} : vector<16x128xf32>, vector<128x128xf32>, vector<16x128xf32> -> vector<16x128xf32>
    %364 = arith.mulf %361, %361 : vector<16x128xf32>
    %c0_64 = arith.constant 0 : index
    %c0_65 = arith.constant 0 : index
    %365 = vector.load %arg6[%c0_64, %c0_65] : memref<128x128xf32, #tpu.memory_space<vmem>>, vector<128x128xf32>
    %cst_66 = arith.constant dense<0.000000e+00> : vector<16x128xf32>
    %366 = tpu.matmul %364, %365, %cst_66 {dimension_numbers = #tpu.dot_dimension_numbers<[1], [0], [0], [1], [0, 0, 1, 1], [], []>} : vector<16x128xf32>, vector<128x128xf32>, vector<16x128xf32> -> vector<16x128xf32>
    %367 = arith.mulf %363, %363 : vector<16x128xf32>
    %368 = arith.subf %366, %367 : vector<16x128xf32>
    %369 = arith.subf %361, %363 : vector<16x128xf32>
    %cst_67 = arith.constant 9.99999997E-7 : f32
    %370 = vector.broadcast %cst_67 : f32 to vector<16x128xf32>
    %371 = arith.addf %368, %370 : vector<16x128xf32>
    %372 = math.rsqrt %371 : vector<16x128xf32>
    %373 = arith.mulf %369, %372 : vector<16x128xf32>
    %c0_68 = arith.constant 0 : index
    %c0_69 = arith.constant 0 : index
    %374 = vector.load %arg4[%c0_68, %c0_69] : memref<1x128xf32, #tpu.memory_space<vmem>>, vector<1x128xf32>
    %375 = vector.shape_cast %374 : vector<1x128xf32> to vector<128xf32>
    %376 = vector.shape_cast %375 : vector<128xf32> to vector<1x128xf32>
    %377 = vector.broadcast %376 : vector<1x128xf32> to vector<16x128xf32>
    %378 = arith.mulf %373, %377 : vector<16x128xf32>
    %c0_70 = arith.constant 0 : index
    %c0_71 = arith.constant 0 : index
    %379 = vector.load %arg5[%c0_70, %c0_71] : memref<1x128xf32, #tpu.memory_space<vmem>>, vector<1x128xf32>
    %380 = vector.shape_cast %379 : vector<1x128xf32> to vector<128xf32>
    %381 = vector.shape_cast %380 : vector<128xf32> to vector<1x128xf32>
    %382 = vector.broadcast %381 : vector<1x128xf32> to vector<16x128xf32>
    %383 = arith.addf %378, %382 : vector<16x128xf32>
    %384 = arith.truncf %383 : vector<16x128xf32> to vector<16x128xbf16>
    %c0_72 = arith.constant 0 : index
    %c0_73 = arith.constant 0 : index
    %385 = vector.load %arg7[%c0_72, %c0_73] : memref<128x512xbf16, #tpu.memory_space<vmem>>, vector<128x512xbf16>
    %cst_74 = arith.constant dense<0.000000e+00> : vector<16x512xf32>
    %386 = tpu.matmul %384, %385, %cst_74 {dimension_numbers = #tpu.dot_dimension_numbers<[1], [0], [0], [1], [0, 0, 1, 1], [], []>} : vector<16x128xbf16>, vector<128x512xbf16>, vector<16x512xf32> -> vector<16x512xf32>
    %c0_75 = arith.constant 0 : index
    %c0_76 = arith.constant 0 : index
    %387 = vector.load %arg8[%c0_75, %c0_76] : memref<1x512xf32, #tpu.memory_space<vmem>>, vector<1x512xf32>
    %388 = vector.shape_cast %387 : vector<1x512xf32> to vector<512xf32>
    %389 = vector.shape_cast %388 : vector<512xf32> to vector<1x512xf32>
    %390 = vector.broadcast %389 : vector<1x512xf32> to vector<16x512xf32>
    %391 = arith.addf %386, %390 : vector<16x512xf32>
    %cst_77 = arith.constant 5.000000e-01 : f32
    %392 = vector.broadcast %cst_77 : f32 to vector<16x512xf32>
    %393 = arith.mulf %392, %391 : vector<16x512xf32>
    %cst_78 = arith.constant 0.707106769 : f32
    %394 = vector.broadcast %cst_78 : f32 to vector<16x512xf32>
    %395 = arith.mulf %391, %394 : vector<16x512xf32>
    %396 = math.erf %395 : vector<16x512xf32>
    %cst_79 = arith.constant 1.000000e+00 : f32
    %397 = vector.broadcast %cst_79 : f32 to vector<16x512xf32>
    %398 = arith.addf %397, %396 : vector<16x512xf32>
    %399 = arith.mulf %393, %398 : vector<16x512xf32>
    %400 = arith.truncf %399 : vector<16x512xf32> to vector<16x512xbf16>
    %c0_80 = arith.constant 0 : index
    %c0_81 = arith.constant 0 : index
    %401 = vector.load %arg9[%c0_80, %c0_81] : memref<512x128xbf16, #tpu.memory_space<vmem>>, vector<512x128xbf16>
    %cst_82 = arith.constant dense<0.000000e+00> : vector<16x128xf32>
    %402 = tpu.matmul %400, %401, %cst_82 {dimension_numbers = #tpu.dot_dimension_numbers<[1], [0], [0], [1], [0, 0, 1, 1], [], []>} : vector<16x512xbf16>, vector<512x128xbf16>, vector<16x128xf32> -> vector<16x128xf32>
    %c0_83 = arith.constant 0 : index
    %c0_84 = arith.constant 0 : index
    %403 = vector.load %arg10[%c0_83, %c0_84] : memref<1x128xf32, #tpu.memory_space<vmem>>, vector<1x128xf32>
    %404 = vector.shape_cast %403 : vector<1x128xf32> to vector<128xf32>
    %405 = vector.shape_cast %404 : vector<128xf32> to vector<1x128xf32>
    %406 = vector.broadcast %405 : vector<1x128xf32> to vector<16x128xf32>
    %407 = arith.addf %402, %406 : vector<16x128xf32>
    %c0_85 = arith.constant 0 : index
    %c0_86 = arith.constant 0 : index
    %408 = vector.load %arg11[%c0_85, %c0_86] : memref<1x128xf32, #tpu.memory_space<vmem>>, vector<1x128xf32>
    %409 = vector.shape_cast %408 : vector<1x128xf32> to vector<128xf32>
    %410 = vector.shape_cast %409 : vector<128xf32> to vector<1x128xf32>
    %411 = vector.broadcast %410 : vector<1x128xf32> to vector<16x128xf32>
    %412 = arith.mulf %407, %411 : vector<16x128xf32>
    %413 = arith.addf %412, %1 : vector<16x128xf32>
    %c0_87 = arith.constant 0 : index
    %c0_88 = arith.constant 0 : index
    %c0_89 = arith.constant 0 : index
    %414 = vector.load %arg12[%c0_87, %c0_88, %c0_89] : memref<1x16x128xf32, #tpu.memory_space<vmem>>, vector<1x16x128xf32>
    %415 = vector.shape_cast %414 : vector<1x16x128xf32> to vector<16x128xf32>
    %416 = vector.shape_cast %413 : vector<16x128xf32> to vector<1x16x128xf32>
    tpu.vector_store %arg12[%c0_87, %c0_88, %c0_89], %416 {strides = array<i32>} : memref<1x16x128xf32, #tpu.memory_space<vmem>>, vector<1x16x128xf32>,
    return
  }
  func.func @transform_0(%arg0: i32) -> (i32, i32, i32) {
    %c0_i32 = arith.constant 0 : i32
    %c0_i32_0 = arith.constant 0 : i32
    %c0_i32_1 = arith.constant 0 : i32
    return %arg0, %c0_i32, %c0_i32_0 : i32, i32, i32
  }
  func.func @transform_1(%arg0: i32) -> (i32, i32) {
    %c0_i32 = arith.constant 0 : i32
    %c0_i32_0 = arith.constant 0 : i32
    %c0_i32_1 = arith.constant 0 : i32
    return %c0_i32, %c0_i32_0 : i32, i32
  }
  func.func @transform_2(%arg0: i32) -> (i32, i32) {
    %c0_i32 = arith.constant 0 : i32
    %c0_i32_0 = arith.constant 0 : i32
    %c0_i32_1 = arith.constant 0 : i32
    return %c0_i32, %c0_i32_0 : i32, i32
  }
  func.func @transform_3(%arg0: i32) -> (i32, i32) {
    %c0_i32 = arith.constant 0 : i32
    %c0_i32_0 = arith.constant 0 : i32
    %c0_i32_1 = arith.constant 0 : i32
    return %c0_i32, %c0_i32_0 : i32, i32
  }
  func.func @transform_4(%arg0: i32) -> (i32, i32) {
    %c0_i32 = arith.constant 0 : i32
    %c0_i32_0 = arith.constant 0 : i32
    %c0_i32_1 = arith.constant 0 : i32
    return %c0_i32, %c0_i32_0 : i32, i32
  }
  func.func @transform_5(%arg0: i32) -> (i32, i32) {
    %c0_i32 = arith.constant 0 : i32
    %c0_i32_0 = arith.constant 0 : i32
    %c0_i32_1 = arith.constant 0 : i32
    return %c0_i32, %c0_i32_0 : i32, i32
  }
  func.func @transform_6(%arg0: i32) -> (i32, i32) {
    %c0_i32 = arith.constant 0 : i32
    %c0_i32_0 = arith.constant 0 : i32
    %c0_i32_1 = arith.constant 0 : i32
    return %c0_i32, %c0_i32_0 : i32, i32
  }
  func.func @transform_7(%arg0: i32) -> (i32, i32) {
    %c0_i32 = arith.constant 0 : i32
    %c0_i32_0 = arith.constant 0 : i32
    %c0_i32_1 = arith.constant 0 : i32
    return %c0_i32, %c0_i32_0 : i32, i32
  }
  func.func @transform_8(%arg0: i32) -> (i32, i32) {
    %c0_i32 = arith.constant 0 : i32
    %c0_i32_0 = arith.constant 0 : i32
    %c0_i32_1 = arith.constant 0 : i32
    return %c0_i32, %c0_i32_0 : i32, i32
  }
  func.func @transform_9(%arg0: i32) -> (i32, i32) {
    %c0_i32 = arith.constant 0 : i32
    %c0_i32_0 = arith.constant 0 : i32
    %c0_i32_1 = arith.constant 0 : i32
    return %c0_i32, %c0_i32_0 : i32, i32
  }
  func.func @transform_10(%arg0: i32) -> (i32, i32) {
    %c0_i32 = arith.constant 0 : i32
    %c0_i32_0 = arith.constant 0 : i32
    %c0_i32_1 = arith.constant 0 : i32
    return %c0_i32, %c0_i32_0 : i32, i32
  }
  func.func @transform_11(%arg0: i32) -> (i32, i32, i32) {
    %c0_i32 = arith.constant 0 : i32
    %c0_i32_0 = arith.constant 0 : i32
    %c0_i32_1 = arith.constant 0 : i32
    return %arg0, %c0_i32, %c0_i32_0 : i32, i32, i32
  }
}

</mosaic_0001>

<llo_original>
// kernel: convnext_block.1
$region0: #{convnext_block.1}
  #allocation0 [shape = 'u32[]', space=smem, size = 0x4, offset = 0x4, fixed_abs, tag = 'smem constant byte address 0x4 - core index']
  #allocation1 [shape = 'u32[144,128]{1,0:T(1,128)}', space=vmem, size = 0x12000, scoped, tag = 'internal scratch']
  #allocation2 [shape = 'f32[22,176]{1,0:T(8,128)}', space=vmem, size = 0x6000, scoped, tag = 'scratch operand']
  %s0 = inlined_call_operand.vmem [shape: f32[2,16,128], index: 0, kind: input, shape index: {}]
  %s1 = inlined_call_operand.vmem [shape: f32[49,128], index: 1, kind: input, shape index: {}]
  %s2 = inlined_call_operand.vmem [shape: f32[1,128], index: 2, kind: input, shape index: {}]
  %s3 = inlined_call_operand.vmem [shape: f32[1,128], index: 3, kind: input, shape index: {}]
  %s4 = inlined_call_operand.vmem [shape: f32[1,128], index: 4, kind: input, shape index: {}]
  %s5 = inlined_call_operand.vmem [shape: f32[128,128], index: 5, kind: input, shape index: {}]
  %s6 = inlined_call_operand.vmem [shape: bf16[128,512], index: 6, kind: input, shape index: {}]
  %s7 = inlined_call_operand.vmem [shape: f32[1,512], index: 7, kind: input, shape index: {}]
  %s8 = inlined_call_operand.vmem [shape: bf16[512,128], index: 8, kind: input, shape index: {}]
  %s9 = inlined_call_operand.vmem [shape: f32[1,128], index: 9, kind: input, shape index: {}]
  %s10 = inlined_call_operand.vmem [shape: f32[1,128], index: 10, kind: input, shape index: {}]
  %s11 = inlined_call_operand.vmem [shape: f32[2,16,128], index: 11, kind: output, shape index: {}]
  %s12 = sld [smem:[#allocation0]]
  $region77: #{convnext_block.1} parent=0
    _
  %s14 = ssub.s32 1, %s12
  %s15 = scalar_select 0, %s14, %s12
  loop: start=0, step=1, limit=4
  $region2: #{convnext_block.1} parent=0 // loop_pre_header
    _
  $region3: #{convnext_block.1} parent=0 // loop_header
    %s17 = sphi 0, %s21
    %p18 = scmp.ge.s32.totalorder %s17, 4
    %s27 = sphi 0, %s29
    %s30 = sphi 0, %s27
    %s31 = sphi 0, %s30
    %s47 = sphi 0, %s31
    %s51 = sphi 0, %s51
    %s53 = sphi 0, %s51
    %s54 = sphi 0, %s53
    %s68 = sphi 0, %s54
    %s72 = sphi 0, %s72
    %s74 = sphi 0, %s72
    %s75 = sphi 0, %s74
    %s89 = sphi 0, %s75
    %s93 = sphi 0, %s93
    %s95 = sphi 0, %s93
    %s96 = sphi 0, %s95
    %s110 = sphi 0, %s96
    %s114 = sphi 0, %s114
    %s116 = sphi 0, %s114
    %s117 = sphi 0, %s116
    %s131 = sphi 0, %s117
    %s135 = sphi 0, %s135
    %s137 = sphi 0, %s135
    %s138 = sphi 0, %s137
    %s152 = sphi 0, %s138
    %s156 = sphi 0, %s156
    %s158 = sphi 0, %s156
    %s159 = sphi 0, %s158
    %s173 = sphi 0, %s159
    %s177 = sphi 0, %s177
    %s179 = sphi 0, %s177
    %s180 = sphi 0, %s179
    %s194 = sphi 0, %s180
    %s198 = sphi 0, %s198
    %s200 = sphi 0, %s198
    %s201 = sphi 0, %s200
    %s215 = sphi 0, %s201
    %s219 = sphi 0, %s219
    %s221 = sphi 0, %s219
    %s222 = sphi 0, %s221
    %s236 = sphi 0, %s222
    %s240 = sphi 0, %s240
    %s242 = sphi 0, %s240
    %s243 = sphi 0, %s242
    %s257 = sphi 0, %s243
    %s263 = sphi 0, %s265
    %s266 = sphi 0, %s263
    %s267 = sphi 0, %s266
    %s283 = sphi 0, %s267
  $region4: #{convnext_block.1} parent=0 // loop_header_branch
    %20 = sbr.rel (%p18) target = $region8
  $region5: #{convnext_block.1} parent=0 // loop_body
    %s22 = ssub.s32 %s17, 1
    %s23 = ssub.s32 %s17, 2
    %s24 = sadd.s32 %s17, 1
    %s25 = ssub.s32 %s17, %s24
    %p26 = scmp.eq.s32.totalorder %s25, 0
    %s28 = sadd.s32 %s27, 1
    %s29 = scalar_select %p26, %s27, %s28
    %p32 = pneg %p26
    %p33 = scmp.eq.s32.totalorder %s17, 1
    %p34 = por %p32, %p33
    %p35 = scmp.ne.s32.totalorder %s27, %s30
    %p36 = scmp.eq.s32.totalorder %s17, 0
    %p37 = por %p35, %p36
    %p38 = scmp.ne.s32.totalorder %s27, %s30
    %p39 = scmp.eq.s32.totalorder %s22, 1
    %p40 = por %p38, %p39
    %p41 = scmp.ne.s32.totalorder %s30, %s31
    %p42 = scmp.eq.s32.totalorder %s22, 0
    %p43 = por %p41, %p42
    %p44 = scmp.ne.s32.totalorder %s30, %s31
    %p45 = scmp.eq.s32.totalorder %s23, 1
    %p46 = por %p44, %p45
    %p48 = scmp.ne.s32.totalorder %s31, %s47
    %p49 = scmp.eq.s32.totalorder %s23, 0
    %p50 = por %p48, %p49
    %s52 = sadd.s32 %s51, 1
    %p55 = scmp.eq.s32.totalorder %s17, 1
    %p56 = scmp.ne.s32.totalorder %s51, %s53
    %p57 = scmp.eq.s32.totalorder %s17, 0
    %p58 = por %p56, %p57
    %p59 = scmp.ne.s32.totalorder %s51, %s53
    %p60 = scmp.eq.s32.totalorder %s22, 1
    %p61 = por %p59, %p60
    %p62 = scmp.ne.s32.totalorder %s53, %s54
    %p63 = scmp.eq.s32.totalorder %s22, 0
    %p64 = por %p62, %p63
    %p65 = scmp.ne.s32.totalorder %s53, %s54
    %p66 = scmp.eq.s32.totalorder %s23, 1
    %p67 = por %p65, %p66
    %p69 = scmp.ne.s32.totalorder %s54, %s68
    %p70 = scmp.eq.s32.totalorder %s23, 0
    %p71 = por %p69, %p70
    %s73 = sadd.s32 %s72, 1
    %p76 = scmp.eq.s32.totalorder %s17, 1
    %p77 = scmp.ne.s32.totalorder %s72, %s74
    %p78 = scmp.eq.s32.totalorder %s17, 0
    %p79 = por %p77, %p78
    %p80 = scmp.ne.s32.totalorder %s72, %s74
    %p81 = scmp.eq.s32.totalorder %s22, 1
    %p82 = por %p80, %p81
    %p83 = scmp.ne.s32.totalorder %s74, %s75
    %p84 = scmp.eq.s32.totalorder %s22, 0
    %p85 = por %p83, %p84
    %p86 = scmp.ne.s32.totalorder %s74, %s75
    %p87 = scmp.eq.s32.totalorder %s23, 1
    %p88 = por %p86, %p87
    %p90 = scmp.ne.s32.totalorder %s75, %s89
    %p91 = scmp.eq.s32.totalorder %s23, 0
    %p92 = por %p90, %p91
    %s94 = sadd.s32 %s93, 1
    %p97 = scmp.eq.s32.totalorder %s17, 1
    %p98 = scmp.ne.s32.totalorder %s93, %s95
    %p99 = scmp.eq.s32.totalorder %s17, 0
    %p100 = por %p98, %p99
    %p101 = scmp.ne.s32.totalorder %s93, %s95
    %p102 = scmp.eq.s32.totalorder %s22, 1
    %p103 = por %p101, %p102
    %p104 = scmp.ne.s32.totalorder %s95, %s96
    %p105 = scmp.eq.s32.totalorder %s22, 0
    %p106 = por %p104, %p105
    %p107 = scmp.ne.s32.totalorder %s95, %s96
    %p108 = scmp.eq.s32.totalorder %s23, 1
    %p109 = por %p107, %p108
    %p111 = scmp.ne.s32.totalorder %s96, %s110
    %p112 = scmp.eq.s32.totalorder %s23, 0
    %p113 = por %p111, %p112
    %s115 = sadd.s32 %s114, 1
    %p118 = scmp.eq.s32.totalorder %s17, 1
    %p119 = scmp.ne.s32.totalorder %s114, %s116
    %p120 = scmp.eq.s32.totalorder %s17, 0
    %p121 = por %p119, %p120
    %p122 = scmp.ne.s32.totalorder %s114, %s116
    %p123 = scmp.eq.s32.totalorder %s22, 1
    %p124 = por %p122, %p123
    %p125 = scmp.ne.s32.totalorder %s116, %s117
    %p126 = scmp.eq.s32.totalorder %s22, 0
    %p127 = por %p125, %p126
    %p128 = scmp.ne.s32.totalorder %s116, %s117
    %p129 = scmp.eq.s32.totalorder %s23, 1
    %p130 = por %p128, %p129
    %p132 = scmp.ne.s32.totalorder %s117, %s131
    %p133 = scmp.eq.s32.totalorder %s23, 0
    %p134 = por %p132, %p133
    %s136 = sadd.s32 %s135, 1
    %p139 = scmp.eq.s32.totalorder %s17, 1
    %p140 = scmp.ne.s32.totalorder %s135, %s137
    %p141 = scmp.eq.s32.totalorder %s17, 0
    %p142 = por %p140, %p141
    %p143 = scmp.ne.s32.totalorder %s135, %s137
    %p144 = scmp.eq.s32.totalorder %s22, 1
    %p145 = por %p143, %p144
    %p146 = scmp.ne.s32.totalorder %s137, %s138
    %p147 = scmp.eq.s32.totalorder %s22, 0
    %p148 = por %p146, %p147
    %p149 = scmp.ne.s32.totalorder %s137, %s138
    %p150 = scmp.eq.s32.totalorder %s23, 1
    %p151 = por %p149, %p150
    %p153 = scmp.ne.s32.totalorder %s138, %s152
    %p154 = scmp.eq.s32.totalorder %s23, 0
    %p155 = por %p153, %p154
    %s157 = sadd.s32 %s156, 1
    %p160 = scmp.eq.s32.totalorder %s17, 1
    %p161 = scmp.ne.s32.totalorder %s156, %s158
    %p162 = scmp.eq.s32.totalorder %s17, 0
    %p163 = por %p161, %p162
    %p164 = scmp.ne.s32.totalorder %s156, %s158
    %p165 = scmp.eq.s32.totalorder %s22, 1
    %p166 = por %p164, %p165
    %p167 = scmp.ne.s32.totalorder %s158, %s159
    %p168 = scmp.eq.s32.totalorder %s22, 0
    %p169 = por %p167, %p168
    %p170 = scmp.ne.s32.totalorder %s158, %s159
    %p171 = scmp.eq.s32.totalorder %s23, 1
    %p172 = por %p170, %p171
    %p174 = scmp.ne.s32.totalorder %s159, %s173
    %p175 = scmp.eq.s32.totalorder %s23, 0
    %p176 = por %p174, %p175
    %s178 = sadd.s32 %s177, 1
    %p181 = scmp.eq.s32.totalorder %s17, 1
    %p182 = scmp.ne.s32.totalorder %s177, %s179
    %p183 = scmp.eq.s32.totalorder %s17, 0
    %p184 = por %p182, %p183
    %p185 = scmp.ne.s32.totalorder %s177, %s179
    %p186 = scmp.eq.s32.totalorder %s22, 1
    %p187 = por %p185, %p186
    %p188 = scmp.ne.s32.totalorder %s179, %s180
    %p189 = scmp.eq.s32.totalorder %s22, 0
    %p190 = por %p188, %p189
    %p191 = scmp.ne.s32.totalorder %s179, %s180
    %p192 = scmp.eq.s32.totalorder %s23, 1
    %p193 = por %p191, %p192
    %p195 = scmp.ne.s32.totalorder %s180, %s194
    %p196 = scmp.eq.s32.totalorder %s23, 0
    %p197 = por %p195, %p196
    %s199 = sadd.s32 %s198, 1
    %p202 = scmp.eq.s32.totalorder %s17, 1
    %p203 = scmp.ne.s32.totalorder %s198, %s200
    %p204 = scmp.eq.s32.totalorder %s17, 0
    %p205 = por %p203, %p204
    %p206 = scmp.ne.s32.totalorder %s198, %s200
    %p207 = scmp.eq.s32.totalorder %s22, 1
    %p208 = por %p206, %p207
    %p209 = scmp.ne.s32.totalorder %s200, %s201
    %p210 = scmp.eq.s32.totalorder %s22, 0
    %p211 = por %p209, %p210
    %p212 = scmp.ne.s32.totalorder %s200, %s201
    %p213 = scmp.eq.s32.totalorder %s23, 1
    %p214 = por %p212, %p213
    %p216 = scmp.ne.s32.totalorder %s201, %s215
    %p217 = scmp.eq.s32.totalorder %s23, 0
    %p218 = por %p216, %p217
    %s220 = sadd.s32 %s219, 1
    %p223 = scmp.eq.s32.totalorder %s17, 1
    %p224 = scmp.ne.s32.totalorder %s219, %s221
    %p225 = scmp.eq.s32.totalorder %s17, 0
    %p226 = por %p224, %p225
    %p227 = scmp.ne.s32.totalorder %s219, %s221
    %p228 = scmp.eq.s32.totalorder %s22, 1
    %p229 = por %p227, %p228
    %p230 = scmp.ne.s32.totalorder %s221, %s222
    %p231 = scmp.eq.s32.totalorder %s22, 0
    %p232 = por %p230, %p231
    %p233 = scmp.ne.s32.totalorder %s221, %s222
    %p234 = scmp.eq.s32.totalorder %s23, 1
    %p235 = por %p233, %p234
    %p237 = scmp.ne.s32.totalorder %s222, %s236
    %p238 = scmp.eq.s32.totalorder %s23, 0
    %p239 = por %p237, %p238
    %s241 = sadd.s32 %s240, 1
    %p244 = scmp.eq.s32.totalorder %s17, 1
    %p245 = scmp.ne.s32.totalorder %s240, %s242
    %p246 = scmp.eq.s32.totalorder %s17, 0
    %p247 = por %p245, %p246
    %p248 = scmp.ne.s32.totalorder %s240, %s242
    %p249 = scmp.eq.s32.totalorder %s22, 1
    %p250 = por %p248, %p249
    %p251 = scmp.ne.s32.totalorder %s242, %s243
    %p252 = scmp.eq.s32.totalorder %s22, 0
    %p253 = por %p251, %p252
    %p254 = scmp.ne.s32.totalorder %s242, %s243
    %p255 = scmp.eq.s32.totalorder %s23, 1
    %p256 = por %p254, %p255
    %p258 = scmp.ne.s32.totalorder %s243, %s257
    %p259 = scmp.eq.s32.totalorder %s23, 0
    %p260 = por %p258, %p259
    %s261 = ssub.s32 %s17, %s24
    %p262 = scmp.eq.s32.totalorder %s261, 0
    %s264 = sadd.s32 %s263, 1
    %s265 = scalar_select %p262, %s263, %s264
    %p268 = pneg %p262
    %p269 = scmp.eq.s32.totalorder %s17, 1
    %p270 = por %p268, %p269
    %p271 = scmp.ne.s32.totalorder %s263, %s266
    %p272 = scmp.eq.s32.totalorder %s17, 0
    %p273 = por %p271, %p272
    %p274 = scmp.ne.s32.totalorder %s263, %s266
    %p275 = scmp.eq.s32.totalorder %s22, 1
    %p276 = por %p274, %p275
    %p277 = scmp.ne.s32.totalorder %s266, %s267
    %p278 = scmp.eq.s32.totalorder %s22, 0
    %p279 = por %p277, %p278
    %p280 = scmp.ne.s32.totalorder %s266, %s267
    %p281 = scmp.eq.s32.totalorder %s23, 1
    %p282 = por %p280, %p281
    %p284 = scmp.ne.s32.totalorder %s267, %s283
    %p285 = scmp.eq.s32.totalorder %s23, 0
    %p286 = por %p284, %p285
    %p287 = scmp.le.s32.totalorder 1, %s17
    %p288 = scmp.lt.s32.totalorder %s17, 3
    %p289 = pnand %p287, %p288
    %p290 = pneg %p289
    // Predicated region
    $region9: #{convnext_block.1} parent=5 // pred_check
      _
    $region10: #{convnext_block.1} parent=5 // pred_check_branch
      %292 = sbr.rel (%p289) target = $region12
    $region11: #{convnext_block.1} parent=5 // pred_region
      %s293 = ssub.s32 %s17, 1
      // Predicated region
      $region13: #{convnext_block.1} parent=11 // pred_check
        %p294 = pneg %p64
      $region14: #{convnext_block.1} parent=11 // pred_check_branch
        %296 = sbr.rel (%p294) target = $region16
      $region15: #{convnext_block.1} parent=11 // pred_region
        _
      $region16: #{convnext_block.1} parent=11 // pred_fallthru
        _
      // Predicated region
      $region17: #{convnext_block.1} parent=11 // pred_check
        %p297 = pneg %p85
      $region18: #{convnext_block.1} parent=11 // pred_check_branch
        %299 = sbr.rel (%p297) target = $region20
      $region19: #{convnext_block.1} parent=11 // pred_region
        _
      $region20: #{convnext_block.1} parent=11 // pred_fallthru
        _
      // Predicated region
      $region21: #{convnext_block.1} parent=11 // pred_check
        %p300 = pneg %p106
      $region22: #{convnext_block.1} parent=11 // pred_check_branch
        %302 = sbr.rel (%p300) target = $region24
      $region23: #{convnext_block.1} parent=11 // pred_region
        _
      $region24: #{convnext_block.1} parent=11 // pred_fallthru
        _
      // Predicated region
      $region25: #{convnext_block.1} parent=11 // pred_check
        %p303 = pneg %p127
      $region26: #{convnext_block.1} parent=11 // pred_check_branch
        %305 = sbr.rel (%p303) target = $region28
      $region27: #{convnext_block.1} parent=11 // pred_region
        _
      $region28: #{convnext_block.1} parent=11 // pred_fallthru
        _
      // Predicated region
      $region29: #{convnext_block.1} parent=11 // pred_check
        %p306 = pneg %p148
      $region30: #{convnext_block.1} parent=11 // pred_check_branch
        %308 = sbr.rel (%p306) target = $region32
      $region31: #{convnext_block.1} parent=11 // pred_region
        _
      $region32: #{convnext_block.1} parent=11 // pred_fallthru
        _
      // Predicated region
      $region33: #{convnext_block.1} parent=11 // pred_check
        %p309 = pneg %p169
      $region34: #{convnext_block.1} parent=11 // pred_check_branch
        %311 = sbr.rel (%p309) target = $region36
      $region35: #{convnext_block.1} parent=11 // pred_region
        _
      $region36: #{convnext_block.1} parent=11 // pred_fallthru
        _
      // Predicated region
      $region37: #{convnext_block.1} parent=11 // pred_check
        %p312 = pneg %p190
      $region38: #{convnext_block.1} parent=11 // pred_check_branch
        %314 = sbr.rel (%p312) target = $region40
      $region39: #{convnext_block.1} parent=11 // pred_region
        _
      $region40: #{convnext_block.1} parent=11 // pred_fallthru
        _
      // Predicated region
      $region41: #{convnext_block.1} parent=11 // pred_check
        %p315 = pneg %p211
      $region42: #{convnext_block.1} parent=11 // pred_check_branch
        %317 = sbr.rel (%p315) target = $region44
      $region43: #{convnext_block.1} parent=11 // pred_region
        _
      $region44: #{convnext_block.1} parent=11 // pred_fallthru
        _
      // Predicated region
      $region45: #{convnext_block.1} parent=11 // pred_check
        %p318 = pneg %p232
      $region46: #{convnext_block.1} parent=11 // pred_check_branch
        %320 = sbr.rel (%p318) target = $region48
      $region47: #{convnext_block.1} parent=11 // pred_region
        _
      $region48: #{convnext_block.1} parent=11 // pred_fallthru
        _
      // Predicated region
      $region49: #{convnext_block.1} parent=11 // pred_check
        %p321 = pneg %p253
      $region50: #{convnext_block.1} parent=11 // pred_check_branch
        %323 = sbr.rel (%p321) target = $region52
      $region51: #{convnext_block.1} parent=11 // pred_region
        _
      $region52: #{convnext_block.1} parent=11 // pred_fallthru
        _
    $region12: #{convnext_block.1} parent=5 // pred_fallthru
      _
    %p324 = scmp.lt.s32.totalorder %s17, 2
    // Predicated region
    $region53: #{convnext_block.1} parent=5 // pred_check
      %p325 = pneg %p324
    $region54: #{convnext_block.1} parent=5 // pred_check_branch
      %327 = sbr.rel (%p325) target = $region56
    $region55: #{convnext_block.1} parent=5 // pred_region
      // Predicated region
      $region57: #{convnext_block.1} parent=55 // pred_check
        %p328 = pneg %p37
      $region58: #{convnext_block.1} parent=55 // pred_check_branch
        %330 = sbr.rel (%p328) target = $region60
      $region59: #{convnext_block.1} parent=55 // pred_region
        %p331 = scmp.lt.s32.totalorder %s17, 1
        %s332 = scalar_select %p331, %s17, 1
        %s333 = smul.addr %s332, 2
        %s334 = smul.addr %s333, 8
        %s335 = scalar_lea.vmem %s0, %s334
      $region60: #{convnext_block.1} parent=55 // pred_fallthru
        _
    $region56: #{convnext_block.1} parent=5 // pred_fallthru
      _
    %p336 = scmp.le.s32.totalorder 1, %s17
    %p337 = scmp.lt.s32.totalorder %s17, 3
    %p338 = pnand %p336, %p337
    %p339 = pneg %p338
    // Predicated region
    $region61: #{convnext_block.1} parent=5 // pred_check
      _
    $region62: #{convnext_block.1} parent=5 // pred_check_branch
      %341 = sbr.rel (%p338) target = $region64
    $region63: #{convnext_block.1} parent=5 // pred_region
      %s342 = ssub.s32 %s17, 1
      %p343 = scmp.lt.s32.totalorder %s22, 1
      %s344 = scalar_select %p343, %s22, 1
      %s345 = smul.addr %s344, 2
      %s346 = smul.addr %s345, 8
      %s347 = scalar_lea.vmem %s0, %s346
      %p348 = pneg %p43
      %p349 = pneg %p40
      %p350 = pneg %p64
      %p351 = pneg %p61
      %p352 = pneg %p85
      %p353 = pneg %p82
      %p354 = pneg %p106
      %p355 = pneg %p103
      %p356 = pneg %p127
      %p357 = pneg %p124
      %p358 = pneg %p148
      %p359 = pneg %p145
      %p360 = pneg %p169
      %p361 = pneg %p166
      %p362 = pneg %p190
      %p363 = pneg %p187
      %p364 = pneg %p211
      %p365 = pneg %p208
      %p366 = pneg %p232
      %p367 = pneg %p229
      %p368 = pneg %p253
      %p369 = pneg %p250
      %p370 = pneg %p279
      %p371 = pneg %p276
      %p372 = scmp.lt.s32.totalorder %s22, 1
      %s373 = scalar_select %p372, %s22, 1
      %s374 = smul.addr %s373, 2
      %s375 = smul.addr %s374, 8
      %s376 = scalar_lea.vmem %s11, %s375
      %p377 = scmp.lt.s32.totalorder %s22, 1
      %s378 = scalar_select %p377, %s22, 1
      %s379 = smul.addr %s378, 2
      %s380 = smul.addr %s379, 8
      %s381 = scalar_lea.vmem %s0, %s380
      %p382 = scmp.lt.s32.totalorder %s22, 1
      %s383 = scalar_select %p382, %s22, 1
      %s384 = smul.addr %s383, 2
      %s385 = smul.addr %s384, 8
      %s386 = scalar_lea.vmem %s11, %s385
      %v388 = vld [vmem:[%s381] sm:$0xff]
      %v389 = vld [vmem:[%s381 + $0x8] sm:$0xff]
      %390 = vst [vmem:[#allocation2] sm:$0xff] 0.0
      %vm391 = vcmask 392192
      %392 = vst.msk [vmem:[#allocation2 + $0x8] sm:$0xff] %vm391, 0.0
      %393 = vst [vmem:[#allocation2 + $0x10] sm:$0xff] 0.0
      %394 = vst.msk [vmem:[#allocation2 + $0x18] sm:$0xff] %vm391, 0.0
      %395 = vst [vmem:[#allocation2 + $0x20] sm:$0x3f] 0.0
      %vm396 = vcmask 390144
      %397 = vst.msk [vmem:[#allocation2 + $0x28] sm:$0x3f] %vm396, 0.0
      %vm400 = vcmask 1042432
      %v401 = vrot.slane %v388, 5
      %v402 = vrot.slane %v389, 5
      %v403 = vsel %vm400, %v401, %v402
      %404 = vrot.lane.b32.xlu0 %v401, 24
      %v405 = vpop.permute.xlu0 %404
      %406 = vrot.lane.b32.xlu0 %v403, 24
      %v407 = vpop.permute.xlu0 %406
      %408 = vrot.lane.b32.xlu0 %v402, 24
      %v409 = vpop.permute.xlu0 %408
      %vm413 = vcmask 1047747
      %414 = vst.msk [vmem:[#allocation2] sm:$0xf8] %vm413, %v405
      %vm415 = vcmask 195587
      %416 = vst.msk [vmem:[#allocation2 + $0x8] sm:$0xf8] %vm415, %v405
      %vm417 = vcmask 1047744
      %418 = vst.msk [vmem:[#allocation2 + $0x10] sm:$0xff] %vm417, %v407
      %vm419 = vcmask 195584
      %420 = vst.msk [vmem:[#allocation2 + $0x18] sm:$0xff] %vm419, %v407
      %vm421 = vcmask 1042624
      %422 = vst.msk [vmem:[#allocation2 + $0x20] sm:$0x7] %vm421, %v409
      %vm423 = vcmask 190464
      %424 = vst.msk [vmem:[#allocation2 + $0x28] sm:$0x7] %vm423, %v409
      %v425 = vld [vmem:[#allocation2] sm:$0xff]
      %v426 = vld [vmem:[#allocation2 + $0x8] sm:$0xff]
      %v427 = vld [vmem:[#allocation2 + $0x10] sm:$0xff]
      %v428 = vld [vmem:[#allocation2 + $0x18] sm:$0xff]
      %v429 = vld [vmem:[#allocation2 + $0x20] sm:$0x3f]
      %v430 = vld [vmem:[#allocation2 + $0x28] sm:$0x3f]
      %v431 = vld [vmem:[%s1] sm:$0x1]
      %v432 = vlaneseq
      %v433 = vshrl.u32 %v432, 7
      %v434 = vsub.s32 0, %v433
      %v435 = vrot.slane %v431, %v434
      %v436 = vmul.f32 %v425, %v435
      %v437 = vmul.f32 %v427, %v435
      %v438 = vadd.f32 %v436, 0.0
      %v439 = vadd.f32 %v437, 0.0
      %v440 = vld [vmem:[%s1 + $0x1] sm:$0x1]
      %v441 = vlaneseq
      %v442 = vshrl.u32 %v441, 7
      %v443 = vsub.s32 0, %v442
      %v444 = vrot.slane %v440, %v443
      %446 = vrot.lane.b32.xlu0 %v444, 8
      %v447 = vpop.permute.xlu0 %446
      %v449 = vmul.f32 %v425, %v447
      %v450 = vmul.f32 %v426, %v447
      %v451 = vmul.f32 %v427, %v447
      %v452 = vmul.f32 %v428, %v447
      %457 = vrot.lane.b32.xlu0 %v449, 120
      %v458 = vpop.permute.xlu0 %457
      %459 = vrot.lane.b32.xlu0 %v450, 120
      %v460 = vpop.permute.xlu0 %459
      %461 = vrot.lane.b32.xlu0 %v451, 120
      %v462 = vpop.permute.xlu0 %461
      %463 = vrot.lane.b32.xlu0 %v452, 120
      %v464 = vpop.permute.xlu0 %463
      %vm465 = vcmask 982016
      %v466 = vsel %vm465, %v458, %v460
      %v467 = vsel %vm465, %v462, %v464
      %v470 = vadd.f32 %v438, %v466
      %v471 = vadd.f32 %v439, %v467
      %v472 = vld [vmem:[%s1 + $0x2] sm:$0x1]
      %v473 = vlaneseq
      %v474 = vshrl.u32 %v473, 7
      %v475 = vsub.s32 0, %v474
      %v476 = vrot.slane %v472, %v475
      %478 = vrot.lane.b32.xlu0 %v476, 16
      %v479 = vpop.permute.xlu0 %478
      %v481 = vmul.f32 %v425, %v479
      %v482 = vmul.f32 %v426, %v479
      %v483 = vmul.f32 %v427, %v479
      %v484 = vmul.f32 %v428, %v479
      %489 = vrot.lane.b32.xlu0 %v481, 112
      %v490 = vpop.permute.xlu0 %489
      %491 = vrot.lane.b32.xlu0 %v482, 112
      %v492 = vpop.permute.xlu0 %491
      %493 = vrot.lane.b32.xlu0 %v483, 112
      %v494 = vpop.permute.xlu0 %493
      %495 = vrot.lane.b32.xlu0 %v484, 112
      %v496 = vpop.permute.xlu0 %495
      %vm497 = vcmask 916480
      %v498 = vsel %vm497, %v490, %v492
      %v499 = vsel %vm497, %v494, %v496
      %v502 = vadd.f32 %v470, %v498
      %v503 = vadd.f32 %v471, %v499
      %v504 = vld [vmem:[%s1 + $0x3] sm:$0x1]
      %v505 = vlaneseq
      %v506 = vshrl.u32 %v505, 7
      %v507 = vsub.s32 0, %v506
      %v508 = vrot.slane %v504, %v507
      %510 = vrot.lane.b32.xlu0 %v508, 24
      %v511 = vpop.permute.xlu0 %510
      %v513 = vmul.f32 %v425, %v511
      %v514 = vmul.f32 %v426, %v511
      %v515 = vmul.f32 %v427, %v511
      %v516 = vmul.f32 %v428, %v511
      %521 = vrot.lane.b32.xlu0 %v513, 104
      %v522 = vpop.permute.xlu0 %521
      %523 = vrot.lane.b32.xlu0 %v514, 104
      %v524 = vpop.permute.xlu0 %523
      %525 = vrot.lane.b32.xlu0 %v515, 104
      %v526 = vpop.permute.xlu0 %525
      %527 = vrot.lane.b32.xlu0 %v516, 104
      %v528 = vpop.permute.xlu0 %527
      %vm529 = vcmask 850944
      %v530 = vsel %vm529, %v522, %v524
      %v531 = vsel %vm529, %v526, %v528
      %v534 = vadd.f32 %v502, %v530
      %v535 = vadd.f32 %v503, %v531
      %v536 = vld [vmem:[%s1 + $0x4] sm:$0x1]
      %v537 = vlaneseq
      %v538 = vshrl.u32 %v537, 7
      %v539 = vsub.s32 0, %v538
      %v540 = vrot.slane %v536, %v539
      %542 = vrot.lane.b32.xlu0 %v540, 32
      %v543 = vpop.permute.xlu0 %542
      %v545 = vmul.f32 %v425, %v543
      %v546 = vmul.f32 %v426, %v543
      %v547 = vmul.f32 %v427, %v543
      %v548 = vmul.f32 %v428, %v543
      %553 = vrot.lane.b32.xlu0 %v545, 96
      %v554 = vpop.permute.xlu0 %553
      %555 = vrot.lane.b32.xlu0 %v546, 96
      %v556 = vpop.permute.xlu0 %555
      %557 = vrot.lane.b32.xlu0 %v547, 96
      %v558 = vpop.permute.xlu0 %557
      %559 = vrot.lane.b32.xlu0 %v548, 96
      %v560 = vpop.permute.xlu0 %559
      %vm561 = vcmask 785408
      %v562 = vsel %vm561, %v554, %v556
      %v563 = vsel %vm561, %v558, %v560
      %v566 = vadd.f32 %v534, %v562
      %v567 = vadd.f32 %v535, %v563
      %v568 = vld [vmem:[%s1 + $0x5] sm:$0x1]
      %v569 = vlaneseq
      %v570 = vshrl.u32 %v569, 7
      %v571 = vsub.s32 0, %v570
      %v572 = vrot.slane %v568, %v571
      %574 = vrot.lane.b32.xlu0 %v572, 40
      %v575 = vpop.permute.xlu0 %574
      %v577 = vmul.f32 %v425, %v575
      %v578 = vmul.f32 %v426, %v575
      %v579 = vmul.f32 %v427, %v575
      %v580 = vmul.f32 %v428, %v575
      %585 = vrot.lane.b32.xlu0 %v577, 88
      %v586 = vpop.permute.xlu0 %585
      %587 = vrot.lane.b32.xlu0 %v578, 88
      %v588 = vpop.permute.xlu0 %587
      %589 = vrot.lane.b32.xlu0 %v579, 88
      %v590 = vpop.permute.xlu0 %589
      %591 = vrot.lane.b32.xlu0 %v580, 88
      %v592 = vpop.permute.xlu0 %591
      %vm593 = vcmask 719872
      %v594 = vsel %vm593, %v586, %v588
      %v595 = vsel %vm593, %v590, %v592
      %v598 = vadd.f32 %v566, %v594
      %v599 = vadd.f32 %v567, %v595
      %v600 = vld [vmem:[%s1 + $0x6] sm:$0x1]
      %v601 = vlaneseq
      %v602 = vshrl.u32 %v601, 7
      %v603 = vsub.s32 0, %v602
      %v604 = vrot.slane %v600, %v603
      %606 = vrot.lane.b32.xlu0 %v604, 48
      %v607 = vpop.permute.xlu0 %606
      %v609 = vmul.f32 %v425, %v607
      %v610 = vmul.f32 %v426, %v607
      %v611 = vmul.f32 %v427, %v607
      %v612 = vmul.f32 %v428, %v607
      %617 = vrot.lane.b32.xlu0 %v609, 80
      %v618 = vpop.permute.xlu0 %617
      %619 = vrot.lane.b32.xlu0 %v610, 80
      %v620 = vpop.permute.xlu0 %619
      %621 = vrot.lane.b32.xlu0 %v611, 80
      %v622 = vpop.permute.xlu0 %621
      %623 = vrot.lane.b32.xlu0 %v612, 80
      %v624 = vpop.permute.xlu0 %623
      %vm625 = vcmask 654336
      %v626 = vsel %vm625, %v618, %v620
      %v627 = vsel %vm625, %v622, %v624
      %v630 = vadd.f32 %v598, %v626
      %v631 = vadd.f32 %v599, %v627
      %v632 = vld [vmem:[%s1 + $0x7] sm:$0x1]
      %v633 = vlaneseq
      %v634 = vshrl.u32 %v633, 7
      %v635 = vsub.s32 0, %v634
      %v636 = vrot.slane %v632, %v635
      %v637 = vmul.f32 %v425, %v636
      %v638 = vmul.f32 %v427, %v636
      %v639 = vmul.f32 %v429, %v636
      %vm643 = vcmask 1046528
      %v644 = vrot.slane %v637, 1
      %v645 = vrot.slane %v638, 1
      %v646 = vsel %vm643, %v644, %v645
      %v647 = vrot.slane %v639, 1
      %v648 = vsel %vm643, %v645, %v647
      %v651 = vadd.f32 %v630, %v646
      %v652 = vadd.f32 %v631, %v648
      %v653 = vld [vmem:[%s1 + $0x8] sm:$0x1]
      %v654 = vlaneseq
      %v655 = vshrl.u32 %v654, 7
      %v656 = vsub.s32 0, %v655
      %v657 = vrot.slane %v653, %v656
      %659 = vrot.lane.b32.xlu0 %v657, 8
      %v660 = vpop.permute.xlu0 %659
      %v662 = vmul.f32 %v425, %v660
      %v663 = vmul.f32 %v426, %v660
      %v664 = vmul.f32 %v427, %v660
      %v665 = vmul.f32 %v428, %v660
      %v666 = vmul.f32 %v429, %v660
      %v667 = vmul.f32 %v430, %v660
      %v674 = vrot.slane %v662, 1
      %v675 = vrot.slane %v664, 1
      %v676 = vsel %vm643, %v674, %v675
      %v677 = vrot.slane %v663, 1
      %v678 = vrot.slane %v665, 1
      %v679 = vsel %vm643, %v677, %v678
      %v680 = vrot.slane %v666, 1
      %v681 = vsel %vm643, %v675, %v680
      %v682 = vrot.slane %v667, 1
      %v683 = vsel %vm643, %v678, %v682
      %684 = vrot.lane.b32.xlu0 %v676, 120
      %v685 = vpop.permute.xlu0 %684
      %686 = vrot.lane.b32.xlu0 %v679, 120
      %v687 = vpop.permute.xlu0 %686
      %688 = vrot.lane.b32.xlu0 %v681, 120
      %v689 = vpop.permute.xlu0 %688
      %690 = vrot.lane.b32.xlu0 %v683, 120
      %v691 = vpop.permute.xlu0 %690
      %v692 = vsel %vm465, %v685, %v687
      %v693 = vsel %vm465, %v689, %v691
      %v696 = vadd.f32 %v651, %v692
      %v697 = vadd.f32 %v652, %v693
      %v698 = vld [vmem:[%s1 + $0x9] sm:$0x1]
      %v699 = vlaneseq
      %v700 = vshrl.u32 %v699, 7
      %v701 = vsub.s32 0, %v700
      %v702 = vrot.slane %v698, %v701
      %704 = vrot.lane.b32.xlu0 %v702, 16
      %v705 = vpop.permute.xlu0 %704
      %v707 = vmul.f32 %v425, %v705
      %v708 = vmul.f32 %v426, %v705
      %v709 = vmul.f32 %v427, %v705
      %v710 = vmul.f32 %v428, %v705
      %v711 = vmul.f32 %v429, %v705
      %v712 = vmul.f32 %v430, %v705
      %v719 = vrot.slane %v707, 1
      %v720 = vrot.slane %v709, 1
      %v721 = vsel %vm643, %v719, %v720
      %v722 = vrot.slane %v708, 1
      %v723 = vrot.slane %v710, 1
      %v724 = vsel %vm643, %v722, %v723
      %v725 = vrot.slane %v711, 1
      %v726 = vsel %vm643, %v720, %v725
      %v727 = vrot.slane %v712, 1
      %v728 = vsel %vm643, %v723, %v727
      %729 = vrot.lane.b32.xlu0 %v721, 112
      %v730 = vpop.permute.xlu0 %729
      %731 = vrot.lane.b32.xlu0 %v724, 112
      %v732 = vpop.permute.xlu0 %731
      %733 = vrot.lane.b32.xlu0 %v726, 112
      %v734 = vpop.permute.xlu0 %733
      %735 = vrot.lane.b32.xlu0 %v728, 112
      %v736 = vpop.permute.xlu0 %735
      %v737 = vsel %vm497, %v730, %v732
      %v738 = vsel %vm497, %v734, %v736
      %v741 = vadd.f32 %v696, %v737
      %v742 = vadd.f32 %v697, %v738
      %v743 = vld [vmem:[%s1 + $0xa] sm:$0x1]
      %v744 = vlaneseq
      %v745 = vshrl.u32 %v744, 7
      %v746 = vsub.s32 0, %v745
      %v747 = vrot.slane %v743, %v746
      %749 = vrot.lane.b32.xlu0 %v747, 24
      %v750 = vpop.permute.xlu0 %749
      %v752 = vmul.f32 %v425, %v750
      %v753 = vmul.f32 %v426, %v750
      %v754 = vmul.f32 %v427, %v750
      %v755 = vmul.f32 %v428, %v750
      %v756 = vmul.f32 %v429, %v750
      %v757 = vmul.f32 %v430, %v750
      %v764 = vrot.slane %v752, 1
      %v765 = vrot.slane %v754, 1
      %v766 = vsel %vm643, %v764, %v765
      %v767 = vrot.slane %v753, 1
      %v768 = vrot.slane %v755, 1
      %v769 = vsel %vm643, %v767, %v768
      %v770 = vrot.slane %v756, 1
      %v771 = vsel %vm643, %v765, %v770
      %v772 = vrot.slane %v757, 1
      %v773 = vsel %vm643, %v768, %v772
      %774 = vrot.lane.b32.xlu0 %v766, 104
      %v775 = vpop.permute.xlu0 %774
      %776 = vrot.lane.b32.xlu0 %v769, 104
      %v777 = vpop.permute.xlu0 %776
      %778 = vrot.lane.b32.xlu0 %v771, 104
      %v779 = vpop.permute.xlu0 %778
      %780 = vrot.lane.b32.xlu0 %v773, 104
      %v781 = vpop.permute.xlu0 %780
      %v782 = vsel %vm529, %v775, %v777
      %v783 = vsel %vm529, %v779, %v781
      %v786 = vadd.f32 %v741, %v782
      %v787 = vadd.f32 %v742, %v783
      %v788 = vld [vmem:[%s1 + $0xb] sm:$0x1]
      %v789 = vlaneseq
      %v790 = vshrl.u32 %v789, 7
      %v791 = vsub.s32 0, %v790
      %v792 = vrot.slane %v788, %v791
      %794 = vrot.lane.b32.xlu0 %v792, 32
      %v795 = vpop.permute.xlu0 %794
      %v797 = vmul.f32 %v425, %v795
      %v798 = vmul.f32 %v426, %v795
      %v799 = vmul.f32 %v427, %v795
      %v800 = vmul.f32 %v428, %v795
      %v801 = vmul.f32 %v429, %v795
      %v802 = vmul.f32 %v430, %v795
      %v809 = vrot.slane %v797, 1
      %v810 = vrot.slane %v799, 1
      %v811 = vsel %vm643, %v809, %v810
      %v812 = vrot.slane %v798, 1
      %v813 = vrot.slane %v800, 1
      %v814 = vsel %vm643, %v812, %v813
      %v815 = vrot.slane %v801, 1
      %v816 = vsel %vm643, %v810, %v815
      %v817 = vrot.slane %v802, 1
      %v818 = vsel %vm643, %v813, %v817
      %819 = vrot.lane.b32.xlu0 %v811, 96
      %v820 = vpop.permute.xlu0 %819
      %821 = vrot.lane.b32.xlu0 %v814, 96
      %v822 = vpop.permute.xlu0 %821
      %823 = vrot.lane.b32.xlu0 %v816, 96
      %v824 = vpop.permute.xlu0 %823
      %825 = vrot.lane.b32.xlu0 %v818, 96
      %v826 = vpop.permute.xlu0 %825
      %v827 = vsel %vm561, %v820, %v822
      %v828 = vsel %vm561, %v824, %v826
      %v831 = vadd.f32 %v786, %v827
      %v832 = vadd.f32 %v787, %v828
      %v833 = vld [vmem:[%s1 + $0xc] sm:$0x1]
      %v834 = vlaneseq
      %v835 = vshrl.u32 %v834, 7
      %v836 = vsub.s32 0, %v835
      %v837 = vrot.slane %v833, %v836
      %839 = vrot.lane.b32.xlu0 %v837, 40
      %v840 = vpop.permute.xlu0 %839
      %v842 = vmul.f32 %v425, %v840
      %v843 = vmul.f32 %v426, %v840
      %v844 = vmul.f32 %v427, %v840
      %v845 = vmul.f32 %v428, %v840
      %v846 = vmul.f32 %v429, %v840
      %v847 = vmul.f32 %v430, %v840
      %v854 = vrot.slane %v842, 1
      %v855 = vrot.slane %v844, 1
      %v856 = vsel %vm643, %v854, %v855
      %v857 = vrot.slane %v843, 1
      %v858 = vrot.slane %v845, 1
      %v859 = vsel %vm643, %v857, %v858
      %v860 = vrot.slane %v846, 1
      %v861 = vsel %vm643, %v855, %v860
      %v862 = vrot.slane %v847, 1
      %v863 = vsel %vm643, %v858, %v862
      %864 = vrot.lane.b32.xlu0 %v856, 88
      %v865 = vpop.permute.xlu0 %864
      %866 = vrot.lane.b32.xlu0 %v859, 88
      %v867 = vpop.permute.xlu0 %866
      %868 = vrot.lane.b32.xlu0 %v861, 88
      %v869 = vpop.permute.xlu0 %868
      %870 = vrot.lane.b32.xlu0 %v863, 88
      %v871 = vpop.permute.xlu0 %870
      %v872 = vsel %vm593, %v865, %v867
      %v873 = vsel %vm593, %v869, %v871
      %v876 = vadd.f32 %v831, %v872
      %v877 = vadd.f32 %v832, %v873
      %v878 = vld [vmem:[%s1 + $0xd] sm:$0x1]
      %v879 = vlaneseq
      %v880 = vshrl.u32 %v879, 7
      %v881 = vsub.s32 0, %v880
      %v882 = vrot.slane %v878, %v881
      %884 = vrot.lane.b32.xlu0 %v882, 48
      %v885 = vpop.permute.xlu0 %884
      %v887 = vmul.f32 %v425, %v885
      %v888 = vmul.f32 %v426, %v885
      %v889 = vmul.f32 %v427, %v885
      %v890 = vmul.f32 %v428, %v885
      %v891 = vmul.f32 %v429, %v885
      %v892 = vmul.f32 %v430, %v885
      %v899 = vrot.slane %v887, 1
      %v900 = vrot.slane %v889, 1
      %v901 = vsel %vm643, %v899, %v900
      %v902 = vrot.slane %v888, 1
      %v903 = vrot.slane %v890, 1
      %v904 = vsel %vm643, %v902, %v903
      %v905 = vrot.slane %v891, 1
      %v906 = vsel %vm643, %v900, %v905
      %v907 = vrot.slane %v892, 1
      %v908 = vsel %vm643, %v903, %v907
      %909 = vrot.lane.b32.xlu0 %v901, 80
      %v910 = vpop.permute.xlu0 %909
      %911 = vrot.lane.b32.xlu0 %v904, 80
      %v912 = vpop.permute.xlu0 %911
      %913 = vrot.lane.b32.xlu0 %v906, 80
      %v914 = vpop.permute.xlu0 %913
      %915 = vrot.lane.b32.xlu0 %v908, 80
      %v916 = vpop.permute.xlu0 %915
      %v917 = vsel %vm625, %v910, %v912
      %v918 = vsel %vm625, %v914, %v916
      %v921 = vadd.f32 %v876, %v917
      %v922 = vadd.f32 %v877, %v918
      %v923 = vld [vmem:[%s1 + $0xe] sm:$0x1]
      %v924 = vlaneseq
      %v925 = vshrl.u32 %v924, 7
      %v926 = vsub.s32 0, %v925
      %v927 = vrot.slane %v923, %v926
      %v928 = vmul.f32 %v425, %v927
      %v929 = vmul.f32 %v427, %v927
      %v930 = vmul.f32 %v429, %v927
      %vm934 = vcmask 1045504
      %v935 = vrot.slane %v928, 2
      %v936 = vrot.slane %v929, 2
      %v937 = vsel %vm934, %v935, %v936
      %v938 = vrot.slane %v930, 2
      %v939 = vsel %vm934, %v936, %v938
      %v942 = vadd.f32 %v921, %v937
      %v943 = vadd.f32 %v922, %v939
      %v944 = vld [vmem:[%s1 + $0xf] sm:$0x1]
      %v945 = vlaneseq
      %v946 = vshrl.u32 %v945, 7
      %v947 = vsub.s32 0, %v946
      %v948 = vrot.slane %v944, %v947
      %950 = vrot.lane.b32.xlu0 %v948, 8
      %v951 = vpop.permute.xlu0 %950
      %v953 = vmul.f32 %v425, %v951
      %v954 = vmul.f32 %v426, %v951
      %v955 = vmul.f32 %v427, %v951
      %v956 = vmul.f32 %v428, %v951
      %v957 = vmul.f32 %v429, %v951
      %v958 = vmul.f32 %v430, %v951
      %v965 = vrot.slane %v953, 2
      %v966 = vrot.slane %v955, 2
      %v967 = vsel %vm934, %v965, %v966
      %v968 = vrot.slane %v954, 2
      %v969 = vrot.slane %v956, 2
      %v970 = vsel %vm934, %v968, %v969
      %v971 = vrot.slane %v957, 2
      %v972 = vsel %vm934, %v966, %v971
      %v973 = vrot.slane %v958, 2
      %v974 = vsel %vm934, %v969, %v973
      %975 = vrot.lane.b32.xlu0 %v967, 120
      %v976 = vpop.permute.xlu0 %975
      %977 = vrot.lane.b32.xlu0 %v970, 120
      %v978 = vpop.permute.xlu0 %977
      %979 = vrot.lane.b32.xlu0 %v972, 120
      %v980 = vpop.permute.xlu0 %979
      %981 = vrot.lane.b32.xlu0 %v974, 120
      %v982 = vpop.permute.xlu0 %981
      %v983 = vsel %vm465, %v976, %v978
      %v984 = vsel %vm465, %v980, %v982
      %v987 = vadd.f32 %v942, %v983
      %v988 = vadd.f32 %v943, %v984
      %v989 = vld [vmem:[%s1 + $0x10] sm:$0x1]
      %v990 = vlaneseq
      %v991 = vshrl.u32 %v990, 7
      %v992 = vsub.s32 0, %v991
      %v993 = vrot.slane %v989, %v992
      %995 = vrot.lane.b32.xlu0 %v993, 16
      %v996 = vpop.permute.xlu0 %995
      %v998 = vmul.f32 %v425, %v996
      %v999 = vmul.f32 %v426, %v996
      %v1000 = vmul.f32 %v427, %v996
      %v1001 = vmul.f32 %v428, %v996
      %v1002 = vmul.f32 %v429, %v996
      %v1003 = vmul.f32 %v430, %v996
      %v1010 = vrot.slane %v998, 2
      %v1011 = vrot.slane %v1000, 2
      %v1012 = vsel %vm934, %v1010, %v1011
      %v1013 = vrot.slane %v999, 2
      %v1014 = vrot.slane %v1001, 2
      %v1015 = vsel %vm934, %v1013, %v1014
      %v1016 = vrot.slane %v1002, 2
      %v1017 = vsel %vm934, %v1011, %v1016
      %v1018 = vrot.slane %v1003, 2
      %v1019 = vsel %vm934, %v1014, %v1018
      %1020 = vrot.lane.b32.xlu0 %v1012, 112
      %v1021 = vpop.permute.xlu0 %1020
      %1022 = vrot.lane.b32.xlu0 %v1015, 112
      %v1023 = vpop.permute.xlu0 %1022
      %1024 = vrot.lane.b32.xlu0 %v1017, 112
      %v1025 = vpop.permute.xlu0 %1024
      %1026 = vrot.lane.b32.xlu0 %v1019, 112
      %v1027 = vpop.permute.xlu0 %1026
      %v1028 = vsel %vm497, %v1021, %v1023
      %v1029 = vsel %vm497, %v1025, %v1027
      %v1032 = vadd.f32 %v987, %v1028
      %v1033 = vadd.f32 %v988, %v1029
      %v1034 = vld [vmem:[%s1 + $0x11] sm:$0x1]
      %v1035 = vlaneseq
      %v1036 = vshrl.u32 %v1035, 7
      %v1037 = vsub.s32 0, %v1036
      %v1038 = vrot.slane %v1034, %v1037
      %1040 = vrot.lane.b32.xlu0 %v1038, 24
      %v1041 = vpop.permute.xlu0 %1040
      %v1043 = vmul.f32 %v425, %v1041
      %v1044 = vmul.f32 %v426, %v1041
      %v1045 = vmul.f32 %v427, %v1041
      %v1046 = vmul.f32 %v428, %v1041
      %v1047 = vmul.f32 %v429, %v1041
      %v1048 = vmul.f32 %v430, %v1041
      %v1055 = vrot.slane %v1043, 2
      %v1056 = vrot.slane %v1045, 2
      %v1057 = vsel %vm934, %v1055, %v1056
      %v1058 = vrot.slane %v1044, 2
      %v1059 = vrot.slane %v1046, 2
      %v1060 = vsel %vm934, %v1058, %v1059
      %v1061 = vrot.slane %v1047, 2
      %v1062 = vsel %vm934, %v1056, %v1061
      %v1063 = vrot.slane %v1048, 2
      %v1064 = vsel %vm934, %v1059, %v1063
      %1065 = vrot.lane.b32.xlu0 %v1057, 104
      %v1066 = vpop.permute.xlu0 %1065
      %1067 = vrot.lane.b32.xlu0 %v1060, 104
      %v1068 = vpop.permute.xlu0 %1067
      %1069 = vrot.lane.b32.xlu0 %v1062, 104
      %v1070 = vpop.permute.xlu0 %1069
      %1071 = vrot.lane.b32.xlu0 %v1064, 104
      %v1072 = vpop.permute.xlu0 %1071
      %v1073 = vsel %vm529, %v1066, %v1068
      %v1074 = vsel %vm529, %v1070, %v1072
      %v1077 = vadd.f32 %v1032, %v1073
      %v1078 = vadd.f32 %v1033, %v1074
      %v1079 = vld [vmem:[%s1 + $0x12] sm:$0x1]
      %v1080 = vlaneseq
      %v1081 = vshrl.u32 %v1080, 7
      %v1082 = vsub.s32 0, %v1081
      %v1083 = vrot.slane %v1079, %v1082
      %1085 = vrot.lane.b32.xlu0 %v1083, 32
      %v1086 = vpop.permute.xlu0 %1085
      %v1088 = vmul.f32 %v425, %v1086
      %v1089 = vmul.f32 %v426, %v1086
      %v1090 = vmul.f32 %v427, %v1086
      %v1091 = vmul.f32 %v428, %v1086
      %v1092 = vmul.f32 %v429, %v1086
      %v1093 = vmul.f32 %v430, %v1086
      %v1100 = vrot.slane %v1088, 2
      %v1101 = vrot.slane %v1090, 2
      %v1102 = vsel %vm934, %v1100, %v1101
      %v1103 = vrot.slane %v1089, 2
      %v1104 = vrot.slane %v1091, 2
      %v1105 = vsel %vm934, %v1103, %v1104
      %v1106 = vrot.slane %v1092, 2
      %v1107 = vsel %vm934, %v1101, %v1106
      %v1108 = vrot.slane %v1093, 2
      %v1109 = vsel %vm934, %v1104, %v1108
      %1110 = vrot.lane.b32.xlu0 %v1102, 96
      %v1111 = vpop.permute.xlu0 %1110
      %1112 = vrot.lane.b32.xlu0 %v1105, 96
      %v1113 = vpop.permute.xlu0 %1112
      %1114 = vrot.lane.b32.xlu0 %v1107, 96
      %v1115 = vpop.permute.xlu0 %1114
      %1116 = vrot.lane.b32.xlu0 %v1109, 96
      %v1117 = vpop.permute.xlu0 %1116
      %v1118 = vsel %vm561, %v1111, %v1113
      %v1119 = vsel %vm561, %v1115, %v1117
      %v1122 = vadd.f32 %v1077, %v1118
      %v1123 = vadd.f32 %v1078, %v1119
      %v1124 = vld [vmem:[%s1 + $0x13] sm:$0x1]
      %v1125 = vlaneseq
      %v1126 = vshrl.u32 %v1125, 7
      %v1127 = vsub.s32 0, %v1126
      %v1128 = vrot.slane %v1124, %v1127
      %1130 = vrot.lane.b32.xlu0 %v1128, 40
      %v1131 = vpop.permute.xlu0 %1130
      %v1133 = vmul.f32 %v425, %v1131
      %v1134 = vmul.f32 %v426, %v1131
      %v1135 = vmul.f32 %v427, %v1131
      %v1136 = vmul.f32 %v428, %v1131
      %v1137 = vmul.f32 %v429, %v1131
      %v1138 = vmul.f32 %v430, %v1131
      %v1145 = vrot.slane %v1133, 2
      %v1146 = vrot.slane %v1135, 2
      %v1147 = vsel %vm934, %v1145, %v1146
      %v1148 = vrot.slane %v1134, 2
      %v1149 = vrot.slane %v1136, 2
      %v1150 = vsel %vm934, %v1148, %v1149
      %v1151 = vrot.slane %v1137, 2
      %v1152 = vsel %vm934, %v1146, %v1151
      %v1153 = vrot.slane %v1138, 2
      %v1154 = vsel %vm934, %v1149, %v1153
      %1155 = vrot.lane.b32.xlu0 %v1147, 88
      %v1156 = vpop.permute.xlu0 %1155
      %1157 = vrot.lane.b32.xlu0 %v1150, 88
      %v1158 = vpop.permute.xlu0 %1157
      %1159 = vrot.lane.b32.xlu0 %v1152, 88
      %v1160 = vpop.permute.xlu0 %1159
      %1161 = vrot.lane.b32.xlu0 %v1154, 88
      %v1162 = vpop.permute.xlu0 %1161
      %v1163 = vsel %vm593, %v1156, %v1158
      %v1164 = vsel %vm593, %v1160, %v1162
      %v1167 = vadd.f32 %v1122, %v1163
      %v1168 = vadd.f32 %v1123, %v1164
      %v1169 = vld [vmem:[%s1 + $0x14] sm:$0x1]
      %v1170 = vlaneseq
      %v1171 = vshrl.u32 %v1170, 7
      %v1172 = vsub.s32 0, %v1171
      %v1173 = vrot.slane %v1169, %v1172
      %1175 = vrot.lane.b32.xlu0 %v1173, 48
      %v1176 = vpop.permute.xlu0 %1175
      %v1178 = vmul.f32 %v425, %v1176
      %v1179 = vmul.f32 %v426, %v1176
      %v1180 = vmul.f32 %v427, %v1176
      %v1181 = vmul.f32 %v428, %v1176
      %v1182 = vmul.f32 %v429, %v1176
      %v1183 = vmul.f32 %v430, %v1176
      %v1190 = vrot.slane %v1178, 2
      %v1191 = vrot.slane %v1180, 2
      %v1192 = vsel %vm934, %v1190, %v1191
      %v1193 = vrot.slane %v1179, 2
      %v1194 = vrot.slane %v1181, 2
      %v1195 = vsel %vm934, %v1193, %v1194
      %v1196 = vrot.slane %v1182, 2
      %v1197 = vsel %vm934, %v1191, %v1196
      %v1198 = vrot.slane %v1183, 2
      %v1199 = vsel %vm934, %v1194, %v1198
      %1200 = vrot.lane.b32.xlu0 %v1192, 80
      %v1201 = vpop.permute.xlu0 %1200
      %1202 = vrot.lane.b32.xlu0 %v1195, 80
      %v1203 = vpop.permute.xlu0 %1202
      %1204 = vrot.lane.b32.xlu0 %v1197, 80
      %v1205 = vpop.permute.xlu0 %1204
      %1206 = vrot.lane.b32.xlu0 %v1199, 80
      %v1207 = vpop.permute.xlu0 %1206
      %v1208 = vsel %vm625, %v1201, %v1203
      %v1209 = vsel %vm625, %v1205, %v1207
      %v1212 = vadd.f32 %v1167, %v1208
      %v1213 = vadd.f32 %v1168, %v1209
      %v1214 = vld [vmem:[%s1 + $0x15] sm:$0x1]
      %v1215 = vlaneseq
      %v1216 = vshrl.u32 %v1215, 7
      %v1217 = vsub.s32 0, %v1216
      %v1218 = vrot.slane %v1214, %v1217
      %v1219 = vmul.f32 %v425, %v1218
      %v1220 = vmul.f32 %v427, %v1218
      %v1221 = vmul.f32 %v429, %v1218
      %vm1225 = vcmask 1044480
      %v1226 = vrot.slane %v1219, 3
      %v1227 = vrot.slane %v1220, 3
      %v1228 = vsel %vm1225, %v1226, %v1227
      %v1229 = vrot.slane %v1221, 3
      %v1230 = vsel %vm1225, %v1227, %v1229
      %v1233 = vadd.f32 %v1212, %v1228
      %v1234 = vadd.f32 %v1213, %v1230
      %v1235 = vld [vmem:[%s1 + $0x16] sm:$0x1]
      %v1236 = vlaneseq
      %v1237 = vshrl.u32 %v1236, 7
      %v1238 = vsub.s32 0, %v1237
      %v1239 = vrot.slane %v1235, %v1238
      %1241 = vrot.lane.b32.xlu0 %v1239, 8
      %v1242 = vpop.permute.xlu0 %1241
      %v1244 = vmul.f32 %v425, %v1242
      %v1245 = vmul.f32 %v426, %v1242
      %v1246 = vmul.f32 %v427, %v1242
      %v1247 = vmul.f32 %v428, %v1242
      %v1248 = vmul.f32 %v429, %v1242
      %v1249 = vmul.f32 %v430, %v1242
      %v1256 = vrot.slane %v1244, 3
      %v1257 = vrot.slane %v1246, 3
      %v1258 = vsel %vm1225, %v1256, %v1257
      %v1259 = vrot.slane %v1245, 3
      %v1260 = vrot.slane %v1247, 3
      %v1261 = vsel %vm1225, %v1259, %v1260
      %v1262 = vrot.slane %v1248, 3
      %v1263 = vsel %vm1225, %v1257, %v1262
      %v1264 = vrot.slane %v1249, 3
      %v1265 = vsel %vm1225, %v1260, %v1264
      %1266 = vrot.lane.b32.xlu0 %v1258, 120
      %v1267 = vpop.permute.xlu0 %1266
      %1268 = vrot.lane.b32.xlu0 %v1261, 120
      %v1269 = vpop.permute.xlu0 %1268
      %1270 = vrot.lane.b32.xlu0 %v1263, 120
      %v1271 = vpop.permute.xlu0 %1270
      %1272 = vrot.lane.b32.xlu0 %v1265, 120
      %v1273 = vpop.permute.xlu0 %1272
      %v1274 = vsel %vm465, %v1267, %v1269
      %v1275 = vsel %vm465, %v1271, %v1273
      %v1278 = vadd.f32 %v1233, %v1274
      %v1279 = vadd.f32 %v1234, %v1275
      %v1280 = vld [vmem:[%s1 + $0x17] sm:$0x1]
      %v1281 = vlaneseq
      %v1282 = vshrl.u32 %v1281, 7
      %v1283 = vsub.s32 0, %v1282
      %v1284 = vrot.slane %v1280, %v1283
      %1286 = vrot.lane.b32.xlu0 %v1284, 16
      %v1287 = vpop.permute.xlu0 %1286
      %v1289 = vmul.f32 %v425, %v1287
      %v1290 = vmul.f32 %v426, %v1287
      %v1291 = vmul.f32 %v427, %v1287
      %v1292 = vmul.f32 %v428, %v1287
      %v1293 = vmul.f32 %v429, %v1287
      %v1294 = vmul.f32 %v430, %v1287
      %v1301 = vrot.slane %v1289, 3
      %v1302 = vrot.slane %v1291, 3
      %v1303 = vsel %vm1225, %v1301, %v1302
      %v1304 = vrot.slane %v1290, 3
      %v1305 = vrot.slane %v1292, 3
      %v1306 = vsel %vm1225, %v1304, %v1305
      %v1307 = vrot.slane %v1293, 3
      %v1308 = vsel %vm1225, %v1302, %v1307
      %v1309 = vrot.slane %v1294, 3
      %v1310 = vsel %vm1225, %v1305, %v1309
      %1311 = vrot.lane.b32.xlu0 %v1303, 112
      %v1312 = vpop.permute.xlu0 %1311
      %1313 = vrot.lane.b32.xlu0 %v1306, 112
      %v1314 = vpop.permute.xlu0 %1313
      %1315 = vrot.lane.b32.xlu0 %v1308, 112
      %v1316 = vpop.permute.xlu0 %1315
      %1317 = vrot.lane.b32.xlu0 %v1310, 112
      %v1318 = vpop.permute.xlu0 %1317
      %v1319 = vsel %vm497, %v1312, %v1314
      %v1320 = vsel %vm497, %v1316, %v1318
      %v1323 = vadd.f32 %v1278, %v1319
      %v1324 = vadd.f32 %v1279, %v1320
      %v1325 = vld [vmem:[%s1 + $0x18] sm:$0x1]
      %v1326 = vlaneseq
      %v1327 = vshrl.u32 %v1326, 7
      %v1328 = vsub.s32 0, %v1327
      %v1329 = vrot.slane %v1325, %v1328
      %1331 = vrot.lane.b32.xlu0 %v1329, 24
      %v1332 = vpop.permute.xlu0 %1331
      %v1334 = vmul.f32 %v425, %v1332
      %v1335 = vmul.f32 %v426, %v1332
      %v1336 = vmul.f32 %v427, %v1332
      %v1337 = vmul.f32 %v428, %v1332
      %v1338 = vmul.f32 %v429, %v1332
      %v1339 = vmul.f32 %v430, %v1332
      %v1346 = vrot.slane %v1334, 3
      %v1347 = vrot.slane %v1336, 3
      %v1348 = vsel %vm1225, %v1346, %v1347
      %v1349 = vrot.slane %v1335, 3
      %v1350 = vrot.slane %v1337, 3
      %v1351 = vsel %vm1225, %v1349, %v1350
      %v1352 = vrot.slane %v1338, 3
      %v1353 = vsel %vm1225, %v1347, %v1352
      %v1354 = vrot.slane %v1339, 3
      %v1355 = vsel %vm1225, %v1350, %v1354
      %1356 = vrot.lane.b32.xlu0 %v1348, 104
      %v1357 = vpop.permute.xlu0 %1356
      %1358 = vrot.lane.b32.xlu0 %v1351, 104
      %v1359 = vpop.permute.xlu0 %1358
      %1360 = vrot.lane.b32.xlu0 %v1353, 104
      %v1361 = vpop.permute.xlu0 %1360
      %1362 = vrot.lane.b32.xlu0 %v1355, 104
      %v1363 = vpop.permute.xlu0 %1362
      %v1364 = vsel %vm529, %v1357, %v1359
      %v1365 = vsel %vm529, %v1361, %v1363
      %v1368 = vadd.f32 %v1323, %v1364
      %v1369 = vadd.f32 %v1324, %v1365
      %v1370 = vld [vmem:[%s1 + $0x19] sm:$0x1]
      %v1371 = vlaneseq
      %v1372 = vshrl.u32 %v1371, 7
      %v1373 = vsub.s32 0, %v1372
      %v1374 = vrot.slane %v1370, %v1373
      %1376 = vrot.lane.b32.xlu0 %v1374, 32
      %v1377 = vpop.permute.xlu0 %1376
      %v1379 = vmul.f32 %v425, %v1377
      %v1380 = vmul.f32 %v426, %v1377
      %v1381 = vmul.f32 %v427, %v1377
      %v1382 = vmul.f32 %v428, %v1377
      %v1383 = vmul.f32 %v429, %v1377
      %v1384 = vmul.f32 %v430, %v1377
      %v1391 = vrot.slane %v1379, 3
      %v1392 = vrot.slane %v1381, 3
      %v1393 = vsel %vm1225, %v1391, %v1392
      %v1394 = vrot.slane %v1380, 3
      %v1395 = vrot.slane %v1382, 3
      %v1396 = vsel %vm1225, %v1394, %v1395
      %v1397 = vrot.slane %v1383, 3
      %v1398 = vsel %vm1225, %v1392, %v1397
      %v1399 = vrot.slane %v1384, 3
      %v1400 = vsel %vm1225, %v1395, %v1399
      %1401 = vrot.lane.b32.xlu0 %v1393, 96
      %v1402 = vpop.permute.xlu0 %1401
      %1403 = vrot.lane.b32.xlu0 %v1396, 96
      %v1404 = vpop.permute.xlu0 %1403
      %1405 = vrot.lane.b32.xlu0 %v1398, 96
      %v1406 = vpop.permute.xlu0 %1405
      %1407 = vrot.lane.b32.xlu0 %v1400, 96
      %v1408 = vpop.permute.xlu0 %1407
      %v1409 = vsel %vm561, %v1402, %v1404
      %v1410 = vsel %vm561, %v1406, %v1408
      %v1413 = vadd.f32 %v1368, %v1409
      %v1414 = vadd.f32 %v1369, %v1410
      %v1415 = vld [vmem:[%s1 + $0x1a] sm:$0x1]
      %v1416 = vlaneseq
      %v1417 = vshrl.u32 %v1416, 7
      %v1418 = vsub.s32 0, %v1417
      %v1419 = vrot.slane %v1415, %v1418
      %1421 = vrot.lane.b32.xlu0 %v1419, 40
      %v1422 = vpop.permute.xlu0 %1421
      %v1424 = vmul.f32 %v425, %v1422
      %v1425 = vmul.f32 %v426, %v1422
      %v1426 = vmul.f32 %v427, %v1422
      %v1427 = vmul.f32 %v428, %v1422
      %v1428 = vmul.f32 %v429, %v1422
      %v1429 = vmul.f32 %v430, %v1422
      %v1436 = vrot.slane %v1424, 3
      %v1437 = vrot.slane %v1426, 3
      %v1438 = vsel %vm1225, %v1436, %v1437
      %v1439 = vrot.slane %v1425, 3
      %v1440 = vrot.slane %v1427, 3
      %v1441 = vsel %vm1225, %v1439, %v1440
      %v1442 = vrot.slane %v1428, 3
      %v1443 = vsel %vm1225, %v1437, %v1442
      %v1444 = vrot.slane %v1429, 3
      %v1445 = vsel %vm1225, %v1440, %v1444
      %1446 = vrot.lane.b32.xlu0 %v1438, 88
      %v1447 = vpop.permute.xlu0 %1446
      %1448 = vrot.lane.b32.xlu0 %v1441, 88
      %v1449 = vpop.permute.xlu0 %1448
      %1450 = vrot.lane.b32.xlu0 %v1443, 88
      %v1451 = vpop.permute.xlu0 %1450
      %1452 = vrot.lane.b32.xlu0 %v1445, 88
      %v1453 = vpop.permute.xlu0 %1452
      %v1454 = vsel %vm593, %v1447, %v1449
      %v1455 = vsel %vm593, %v1451, %v1453
      %v1458 = vadd.f32 %v1413, %v1454
      %v1459 = vadd.f32 %v1414, %v1455
      %v1460 = vld [vmem:[%s1 + $0x1b] sm:$0x1]
      %v1461 = vlaneseq
      %v1462 = vshrl.u32 %v1461, 7
      %v1463 = vsub.s32 0, %v1462
      %v1464 = vrot.slane %v1460, %v1463
      %1466 = vrot.lane.b32.xlu0 %v1464, 48
      %v1467 = vpop.permute.xlu0 %1466
      %v1469 = vmul.f32 %v425, %v1467
      %v1470 = vmul.f32 %v426, %v1467
      %v1471 = vmul.f32 %v427, %v1467
      %v1472 = vmul.f32 %v428, %v1467
      %v1473 = vmul.f32 %v429, %v1467
      %v1474 = vmul.f32 %v430, %v1467
      %v1481 = vrot.slane %v1469, 3
      %v1482 = vrot.slane %v1471, 3
      %v1483 = vsel %vm1225, %v1481, %v1482
      %v1484 = vrot.slane %v1470, 3
      %v1485 = vrot.slane %v1472, 3
      %v1486 = vsel %vm1225, %v1484, %v1485
      %v1487 = vrot.slane %v1473, 3
      %v1488 = vsel %vm1225, %v1482, %v1487
      %v1489 = vrot.slane %v1474, 3
      %v1490 = vsel %vm1225, %v1485, %v1489
      %1491 = vrot.lane.b32.xlu0 %v1483, 80
      %v1492 = vpop.permute.xlu0 %1491
      %1493 = vrot.lane.b32.xlu0 %v1486, 80
      %v1494 = vpop.permute.xlu0 %1493
      %1495 = vrot.lane.b32.xlu0 %v1488, 80
      %v1496 = vpop.permute.xlu0 %1495
      %1497 = vrot.lane.b32.xlu0 %v1490, 80
      %v1498 = vpop.permute.xlu0 %1497
      %v1499 = vsel %vm625, %v1492, %v1494
      %v1500 = vsel %vm625, %v1496, %v1498
      %v1503 = vadd.f32 %v1458, %v1499
      %v1504 = vadd.f32 %v1459, %v1500
      %v1505 = vld [vmem:[%s1 + $0x1c] sm:$0x1]
      %v1506 = vlaneseq
      %v1507 = vshrl.u32 %v1506, 7
      %v1508 = vsub.s32 0, %v1507
      %v1509 = vrot.slane %v1505, %v1508
      %v1510 = vmul.f32 %v425, %v1509
      %v1511 = vmul.f32 %v427, %v1509
      %v1512 = vmul.f32 %v429, %v1509
      %vm1516 = vcmask 1043456
      %v1517 = vrot.slane %v1510, 4
      %v1518 = vrot.slane %v1511, 4
      %v1519 = vsel %vm1516, %v1517, %v1518
      %v1520 = vrot.slane %v1512, 4
      %v1521 = vsel %vm1516, %v1518, %v1520
      %v1524 = vadd.f32 %v1503, %v1519
      %v1525 = vadd.f32 %v1504, %v1521
      %v1526 = vld [vmem:[%s1 + $0x1d] sm:$0x1]
      %v1527 = vlaneseq
      %v1528 = vshrl.u32 %v1527, 7
      %v1529 = vsub.s32 0, %v1528
      %v1530 = vrot.slane %v1526, %v1529
      %1532 = vrot.lane.b32.xlu0 %v1530, 8
      %v1533 = vpop.permute.xlu0 %1532
      %v1535 = vmul.f32 %v425, %v1533
      %v1536 = vmul.f32 %v426, %v1533
      %v1537 = vmul.f32 %v427, %v1533
      %v1538 = vmul.f32 %v428, %v1533
      %v1539 = vmul.f32 %v429, %v1533
      %v1540 = vmul.f32 %v430, %v1533
      %v1547 = vrot.slane %v1535, 4
      %v1548 = vrot.slane %v1537, 4
      %v1549 = vsel %vm1516, %v1547, %v1548
      %v1550 = vrot.slane %v1536, 4
      %v1551 = vrot.slane %v1538, 4
      %v1552 = vsel %vm1516, %v1550, %v1551
      %v1553 = vrot.slane %v1539, 4
      %v1554 = vsel %vm1516, %v1548, %v1553
      %v1555 = vrot.slane %v1540, 4
      %v1556 = vsel %vm1516, %v1551, %v1555
      %1557 = vrot.lane.b32.xlu0 %v1549, 120
      %v1558 = vpop.permute.xlu0 %1557
      %1559 = vrot.lane.b32.xlu0 %v1552, 120
      %v1560 = vpop.permute.xlu0 %1559
      %1561 = vrot.lane.b32.xlu0 %v1554, 120
      %v1562 = vpop.permute.xlu0 %1561
      %1563 = vrot.lane.b32.xlu0 %v1556, 120
      %v1564 = vpop.permute.xlu0 %1563
      %v1565 = vsel %vm465, %v1558, %v1560
      %v1566 = vsel %vm465, %v1562, %v1564
      %v1569 = vadd.f32 %v1524, %v1565
      %v1570 = vadd.f32 %v1525, %v1566
      %v1571 = vld [vmem:[%s1 + $0x1e] sm:$0x1]
      %v1572 = vlaneseq
      %v1573 = vshrl.u32 %v1572, 7
      %v1574 = vsub.s32 0, %v1573
      %v1575 = vrot.slane %v1571, %v1574
      %1577 = vrot.lane.b32.xlu0 %v1575, 16
      %v1578 = vpop.permute.xlu0 %1577
      %v1580 = vmul.f32 %v425, %v1578
      %v1581 = vmul.f32 %v426, %v1578
      %v1582 = vmul.f32 %v427, %v1578
      %v1583 = vmul.f32 %v428, %v1578
      %v1584 = vmul.f32 %v429, %v1578
      %v1585 = vmul.f32 %v430, %v1578
      %v1592 = vrot.slane %v1580, 4
      %v1593 = vrot.slane %v1582, 4
      %v1594 = vsel %vm1516, %v1592, %v1593
      %v1595 = vrot.slane %v1581, 4
      %v1596 = vrot.slane %v1583, 4
      %v1597 = vsel %vm1516, %v1595, %v1596
      %v1598 = vrot.slane %v1584, 4
      %v1599 = vsel %vm1516, %v1593, %v1598
      %v1600 = vrot.slane %v1585, 4
      %v1601 = vsel %vm1516, %v1596, %v1600
      %1602 = vrot.lane.b32.xlu0 %v1594, 112
      %v1603 = vpop.permute.xlu0 %1602
      %1604 = vrot.lane.b32.xlu0 %v1597, 112
      %v1605 = vpop.permute.xlu0 %1604
      %1606 = vrot.lane.b32.xlu0 %v1599, 112
      %v1607 = vpop.permute.xlu0 %1606
      %1608 = vrot.lane.b32.xlu0 %v1601, 112
      %v1609 = vpop.permute.xlu0 %1608
      %v1610 = vsel %vm497, %v1603, %v1605
      %v1611 = vsel %vm497, %v1607, %v1609
      %v1614 = vadd.f32 %v1569, %v1610
      %v1615 = vadd.f32 %v1570, %v1611
      %v1616 = vld [vmem:[%s1 + $0x1f] sm:$0x1]
      %v1617 = vlaneseq
      %v1618 = vshrl.u32 %v1617, 7
      %v1619 = vsub.s32 0, %v1618
      %v1620 = vrot.slane %v1616, %v1619
      %1622 = vrot.lane.b32.xlu0 %v1620, 24
      %v1623 = vpop.permute.xlu0 %1622
      %v1625 = vmul.f32 %v425, %v1623
      %v1626 = vmul.f32 %v426, %v1623
      %v1627 = vmul.f32 %v427, %v1623
      %v1628 = vmul.f32 %v428, %v1623
      %v1629 = vmul.f32 %v429, %v1623
      %v1630 = vmul.f32 %v430, %v1623
      %v1637 = vrot.slane %v1625, 4
      %v1638 = vrot.slane %v1627, 4
      %v1639 = vsel %vm1516, %v1637, %v1638
      %v1640 = vrot.slane %v1626, 4
      %v1641 = vrot.slane %v1628, 4
      %v1642 = vsel %vm1516, %v1640, %v1641
      %v1643 = vrot.slane %v1629, 4
      %v1644 = vsel %vm1516, %v1638, %v1643
      %v1645 = vrot.slane %v1630, 4
      %v1646 = vsel %vm1516, %v1641, %v1645
      %1647 = vrot.lane.b32.xlu0 %v1639, 104
      %v1648 = vpop.permute.xlu0 %1647
      %1649 = vrot.lane.b32.xlu0 %v1642, 104
      %v1650 = vpop.permute.xlu0 %1649
      %1651 = vrot.lane.b32.xlu0 %v1644, 104
      %v1652 = vpop.permute.xlu0 %1651
      %1653 = vrot.lane.b32.xlu0 %v1646, 104
      %v1654 = vpop.permute.xlu0 %1653
      %v1655 = vsel %vm529, %v1648, %v1650
      %v1656 = vsel %vm529, %v1652, %v1654
      %v1659 = vadd.f32 %v1614, %v1655
      %v1660 = vadd.f32 %v1615, %v1656
      %v1661 = vld [vmem:[%s1 + $0x20] sm:$0x1]
      %v1662 = vlaneseq
      %v1663 = vshrl.u32 %v1662, 7
      %v1664 = vsub.s32 0, %v1663
      %v1665 = vrot.slane %v1661, %v1664
      %1667 = vrot.lane.b32.xlu0 %v1665, 32
      %v1668 = vpop.permute.xlu0 %1667
      %v1670 = vmul.f32 %v425, %v1668
      %v1671 = vmul.f32 %v426, %v1668
      %v1672 = vmul.f32 %v427, %v1668
      %v1673 = vmul.f32 %v428, %v1668
      %v1674 = vmul.f32 %v429, %v1668
      %v1675 = vmul.f32 %v430, %v1668
      %v1682 = vrot.slane %v1670, 4
      %v1683 = vrot.slane %v1672, 4
      %v1684 = vsel %vm1516, %v1682, %v1683
      %v1685 = vrot.slane %v1671, 4
      %v1686 = vrot.slane %v1673, 4
      %v1687 = vsel %vm1516, %v1685, %v1686
      %v1688 = vrot.slane %v1674, 4
      %v1689 = vsel %vm1516, %v1683, %v1688
      %v1690 = vrot.slane %v1675, 4
      %v1691 = vsel %vm1516, %v1686, %v1690
      %1692 = vrot.lane.b32.xlu0 %v1684, 96
      %v1693 = vpop.permute.xlu0 %1692
      %1694 = vrot.lane.b32.xlu0 %v1687, 96
      %v1695 = vpop.permute.xlu0 %1694
      %1696 = vrot.lane.b32.xlu0 %v1689, 96
      %v1697 = vpop.permute.xlu0 %1696
      %1698 = vrot.lane.b32.xlu0 %v1691, 96
      %v1699 = vpop.permute.xlu0 %1698
      %v1700 = vsel %vm561, %v1693, %v1695
      %v1701 = vsel %vm561, %v1697, %v1699
      %v1704 = vadd.f32 %v1659, %v1700
      %v1705 = vadd.f32 %v1660, %v1701
      %v1706 = vld [vmem:[%s1 + $0x21] sm:$0x1]
      %v1707 = vlaneseq
      %v1708 = vshrl.u32 %v1707, 7
      %v1709 = vsub.s32 0, %v1708
      %v1710 = vrot.slane %v1706, %v1709
      %1712 = vrot.lane.b32.xlu0 %v1710, 40
      %v1713 = vpop.permute.xlu0 %1712
      %v1715 = vmul.f32 %v425, %v1713
      %v1716 = vmul.f32 %v426, %v1713
      %v1717 = vmul.f32 %v427, %v1713
      %v1718 = vmul.f32 %v428, %v1713
      %v1719 = vmul.f32 %v429, %v1713
      %v1720 = vmul.f32 %v430, %v1713
      %v1727 = vrot.slane %v1715, 4
      %v1728 = vrot.slane %v1717, 4
      %v1729 = vsel %vm1516, %v1727, %v1728
      %v1730 = vrot.slane %v1716, 4
      %v1731 = vrot.slane %v1718, 4
      %v1732 = vsel %vm1516, %v1730, %v1731
      %v1733 = vrot.slane %v1719, 4
      %v1734 = vsel %vm1516, %v1728, %v1733
      %v1735 = vrot.slane %v1720, 4
      %v1736 = vsel %vm1516, %v1731, %v1735
      %1737 = vrot.lane.b32.xlu0 %v1729, 88
      %v1738 = vpop.permute.xlu0 %1737
      %1739 = vrot.lane.b32.xlu0 %v1732, 88
      %v1740 = vpop.permute.xlu0 %1739
      %1741 = vrot.lane.b32.xlu0 %v1734, 88
      %v1742 = vpop.permute.xlu0 %1741
      %1743 = vrot.lane.b32.xlu0 %v1736, 88
      %v1744 = vpop.permute.xlu0 %1743
      %v1745 = vsel %vm593, %v1738, %v1740
      %v1746 = vsel %vm593, %v1742, %v1744
      %v1749 = vadd.f32 %v1704, %v1745
      %v1750 = vadd.f32 %v1705, %v1746
      %v1751 = vld [vmem:[%s1 + $0x22] sm:$0x1]
      %v1752 = vlaneseq
      %v1753 = vshrl.u32 %v1752, 7
      %v1754 = vsub.s32 0, %v1753
      %v1755 = vrot.slane %v1751, %v1754
      %1757 = vrot.lane.b32.xlu0 %v1755, 48
      %v1758 = vpop.permute.xlu0 %1757
      %v1760 = vmul.f32 %v425, %v1758
      %v1761 = vmul.f32 %v426, %v1758
      %v1762 = vmul.f32 %v427, %v1758
      %v1763 = vmul.f32 %v428, %v1758
      %v1764 = vmul.f32 %v429, %v1758
      %v1765 = vmul.f32 %v430, %v1758
      %v1772 = vrot.slane %v1760, 4
      %v1773 = vrot.slane %v1762, 4
      %v1774 = vsel %vm1516, %v1772, %v1773
      %v1775 = vrot.slane %v1761, 4
      %v1776 = vrot.slane %v1763, 4
      %v1777 = vsel %vm1516, %v1775, %v1776
      %v1778 = vrot.slane %v1764, 4
      %v1779 = vsel %vm1516, %v1773, %v1778
      %v1780 = vrot.slane %v1765, 4
      %v1781 = vsel %vm1516, %v1776, %v1780
      %1782 = vrot.lane.b32.xlu0 %v1774, 80
      %v1783 = vpop.permute.xlu0 %1782
      %1784 = vrot.lane.b32.xlu0 %v1777, 80
      %v1785 = vpop.permute.xlu0 %1784
      %1786 = vrot.lane.b32.xlu0 %v1779, 80
      %v1787 = vpop.permute.xlu0 %1786
      %1788 = vrot.lane.b32.xlu0 %v1781, 80
      %v1789 = vpop.permute.xlu0 %1788
      %v1790 = vsel %vm625, %v1783, %v1785
      %v1791 = vsel %vm625, %v1787, %v1789
      %v1794 = vadd.f32 %v1749, %v1790
      %v1795 = vadd.f32 %v1750, %v1791
      %v1796 = vld [vmem:[%s1 + $0x23] sm:$0x1]
      %v1797 = vlaneseq
      %v1798 = vshrl.u32 %v1797, 7
      %v1799 = vsub.s32 0, %v1798
      %v1800 = vrot.slane %v1796, %v1799
      %v1801 = vmul.f32 %v425, %v1800
      %v1802 = vmul.f32 %v427, %v1800
      %v1803 = vmul.f32 %v429, %v1800
      %v1807 = vrot.slane %v1801, 5
      %v1808 = vrot.slane %v1802, 5
      %v1809 = vsel %vm400, %v1807, %v1808
      %v1810 = vrot.slane %v1803, 5
      %v1811 = vsel %vm400, %v1808, %v1810
      %v1814 = vadd.f32 %v1794, %v1809
      %v1815 = vadd.f32 %v1795, %v1811
      %v1816 = vld [vmem:[%s1 + $0x24] sm:$0x1]
      %v1817 = vlaneseq
      %v1818 = vshrl.u32 %v1817, 7
      %v1819 = vsub.s32 0, %v1818
      %v1820 = vrot.slane %v1816, %v1819
      %1822 = vrot.lane.b32.xlu0 %v1820, 8
      %v1823 = vpop.permute.xlu0 %1822
      %v1825 = vmul.f32 %v425, %v1823
      %v1826 = vmul.f32 %v426, %v1823
      %v1827 = vmul.f32 %v427, %v1823
      %v1828 = vmul.f32 %v428, %v1823
      %v1829 = vmul.f32 %v429, %v1823
      %v1830 = vmul.f32 %v430, %v1823
      %v1837 = vrot.slane %v1825, 5
      %v1838 = vrot.slane %v1827, 5
      %v1839 = vsel %vm400, %v1837, %v1838
      %v1840 = vrot.slane %v1826, 5
      %v1841 = vrot.slane %v1828, 5
      %v1842 = vsel %vm400, %v1840, %v1841
      %v1843 = vrot.slane %v1829, 5
      %v1844 = vsel %vm400, %v1838, %v1843
      %v1845 = vrot.slane %v1830, 5
      %v1846 = vsel %vm400, %v1841, %v1845
      %1847 = vrot.lane.b32.xlu0 %v1839, 120
      %v1848 = vpop.permute.xlu0 %1847
      %1849 = vrot.lane.b32.xlu0 %v1842, 120
      %v1850 = vpop.permute.xlu0 %1849
      %1851 = vrot.lane.b32.xlu0 %v1844, 120
      %v1852 = vpop.permute.xlu0 %1851
      %1853 = vrot.lane.b32.xlu0 %v1846, 120
      %v1854 = vpop.permute.xlu0 %1853
      %v1855 = vsel %vm465, %v1848, %v1850
      %v1856 = vsel %vm465, %v1852, %v1854
      %v1859 = vadd.f32 %v1814, %v1855
      %v1860 = vadd.f32 %v1815, %v1856
      %v1861 = vld [vmem:[%s1 + $0x25] sm:$0x1]
      %v1862 = vlaneseq
      %v1863 = vshrl.u32 %v1862, 7
      %v1864 = vsub.s32 0, %v1863
      %v1865 = vrot.slane %v1861, %v1864
      %1867 = vrot.lane.b32.xlu0 %v1865, 16
      %v1868 = vpop.permute.xlu0 %1867
      %v1870 = vmul.f32 %v425, %v1868
      %v1871 = vmul.f32 %v426, %v1868
      %v1872 = vmul.f32 %v427, %v1868
      %v1873 = vmul.f32 %v428, %v1868
      %v1874 = vmul.f32 %v429, %v1868
      %v1875 = vmul.f32 %v430, %v1868
      %v1882 = vrot.slane %v1870, 5
      %v1883 = vrot.slane %v1872, 5
      %v1884 = vsel %vm400, %v1882, %v1883
      %v1885 = vrot.slane %v1871, 5
      %v1886 = vrot.slane %v1873, 5
      %v1887 = vsel %vm400, %v1885, %v1886
      %v1888 = vrot.slane %v1874, 5
      %v1889 = vsel %vm400, %v1883, %v1888
      %v1890 = vrot.slane %v1875, 5
      %v1891 = vsel %vm400, %v1886, %v1890
      %1892 = vrot.lane.b32.xlu0 %v1884, 112
      %v1893 = vpop.permute.xlu0 %1892
      %1894 = vrot.lane.b32.xlu0 %v1887, 112
      %v1895 = vpop.permute.xlu0 %1894
      %1896 = vrot.lane.b32.xlu0 %v1889, 112
      %v1897 = vpop.permute.xlu0 %1896
      %1898 = vrot.lane.b32.xlu0 %v1891, 112
      %v1899 = vpop.permute.xlu0 %1898
      %v1900 = vsel %vm497, %v1893, %v1895
      %v1901 = vsel %vm497, %v1897, %v1899
      %v1904 = vadd.f32 %v1859, %v1900
      %v1905 = vadd.f32 %v1860, %v1901
      %v1906 = vld [vmem:[%s1 + $0x26] sm:$0x1]
      %v1907 = vlaneseq
      %v1908 = vshrl.u32 %v1907, 7
      %v1909 = vsub.s32 0, %v1908
      %v1910 = vrot.slane %v1906, %v1909
      %1912 = vrot.lane.b32.xlu0 %v1910, 24
      %v1913 = vpop.permute.xlu0 %1912
      %v1915 = vmul.f32 %v425, %v1913
      %v1916 = vmul.f32 %v426, %v1913
      %v1917 = vmul.f32 %v427, %v1913
      %v1918 = vmul.f32 %v428, %v1913
      %v1919 = vmul.f32 %v429, %v1913
      %v1920 = vmul.f32 %v430, %v1913
      %v1927 = vrot.slane %v1915, 5
      %v1928 = vrot.slane %v1917, 5
      %v1929 = vsel %vm400, %v1927, %v1928
      %v1930 = vrot.slane %v1916, 5
      %v1931 = vrot.slane %v1918, 5
      %v1932 = vsel %vm400, %v1930, %v1931
      %v1933 = vrot.slane %v1919, 5
      %v1934 = vsel %vm400, %v1928, %v1933
      %v1935 = vrot.slane %v1920, 5
      %v1936 = vsel %vm400, %v1931, %v1935
      %1937 = vrot.lane.b32.xlu0 %v1929, 104
      %v1938 = vpop.permute.xlu0 %1937
      %1939 = vrot.lane.b32.xlu0 %v1932, 104
      %v1940 = vpop.permute.xlu0 %1939
      %1941 = vrot.lane.b32.xlu0 %v1934, 104
      %v1942 = vpop.permute.xlu0 %1941
      %1943 = vrot.lane.b32.xlu0 %v1936, 104
      %v1944 = vpop.permute.xlu0 %1943
      %v1945 = vsel %vm529, %v1938, %v1940
      %v1946 = vsel %vm529, %v1942, %v1944
      %v1949 = vadd.f32 %v1904, %v1945
      %v1950 = vadd.f32 %v1905, %v1946
      %v1951 = vld [vmem:[%s1 + $0x27] sm:$0x1]
      %v1952 = vlaneseq
      %v1953 = vshrl.u32 %v1952, 7
      %v1954 = vsub.s32 0, %v1953
      %v1955 = vrot.slane %v1951, %v1954
      %1957 = vrot.lane.b32.xlu0 %v1955, 32
      %v1958 = vpop.permute.xlu0 %1957
      %v1960 = vmul.f32 %v425, %v1958
      %v1961 = vmul.f32 %v426, %v1958
      %v1962 = vmul.f32 %v427, %v1958
      %v1963 = vmul.f32 %v428, %v1958
      %v1964 = vmul.f32 %v429, %v1958
      %v1965 = vmul.f32 %v430, %v1958
      %v1972 = vrot.slane %v1960, 5
      %v1973 = vrot.slane %v1962, 5
      %v1974 = vsel %vm400, %v1972, %v1973
      %v1975 = vrot.slane %v1961, 5
      %v1976 = vrot.slane %v1963, 5
      %v1977 = vsel %vm400, %v1975, %v1976
      %v1978 = vrot.slane %v1964, 5
      %v1979 = vsel %vm400, %v1973, %v1978
      %v1980 = vrot.slane %v1965, 5
      %v1981 = vsel %vm400, %v1976, %v1980
      %1982 = vrot.lane.b32.xlu0 %v1974, 96
      %v1983 = vpop.permute.xlu0 %1982
      %1984 = vrot.lane.b32.xlu0 %v1977, 96
      %v1985 = vpop.permute.xlu0 %1984
      %1986 = vrot.lane.b32.xlu0 %v1979, 96
      %v1987 = vpop.permute.xlu0 %1986
      %1988 = vrot.lane.b32.xlu0 %v1981, 96
      %v1989 = vpop.permute.xlu0 %1988
      %v1990 = vsel %vm561, %v1983, %v1985
      %v1991 = vsel %vm561, %v1987, %v1989
      %v1994 = vadd.f32 %v1949, %v1990
      %v1995 = vadd.f32 %v1950, %v1991
      %v1996 = vld [vmem:[%s1 + $0x28] sm:$0x1]
      %v1997 = vlaneseq
      %v1998 = vshrl.u32 %v1997, 7
      %v1999 = vsub.s32 0, %v1998
      %v2000 = vrot.slane %v1996, %v1999
      %2002 = vrot.lane.b32.xlu0 %v2000, 40
      %v2003 = vpop.permute.xlu0 %2002
      %v2005 = vmul.f32 %v425, %v2003
      %v2006 = vmul.f32 %v426, %v2003
      %v2007 = vmul.f32 %v427, %v2003
      %v2008 = vmul.f32 %v428, %v2003
      %v2009 = vmul.f32 %v429, %v2003
      %v2010 = vmul.f32 %v430, %v2003
      %v2017 = vrot.slane %v2005, 5
      %v2018 = vrot.slane %v2007, 5
      %v2019 = vsel %vm400, %v2017, %v2018
      %v2020 = vrot.slane %v2006, 5
      %v2021 = vrot.slane %v2008, 5
      %v2022 = vsel %vm400, %v2020, %v2021
      %v2023 = vrot.slane %v2009, 5
      %v2024 = vsel %vm400, %v2018, %v2023
      %v2025 = vrot.slane %v2010, 5
      %v2026 = vsel %vm400, %v2021, %v2025
      %2027 = vrot.lane.b32.xlu0 %v2019, 88
      %v2028 = vpop.permute.xlu0 %2027
      %2029 = vrot.lane.b32.xlu0 %v2022, 88
      %v2030 = vpop.permute.xlu0 %2029
      %2031 = vrot.lane.b32.xlu0 %v2024, 88
      %v2032 = vpop.permute.xlu0 %2031
      %2033 = vrot.lane.b32.xlu0 %v2026, 88
      %v2034 = vpop.permute.xlu0 %2033
      %v2035 = vsel %vm593, %v2028, %v2030
      %v2036 = vsel %vm593, %v2032, %v2034
      %v2039 = vadd.f32 %v1994, %v2035
      %v2040 = vadd.f32 %v1995, %v2036
      %v2041 = vld [vmem:[%s1 + $0x29] sm:$0x1]
      %v2042 = vlaneseq
      %v2043 = vshrl.u32 %v2042, 7
      %v2044 = vsub.s32 0, %v2043
      %v2045 = vrot.slane %v2041, %v2044
      %2047 = vrot.lane.b32.xlu0 %v2045, 48
      %v2048 = vpop.permute.xlu0 %2047
      %v2050 = vmul.f32 %v425, %v2048
      %v2051 = vmul.f32 %v426, %v2048
      %v2052 = vmul.f32 %v427, %v2048
      %v2053 = vmul.f32 %v428, %v2048
      %v2054 = vmul.f32 %v429, %v2048
      %v2055 = vmul.f32 %v430, %v2048
      %v2062 = vrot.slane %v2050, 5
      %v2063 = vrot.slane %v2052, 5
      %v2064 = vsel %vm400, %v2062, %v2063
      %v2065 = vrot.slane %v2051, 5
      %v2066 = vrot.slane %v2053, 5
      %v2067 = vsel %vm400, %v2065, %v2066
      %v2068 = vrot.slane %v2054, 5
      %v2069 = vsel %vm400, %v2063, %v2068
      %v2070 = vrot.slane %v2055, 5
      %v2071 = vsel %vm400, %v2066, %v2070
      %2072 = vrot.lane.b32.xlu0 %v2064, 80
      %v2073 = vpop.permute.xlu0 %2072
      %2074 = vrot.lane.b32.xlu0 %v2067, 80
      %v2075 = vpop.permute.xlu0 %2074
      %2076 = vrot.lane.b32.xlu0 %v2069, 80
      %v2077 = vpop.permute.xlu0 %2076
      %2078 = vrot.lane.b32.xlu0 %v2071, 80
      %v2079 = vpop.permute.xlu0 %2078
      %v2080 = vsel %vm625, %v2073, %v2075
      %v2081 = vsel %vm625, %v2077, %v2079
      %v2084 = vadd.f32 %v2039, %v2080
      %v2085 = vadd.f32 %v2040, %v2081
      %v2086 = vld [vmem:[%s1 + $0x2a] sm:$0x1]
      %v2087 = vlaneseq
      %v2088 = vshrl.u32 %v2087, 7
      %v2089 = vsub.s32 0, %v2088
      %v2090 = vrot.slane %v2086, %v2089
      %v2091 = vmul.f32 %v425, %v2090
      %v2092 = vmul.f32 %v427, %v2090
      %v2093 = vmul.f32 %v429, %v2090
      %vm2097 = vcmask 1041408
      %v2098 = vrot.slane %v2091, 6
      %v2099 = vrot.slane %v2092, 6
      %v2100 = vsel %vm2097, %v2098, %v2099
      %v2101 = vrot.slane %v2093, 6
      %v2102 = vsel %vm2097, %v2099, %v2101
      %v2105 = vadd.f32 %v2084, %v2100
      %v2106 = vadd.f32 %v2085, %v2102
      %v2107 = vld [vmem:[%s1 + $0x2b] sm:$0x1]
      %v2108 = vlaneseq
      %v2109 = vshrl.u32 %v2108, 7
      %v2110 = vsub.s32 0, %v2109
      %v2111 = vrot.slane %v2107, %v2110
      %2113 = vrot.lane.b32.xlu0 %v2111, 8
      %v2114 = vpop.permute.xlu0 %2113
      %v2116 = vmul.f32 %v425, %v2114
      %v2117 = vmul.f32 %v426, %v2114
      %v2118 = vmul.f32 %v427, %v2114
      %v2119 = vmul.f32 %v428, %v2114
      %v2120 = vmul.f32 %v429, %v2114
      %v2121 = vmul.f32 %v430, %v2114
      %v2128 = vrot.slane %v2116, 6
      %v2129 = vrot.slane %v2118, 6
      %v2130 = vsel %vm2097, %v2128, %v2129
      %v2131 = vrot.slane %v2117, 6
      %v2132 = vrot.slane %v2119, 6
      %v2133 = vsel %vm2097, %v2131, %v2132
      %v2134 = vrot.slane %v2120, 6
      %v2135 = vsel %vm2097, %v2129, %v2134
      %v2136 = vrot.slane %v2121, 6
      %v2137 = vsel %vm2097, %v2132, %v2136
      %2138 = vrot.lane.b32.xlu0 %v2130, 120
      %v2139 = vpop.permute.xlu0 %2138
      %2140 = vrot.lane.b32.xlu0 %v2133, 120
      %v2141 = vpop.permute.xlu0 %2140
      %2142 = vrot.lane.b32.xlu0 %v2135, 120
      %v2143 = vpop.permute.xlu0 %2142
      %2144 = vrot.lane.b32.xlu0 %v2137, 120
      %v2145 = vpop.permute.xlu0 %2144
      %v2146 = vsel %vm465, %v2139, %v2141
      %v2147 = vsel %vm465, %v2143, %v2145
      %v2150 = vadd.f32 %v2105, %v2146
      %v2151 = vadd.f32 %v2106, %v2147
      %v2152 = vld [vmem:[%s1 + $0x2c] sm:$0x1]
      %v2153 = vlaneseq
      %v2154 = vshrl.u32 %v2153, 7
      %v2155 = vsub.s32 0, %v2154
      %v2156 = vrot.slane %v2152, %v2155
      %2158 = vrot.lane.b32.xlu0 %v2156, 16
      %v2159 = vpop.permute.xlu0 %2158
      %v2161 = vmul.f32 %v425, %v2159
      %v2162 = vmul.f32 %v426, %v2159
      %v2163 = vmul.f32 %v427, %v2159
      %v2164 = vmul.f32 %v428, %v2159
      %v2165 = vmul.f32 %v429, %v2159
      %v2166 = vmul.f32 %v430, %v2159
      %v2173 = vrot.slane %v2161, 6
      %v2174 = vrot.slane %v2163, 6
      %v2175 = vsel %vm2097, %v2173, %v2174
      %v2176 = vrot.slane %v2162, 6
      %v2177 = vrot.slane %v2164, 6
      %v2178 = vsel %vm2097, %v2176, %v2177
      %v2179 = vrot.slane %v2165, 6
      %v2180 = vsel %vm2097, %v2174, %v2179
      %v2181 = vrot.slane %v2166, 6
      %v2182 = vsel %vm2097, %v2177, %v2181
      %2183 = vrot.lane.b32.xlu0 %v2175, 112
      %v2184 = vpop.permute.xlu0 %2183
      %2185 = vrot.lane.b32.xlu0 %v2178, 112
      %v2186 = vpop.permute.xlu0 %2185
      %2187 = vrot.lane.b32.xlu0 %v2180, 112
      %v2188 = vpop.permute.xlu0 %2187
      %2189 = vrot.lane.b32.xlu0 %v2182, 112
      %v2190 = vpop.permute.xlu0 %2189
      %v2191 = vsel %vm497, %v2184, %v2186
      %v2192 = vsel %vm497, %v2188, %v2190
      %v2195 = vadd.f32 %v2150, %v2191
      %v2196 = vadd.f32 %v2151, %v2192
      %v2197 = vld [vmem:[%s1 + $0x2d] sm:$0x1]
      %v2198 = vlaneseq
      %v2199 = vshrl.u32 %v2198, 7
      %v2200 = vsub.s32 0, %v2199
      %v2201 = vrot.slane %v2197, %v2200
      %2203 = vrot.lane.b32.xlu0 %v2201, 24
      %v2204 = vpop.permute.xlu0 %2203
      %v2206 = vmul.f32 %v425, %v2204
      %v2207 = vmul.f32 %v426, %v2204
      %v2208 = vmul.f32 %v427, %v2204
      %v2209 = vmul.f32 %v428, %v2204
      %v2210 = vmul.f32 %v429, %v2204
      %v2211 = vmul.f32 %v430, %v2204
      %v2218 = vrot.slane %v2206, 6
      %v2219 = vrot.slane %v2208, 6
      %v2220 = vsel %vm2097, %v2218, %v2219
      %v2221 = vrot.slane %v2207, 6
      %v2222 = vrot.slane %v2209, 6
      %v2223 = vsel %vm2097, %v2221, %v2222
      %v2224 = vrot.slane %v2210, 6
      %v2225 = vsel %vm2097, %v2219, %v2224
      %v2226 = vrot.slane %v2211, 6
      %v2227 = vsel %vm2097, %v2222, %v2226
      %2228 = vrot.lane.b32.xlu0 %v2220, 104
      %v2229 = vpop.permute.xlu0 %2228
      %2230 = vrot.lane.b32.xlu0 %v2223, 104
      %v2231 = vpop.permute.xlu0 %2230
      %2232 = vrot.lane.b32.xlu0 %v2225, 104
      %v2233 = vpop.permute.xlu0 %2232
      %2234 = vrot.lane.b32.xlu0 %v2227, 104
      %v2235 = vpop.permute.xlu0 %2234
      %v2236 = vsel %vm529, %v2229, %v2231
      %v2237 = vsel %vm529, %v2233, %v2235
      %v2240 = vadd.f32 %v2195, %v2236
      %v2241 = vadd.f32 %v2196, %v2237
      %v2242 = vld [vmem:[%s1 + $0x2e] sm:$0x1]
      %v2243 = vlaneseq
      %v2244 = vshrl.u32 %v2243, 7
      %v2245 = vsub.s32 0, %v2244
      %v2246 = vrot.slane %v2242, %v2245
      %2248 = vrot.lane.b32.xlu0 %v2246, 32
      %v2249 = vpop.permute.xlu0 %2248
      %v2251 = vmul.f32 %v425, %v2249
      %v2252 = vmul.f32 %v426, %v2249
      %v2253 = vmul.f32 %v427, %v2249
      %v2254 = vmul.f32 %v428, %v2249
      %v2255 = vmul.f32 %v429, %v2249
      %v2256 = vmul.f32 %v430, %v2249
      %v2263 = vrot.slane %v2251, 6
      %v2264 = vrot.slane %v2253, 6
      %v2265 = vsel %vm2097, %v2263, %v2264
      %v2266 = vrot.slane %v2252, 6
      %v2267 = vrot.slane %v2254, 6
      %v2268 = vsel %vm2097, %v2266, %v2267
      %v2269 = vrot.slane %v2255, 6
      %v2270 = vsel %vm2097, %v2264, %v2269
      %v2271 = vrot.slane %v2256, 6
      %v2272 = vsel %vm2097, %v2267, %v2271
      %2273 = vrot.lane.b32.xlu0 %v2265, 96
      %v2274 = vpop.permute.xlu0 %2273
      %2275 = vrot.lane.b32.xlu0 %v2268, 96
      %v2276 = vpop.permute.xlu0 %2275
      %2277 = vrot.lane.b32.xlu0 %v2270, 96
      %v2278 = vpop.permute.xlu0 %2277
      %2279 = vrot.lane.b32.xlu0 %v2272, 96
      %v2280 = vpop.permute.xlu0 %2279
      %v2281 = vsel %vm561, %v2274, %v2276
      %v2282 = vsel %vm561, %v2278, %v2280
      %v2285 = vadd.f32 %v2240, %v2281
      %v2286 = vadd.f32 %v2241, %v2282
      %v2287 = vld [vmem:[%s1 + $0x2f] sm:$0x1]
      %v2288 = vlaneseq
      %v2289 = vshrl.u32 %v2288, 7
      %v2290 = vsub.s32 0, %v2289
      %v2291 = vrot.slane %v2287, %v2290
      %2293 = vrot.lane.b32.xlu0 %v2291, 40
      %v2294 = vpop.permute.xlu0 %2293
      %v2296 = vmul.f32 %v425, %v2294
      %v2297 = vmul.f32 %v426, %v2294
      %v2298 = vmul.f32 %v427, %v2294
      %v2299 = vmul.f32 %v428, %v2294
      %v2300 = vmul.f32 %v429, %v2294
      %v2301 = vmul.f32 %v430, %v2294
      %v2308 = vrot.slane %v2296, 6
      %v2309 = vrot.slane %v2298, 6
      %v2310 = vsel %vm2097, %v2308, %v2309
      %v2311 = vrot.slane %v2297, 6
      %v2312 = vrot.slane %v2299, 6
      %v2313 = vsel %vm2097, %v2311, %v2312
      %v2314 = vrot.slane %v2300, 6
      %v2315 = vsel %vm2097, %v2309, %v2314
      %v2316 = vrot.slane %v2301, 6
      %v2317 = vsel %vm2097, %v2312, %v2316
      %2318 = vrot.lane.b32.xlu0 %v2310, 88
      %v2319 = vpop.permute.xlu0 %2318
      %2320 = vrot.lane.b32.xlu0 %v2313, 88
      %v2321 = vpop.permute.xlu0 %2320
      %2322 = vrot.lane.b32.xlu0 %v2315, 88
      %v2323 = vpop.permute.xlu0 %2322
      %2324 = vrot.lane.b32.xlu0 %v2317, 88
      %v2325 = vpop.permute.xlu0 %2324
      %v2326 = vsel %vm593, %v2319, %v2321
      %v2327 = vsel %vm593, %v2323, %v2325
      %v2330 = vadd.f32 %v2285, %v2326
      %v2331 = vadd.f32 %v2286, %v2327
      %v2332 = vld [vmem:[%s1 + $0x30] sm:$0x1]
      %v2333 = vlaneseq
      %v2334 = vshrl.u32 %v2333, 7
      %v2335 = vsub.s32 0, %v2334
      %v2336 = vrot.slane %v2332, %v2335
      %2338 = vrot.lane.b32.xlu0 %v2336, 48
      %v2339 = vpop.permute.xlu0 %2338
      %v2341 = vmul.f32 %v425, %v2339
      %v2342 = vmul.f32 %v426, %v2339
      %v2343 = vmul.f32 %v427, %v2339
      %v2344 = vmul.f32 %v428, %v2339
      %v2345 = vmul.f32 %v429, %v2339
      %v2346 = vmul.f32 %v430, %v2339
      %v2353 = vrot.slane %v2341, 6
      %v2354 = vrot.slane %v2343, 6
      %v2355 = vsel %vm2097, %v2353, %v2354
      %v2356 = vrot.slane %v2342, 6
      %v2357 = vrot.slane %v2344, 6
      %v2358 = vsel %vm2097, %v2356, %v2357
      %v2359 = vrot.slane %v2345, 6
      %v2360 = vsel %vm2097, %v2354, %v2359
      %v2361 = vrot.slane %v2346, 6
      %v2362 = vsel %vm2097, %v2357, %v2361
      %2363 = vrot.lane.b32.xlu0 %v2355, 80
      %v2364 = vpop.permute.xlu0 %2363
      %2365 = vrot.lane.b32.xlu0 %v2358, 80
      %v2366 = vpop.permute.xlu0 %2365
      %2367 = vrot.lane.b32.xlu0 %v2360, 80
      %v2368 = vpop.permute.xlu0 %2367
      %2369 = vrot.lane.b32.xlu0 %v2362, 80
      %v2370 = vpop.permute.xlu0 %2369
      %v2371 = vsel %vm625, %v2364, %v2366
      %v2372 = vsel %vm625, %v2368, %v2370
      %v2375 = vadd.f32 %v2330, %v2371
      %v2376 = vadd.f32 %v2331, %v2372
      %v2377 = vld [vmem:[%s2] sm:$0x1]
      %v2379 = vlaneseq
      %v2380 = vshrl.u32 %v2379, 7
      %v2381 = vsub.s32 0, %v2380
      %v2382 = vrot.slane %v2377, %v2381
      %v2384 = vadd.f32 %v2375, %v2382
      %v2385 = vadd.f32 %v2376, %v2382
      %v2386 = vld [vmem:[%s5] sm:$0xff]
      %v2387 = vld [vmem:[%s5 + $0x8] sm:$0xff]
      %v2388 = vld [vmem:[%s5 + $0x10] sm:$0xff]
      %v2389 = vld [vmem:[%s5 + $0x18] sm:$0xff]
      %v2390 = vld [vmem:[%s5 + $0x20] sm:$0xff]
      %v2391 = vld [vmem:[%s5 + $0x28] sm:$0xff]
      %v2392 = vld [vmem:[%s5 + $0x30] sm:$0xff]
      %v2393 = vld [vmem:[%s5 + $0x38] sm:$0xff]
      %v2394 = vld [vmem:[%s5 + $0x40] sm:$0xff]
      %v2395 = vld [vmem:[%s5 + $0x48] sm:$0xff]
      %v2396 = vld [vmem:[%s5 + $0x50] sm:$0xff]
      %v2397 = vld [vmem:[%s5 + $0x58] sm:$0xff]
      %v2398 = vld [vmem:[%s5 + $0x60] sm:$0xff]
      %v2399 = vld [vmem:[%s5 + $0x68] sm:$0xff]
      %v2400 = vld [vmem:[%s5 + $0x70] sm:$0xff]
      %v2401 = vld [vmem:[%s5 + $0x78] sm:$0xff]
      %2402 = vmatprep.subr.mxu0 0.0
      %2403 = vmatpush1.msra.mxu0 %v2386
      %2404 = vmatprep.subr.mxu0 0.0
      %2405 = vmatpush1.msra.mxu0 %v2387
      %2406 = vmatprep.subr.mxu0 0.0
      %2407 = vmatpush1.msra.mxu0 %v2388
      %2408 = vmatprep.subr.mxu0 0.0
      %2409 = vmatpush1.msra.mxu0 %v2389
      %2410 = vmatprep.subr.mxu0 0.0
      %2411 = vmatpush1.msra.mxu0 %v2390
      %2412 = vmatprep.subr.mxu0 0.0
      %2413 = vmatpush1.msra.mxu0 %v2391
      %2414 = vmatprep.subr.mxu0 0.0
      %2415 = vmatpush1.msra.mxu0 %v2392
      %2416 = vmatprep.subr.mxu0 0.0
      %2417 = vmatpush1.msra.mxu0 %v2393
      %2418 = vmatprep.subr.mxu0 0.0
      %2419 = vmatpush1.msra.mxu0 %v2394
      %2420 = vmatprep.subr.mxu0 0.0
      %2421 = vmatpush1.msra.mxu0 %v2395
      %2422 = vmatprep.subr.mxu0 0.0
      %2423 = vmatpush1.msra.mxu0 %v2396
      %2424 = vmatprep.subr.mxu0 0.0
      %2425 = vmatpush1.msra.mxu0 %v2397
      %2426 = vmatprep.subr.mxu0 0.0
      %2427 = vmatpush1.msra.mxu0 %v2398
      %2428 = vmatprep.subr.mxu0 0.0
      %2429 = vmatpush1.msra.mxu0 %v2399
      %2430 = vmatprep.subr.mxu0 0.0
      %2431 = vmatpush1.msra.mxu0 %v2400
      %2432 = vmatprep.subr.mxu0 0.0
      %2433 = vmatpush1.msra.mxu0 %v2401
      %2434 = vmatprep.subr.mxu0 0.0
      %2435 = vmatpush1.msra.mxu0 0.0
      %2436 = vmatprep.subr.mxu0 0.0
      %2437 = vmatpush1.msra.mxu0 0.0
      %2438 = vmatprep.subr.mxu0 0.0
      %2439 = vmatpush1.msra.mxu0 0.0
      %2440 = vmatprep.subr.mxu0 0.0
      %2441 = vmatpush1.msra.mxu0 0.0
      %2442 = vmatprep.subr.mxu0 0.0
      %2443 = vmatpush1.msra.mxu0 0.0
      %2444 = vmatprep.subr.mxu0 0.0
      %2445 = vmatpush1.msra.mxu0 0.0
      %2446 = vmatprep.subr.mxu0 0.0
      %2447 = vmatpush1.msra.mxu0 0.0
      %2448 = vmatprep.subr.mxu0 0.0
      %2449 = vmatpush1.msra.mxu0 0.0
      %2450 = vmatprep.subr.mxu0 0.0
      %2451 = vmatpush1.msra.mxu0 0.0
      %2452 = vmatprep.subr.mxu0 0.0
      %2453 = vmatpush1.msra.mxu0 0.0
      %2454 = vmatprep.subr.mxu0 0.0
      %2455 = vmatpush1.msra.mxu0 0.0
      %2456 = vmatprep.subr.mxu0 0.0
      %2457 = vmatpush1.msra.mxu0 0.0
      %2458 = vmatprep.subr.mxu0 0.0
      %2459 = vmatpush1.msra.mxu0 0.0
      %2460 = vmatprep.subr.mxu0 0.0
      %2461 = vmatpush1.msra.mxu0 0.0
      %2462 = vmatprep.subr.mxu0 0.0
      %2463 = vmatpush1.msra.mxu0 0.0
      %2464 = vmatprep.subr.mxu0 0.0
      %2465 = vmatpush1.msra.mxu0 0.0
      %2466 = vmatprep.mubr.f32.mxu0 0.0
      %2467 = vmatmul.mubr.f32.gmra.mrb[0].mxu0 %v2384
      %v2468 = vpop.f32.mrb[0].mxu0
      %v2469 = vadd.f32 0.0, %v2468
      %v2470 = vpop.f32.mrb[0].mxu0
      %2471 = vmatprep.mubr.f32.mxu0 0.0
      %2472 = vmatmul.mubr.f32.gmra.mrb[0].mxu0 %v2385
      %v2473 = vpop.f32.mrb[0].mxu0
      %v2474 = vadd.f32 0.0, %v2473
      %v2475 = vpop.f32.mrb[0].mxu0
      %2476 = vdwg.mxu0
      %v2477 = vmul.f32 %v2384, %v2384
      %v2478 = vmul.f32 %v2385, %v2385
      %2479 = vmatprep.subr.mxu0 0.0
      %2480 = vmatpush1.msra.mxu0 %v2386
      %2481 = vmatprep.subr.mxu0 0.0
      %2482 = vmatpush1.msra.mxu0 %v2387
      %2483 = vmatprep.subr.mxu0 0.0
      %2484 = vmatpush1.msra.mxu0 %v2388
      %2485 = vmatprep.subr.mxu0 0.0
      %2486 = vmatpush1.msra.mxu0 %v2389
      %2487 = vmatprep.subr.mxu0 0.0
      %2488 = vmatpush1.msra.mxu0 %v2390
      %2489 = vmatprep.subr.mxu0 0.0
      %2490 = vmatpush1.msra.mxu0 %v2391
      %2491 = vmatprep.subr.mxu0 0.0
      %2492 = vmatpush1.msra.mxu0 %v2392
      %2493 = vmatprep.subr.mxu0 0.0
      %2494 = vmatpush1.msra.mxu0 %v2393
      %2495 = vmatprep.subr.mxu0 0.0
      %2496 = vmatpush1.msra.mxu0 %v2394
      %2497 = vmatprep.subr.mxu0 0.0
      %2498 = vmatpush1.msra.mxu0 %v2395
      %2499 = vmatprep.subr.mxu0 0.0
      %2500 = vmatpush1.msra.mxu0 %v2396
      %2501 = vmatprep.subr.mxu0 0.0
      %2502 = vmatpush1.msra.mxu0 %v2397
      %2503 = vmatprep.subr.mxu0 0.0
      %2504 = vmatpush1.msra.mxu0 %v2398
      %2505 = vmatprep.subr.mxu0 0.0
      %2506 = vmatpush1.msra.mxu0 %v2399
      %2507 = vmatprep.subr.mxu0 0.0
      %2508 = vmatpush1.msra.mxu0 %v2400
      %2509 = vmatprep.subr.mxu0 0.0
      %2510 = vmatpush1.msra.mxu0 %v2401
      %2511 = vmatprep.subr.mxu0 0.0
      %2512 = vmatpush1.msra.mxu0 0.0
      %2513 = vmatprep.subr.mxu0 0.0
      %2514 = vmatpush1.msra.mxu0 0.0
      %2515 = vmatprep.subr.mxu0 0.0
      %2516 = vmatpush1.msra.mxu0 0.0
      %2517 = vmatprep.subr.mxu0 0.0
      %2518 = vmatpush1.msra.mxu0 0.0
      %2519 = vmatprep.subr.mxu0 0.0
      %2520 = vmatpush1.msra.mxu0 0.0
      %2521 = vmatprep.subr.mxu0 0.0
      %2522 = vmatpush1.msra.mxu0 0.0
      %2523 = vmatprep.subr.mxu0 0.0
      %2524 = vmatpush1.msra.mxu0 0.0
      %2525 = vmatprep.subr.mxu0 0.0
      %2526 = vmatpush1.msra.mxu0 0.0
      %2527 = vmatprep.subr.mxu0 0.0
      %2528 = vmatpush1.msra.mxu0 0.0
      %2529 = vmatprep.subr.mxu0 0.0
      %2530 = vmatpush1.msra.mxu0 0.0
      %2531 = vmatprep.subr.mxu0 0.0
      %2532 = vmatpush1.msra.mxu0 0.0
      %2533 = vmatprep.subr.mxu0 0.0
      %2534 = vmatpush1.msra.mxu0 0.0
      %2535 = vmatprep.subr.mxu0 0.0
      %2536 = vmatpush1.msra.mxu0 0.0
      %2537 = vmatprep.subr.mxu0 0.0
      %2538 = vmatpush1.msra.mxu0 0.0
      %2539 = vmatprep.subr.mxu0 0.0
      %2540 = vmatpush1.msra.mxu0 0.0
      %2541 = vmatprep.subr.mxu0 0.0
      %2542 = vmatpush1.msra.mxu0 0.0
      %2543 = vmatprep.mubr.f32.mxu0 0.0
      %2544 = vmatmul.mubr.f32.gmra.mrb[0].mxu0 %v2477
      %v2545 = vpop.f32.mrb[0].mxu0
      %v2546 = vadd.f32 0.0, %v2545
      %v2547 = vpop.f32.mrb[0].mxu0
      %2548 = vmatprep.mubr.f32.mxu0 0.0
      %2549 = vmatmul.mubr.f32.gmra.mrb[0].mxu0 %v2478
      %v2550 = vpop.f32.mrb[0].mxu0
      %v2551 = vadd.f32 0.0, %v2550
      %v2552 = vpop.f32.mrb[0].mxu0
      %2553 = vdwg.mxu0
      %v2554 = vmul.f32 %v2469, %v2469
      %v2555 = vmul.f32 %v2474, %v2474
      %v2556 = vsub.f32 %v2546, %v2554
      %v2557 = vsub.f32 %v2551, %v2555
      %v2558 = vsub.f32 %v2384, %v2469
      %v2559 = vsub.f32 %v2385, %v2474
      %v2560 = vadd.f32 %v2556, 1e-06
      %v2561 = vadd.f32 %v2557, 1e-06
      %v2562 = vrsqrt.pop %v2560
      %v2563 = vrsqrt.pop %v2561
      %v2564 = vmul.f32 %v2558, %v2562
      %v2565 = vmul.f32 %v2559, %v2563
      %v2566 = vld [vmem:[%s3] sm:$0x1]
      %v2568 = vlaneseq
      %v2569 = vshrl.u32 %v2568, 7
      %v2570 = vsub.s32 0, %v2569
      %v2571 = vrot.slane %v2566, %v2570
      %v2573 = vmul.f32 %v2564, %v2571
      %v2574 = vmul.f32 %v2565, %v2571
      %v2575 = vld [vmem:[%s4] sm:$0x1]
      %v2577 = vlaneseq
      %v2578 = vshrl.u32 %v2577, 7
      %v2579 = vsub.s32 0, %v2578
      %v2580 = vrot.slane %v2575, %v2579
      %v2582 = vadd.f32 %v2573, %v2580
      %v2583 = vadd.f32 %v2574, %v2580
      %v2584 = vpack.c.bf16 %v2583, %v2582
      %v2585 = vld [vmem:[%s6] sm:$0xff]
      %v2586 = vld [vmem:[%s6 + $0x8] sm:$0xff]
      %v2587 = vld [vmem:[%s6 + $0x10] sm:$0xff]
      %v2588 = vld [vmem:[%s6 + $0x18] sm:$0xff]
      %v2589 = vld [vmem:[%s6 + $0x20] sm:$0xff]
      %v2590 = vld [vmem:[%s6 + $0x28] sm:$0xff]
      %v2591 = vld [vmem:[%s6 + $0x30] sm:$0xff]
      %v2592 = vld [vmem:[%s6 + $0x38] sm:$0xff]
      %v2593 = vld [vmem:[%s6 + $0x40] sm:$0xff]
      %v2594 = vld [vmem:[%s6 + $0x48] sm:$0xff]
      %v2595 = vld [vmem:[%s6 + $0x50] sm:$0xff]
      %v2596 = vld [vmem:[%s6 + $0x58] sm:$0xff]
      %v2597 = vld [vmem:[%s6 + $0x60] sm:$0xff]
      %v2598 = vld [vmem:[%s6 + $0x68] sm:$0xff]
      %v2599 = vld [vmem:[%s6 + $0x70] sm:$0xff]
      %v2600 = vld [vmem:[%s6 + $0x78] sm:$0xff]
      %v2601 = vld [vmem:[%s6 + $0x80] sm:$0xff]
      %v2602 = vld [vmem:[%s6 + $0x88] sm:$0xff]
      %v2603 = vld [vmem:[%s6 + $0x90] sm:$0xff]
      %v2604 = vld [vmem:[%s6 + $0x98] sm:$0xff]
      %v2605 = vld [vmem:[%s6 + $0xa0] sm:$0xff]
      %v2606 = vld [vmem:[%s6 + $0xa8] sm:$0xff]
      %v2607 = vld [vmem:[%s6 + $0xb0] sm:$0xff]
      %v2608 = vld [vmem:[%s6 + $0xb8] sm:$0xff]
      %v2609 = vld [vmem:[%s6 + $0xc0] sm:$0xff]
      %v2610 = vld [vmem:[%s6 + $0xc8] sm:$0xff]
      %v2611 = vld [vmem:[%s6 + $0xd0] sm:$0xff]
      %v2612 = vld [vmem:[%s6 + $0xd8] sm:$0xff]
      %v2613 = vld [vmem:[%s6 + $0xe0] sm:$0xff]
      %v2614 = vld [vmem:[%s6 + $0xe8] sm:$0xff]
      %v2615 = vld [vmem:[%s6 + $0xf0] sm:$0xff]
      %v2616 = vld [vmem:[%s6 + $0xf8] sm:$0xff]
      %v2617 = vld [vmem:[%s7] sm:$0xf]
      %v2619 = vlaneseq
      %v2620 = vshrl.u32 %v2619, 7
      %v2621 = vsub.s32 0, %v2620
      %v2622 = vrot.slane %v2617, %v2621
      %v2623 = vlaneseq
      %v2624 = vshrl.u32 %v2623, 7
      %v2625 = vsub.s32 1, %v2624
      %v2626 = vrot.slane %v2617, %v2625
      %v2627 = vlaneseq
      %v2628 = vshrl.u32 %v2627, 7
      %v2629 = vsub.s32 2, %v2628
      %v2630 = vrot.slane %v2617, %v2629
      %v2631 = vlaneseq
      %v2632 = vshrl.u32 %v2631, 7
      %v2633 = vsub.s32 3, %v2632
      %v2634 = vrot.slane %v2617, %v2633
      %v2671 = vunpack.c.l.b16 %v2585
      %v2672 = vunpack.c.h.b16 %v2585
      %v2673 = vunpack.c.l.b16 %v2586
      %v2674 = vunpack.c.h.b16 %v2586
      %v2675 = vunpack.c.l.b16 %v2587
      %v2676 = vunpack.c.h.b16 %v2587
      %v2677 = vunpack.c.l.b16 %v2588
      %v2678 = vunpack.c.h.b16 %v2588
      %v2679 = vunpack.c.l.b16 %v2589
      %v2680 = vunpack.c.h.b16 %v2589
      %v2681 = vunpack.c.l.b16 %v2590
      %v2682 = vunpack.c.h.b16 %v2590
      %v2683 = vunpack.c.l.b16 %v2591
      %v2684 = vunpack.c.h.b16 %v2591
      %v2685 = vunpack.c.l.b16 %v2592
      %v2686 = vunpack.c.h.b16 %v2592
      %v2687 = vunpack.c.l.b16 %v2593
      %v2688 = vunpack.c.h.b16 %v2593
      %v2689 = vunpack.c.l.b16 %v2594
      %v2690 = vunpack.c.h.b16 %v2594
      %v2691 = vunpack.c.l.b16 %v2595
      %v2692 = vunpack.c.h.b16 %v2595
      %v2693 = vunpack.c.l.b16 %v2596
      %v2694 = vunpack.c.h.b16 %v2596
      %v2695 = vunpack.c.l.b16 %v2597
      %v2696 = vunpack.c.h.b16 %v2597
      %v2697 = vunpack.c.l.b16 %v2598
      %v2698 = vunpack.c.h.b16 %v2598
      %v2699 = vunpack.c.l.b16 %v2599
      %v2700 = vunpack.c.h.b16 %v2599
      %v2701 = vunpack.c.l.b16 %v2600
      %v2702 = vunpack.c.h.b16 %v2600
      %v2703 = vunpack.c.l.b16 %v2601
      %v2704 = vunpack.c.h.b16 %v2601
      %v2705 = vunpack.c.l.b16 %v2602
      %v2706 = vunpack.c.h.b16 %v2602
      %v2707 = vunpack.c.l.b16 %v2603
      %v2708 = vunpack.c.h.b16 %v2603
      %v2709 = vunpack.c.l.b16 %v2604
      %v2710 = vunpack.c.h.b16 %v2604
      %v2711 = vunpack.c.l.b16 %v2605
      %v2712 = vunpack.c.h.b16 %v2605
      %v2713 = vunpack.c.l.b16 %v2606
      %v2714 = vunpack.c.h.b16 %v2606
      %v2715 = vunpack.c.l.b16 %v2607
      %v2716 = vunpack.c.h.b16 %v2607
      %v2717 = vunpack.c.l.b16 %v2608
      %v2718 = vunpack.c.h.b16 %v2608
      %v2719 = vunpack.c.l.b16 %v2609
      %v2720 = vunpack.c.h.b16 %v2609
      %v2721 = vunpack.c.l.b16 %v2610
      %v2722 = vunpack.c.h.b16 %v2610
      %v2723 = vunpack.c.l.b16 %v2611
      %v2724 = vunpack.c.h.b16 %v2611
      %v2725 = vunpack.c.l.b16 %v2612
      %v2726 = vunpack.c.h.b16 %v2612
      %v2727 = vunpack.c.l.b16 %v2613
      %v2728 = vunpack.c.h.b16 %v2613
      %v2729 = vunpack.c.l.b16 %v2614
      %v2730 = vunpack.c.h.b16 %v2614
      %v2731 = vunpack.c.l.b16 %v2615
      %v2732 = vunpack.c.h.b16 %v2615
      %v2733 = vunpack.c.l.b16 %v2616
      %v2734 = vunpack.c.h.b16 %v2616
      %v2735 = vpack.c.b16 %v2675, %v2671
      %v2736 = vpack.c.b16 %v2676, %v2672
      %v2737 = vpack.c.b16 %v2677, %v2673
      %v2738 = vpack.c.b16 %v2678, %v2674
      %v2739 = vpack.c.b16 %v2683, %v2679
      %v2740 = vpack.c.b16 %v2684, %v2680
      %v2741 = vpack.c.b16 %v2685, %v2681
      %v2742 = vpack.c.b16 %v2686, %v2682
      %v2743 = vpack.c.b16 %v2691, %v2687
      %v2744 = vpack.c.b16 %v2692, %v2688
      %v2745 = vpack.c.b16 %v2693, %v2689
      %v2746 = vpack.c.b16 %v2694, %v2690
      %v2747 = vpack.c.b16 %v2699, %v2695
      %v2748 = vpack.c.b16 %v2700, %v2696
      %v2749 = vpack.c.b16 %v2701, %v2697
      %v2750 = vpack.c.b16 %v2702, %v2698
      %v2751 = vpack.c.b16 %v2707, %v2703
      %v2752 = vpack.c.b16 %v2708, %v2704
      %v2753 = vpack.c.b16 %v2709, %v2705
      %v2754 = vpack.c.b16 %v2710, %v2706
      %v2755 = vpack.c.b16 %v2715, %v2711
      %v2756 = vpack.c.b16 %v2716, %v2712
      %v2757 = vpack.c.b16 %v2717, %v2713
      %v2758 = vpack.c.b16 %v2718, %v2714
      %v2759 = vpack.c.b16 %v2723, %v2719
      %v2760 = vpack.c.b16 %v2724, %v2720
      %v2761 = vpack.c.b16 %v2725, %v2721
      %v2762 = vpack.c.b16 %v2726, %v2722
      %v2763 = vpack.c.b16 %v2731, %v2727
      %v2764 = vpack.c.b16 %v2732, %v2728
      %v2765 = vpack.c.b16 %v2733, %v2729
      %v2766 = vpack.c.b16 %v2734, %v2730
      %2799 = vmatprep.subr.bf16.mxu0 %v2736
      %2800 = vmatpush1.bf16.msra.mxu0 %v2735
      %2801 = vmatprep.subr.bf16.mxu0 %v2740
      %2802 = vmatpush1.bf16.msra.mxu0 %v2739
      %2803 = vmatprep.subr.bf16.mxu0 %v2744
      %2804 = vmatpush1.bf16.msra.mxu0 %v2743
      %2805 = vmatprep.subr.bf16.mxu0 %v2748
      %2806 = vmatpush1.bf16.msra.mxu0 %v2747
      %2807 = vmatprep.subr.bf16.mxu0 %v2752
      %2808 = vmatpush1.bf16.msra.mxu0 %v2751
      %2809 = vmatprep.subr.bf16.mxu0 %v2756
      %2810 = vmatpush1.bf16.msra.mxu0 %v2755
      %2811 = vmatprep.subr.bf16.mxu0 %v2760
      %2812 = vmatpush1.bf16.msra.mxu0 %v2759
      %2813 = vmatprep.subr.bf16.mxu0 %v2764
      %2814 = vmatpush1.bf16.msra.mxu0 %v2763
      %2815 = vmatprep.subr.bf16.mxu0 0
      %2816 = vmatpush1.bf16.msra.mxu0 0
      %2817 = vmatprep.subr.bf16.mxu0 0
      %2818 = vmatpush1.bf16.msra.mxu0 0
      %2819 = vmatprep.subr.bf16.mxu0 0
      %2820 = vmatpush1.bf16.msra.mxu0 0
      %2821 = vmatprep.subr.bf16.mxu0 0
      %2822 = vmatpush1.bf16.msra.mxu0 0
      %2823 = vmatprep.subr.bf16.mxu0 0
      %2824 = vmatpush1.bf16.msra.mxu0 0
      %2825 = vmatprep.subr.bf16.mxu0 0
      %2826 = vmatpush1.bf16.msra.mxu0 0
      %2827 = vmatprep.subr.bf16.mxu0 0
      %2828 = vmatpush1.bf16.msra.mxu0 0
      %2829 = vmatprep.subr.bf16.mxu0 0
      %2830 = vmatpush1.bf16.msra.mxu0 0
      %2831 = vmatprep.mubr.bf16.mxu0 0
      %2832 = vmatmul.mubr.bf16.gmra.mrb[0].mxu0 %v2584
      %v2833 = vpop.f32.mrb[0].mxu0
      %v2834 = vadd.f32 %v2622, %v2833
      %v2835 = vpop.f32.mrb[0].mxu0
      %v2836 = vadd.f32 %v2626, %v2835
      %v2837 = vpop.f32.mrb[0].mxu0
      %v2838 = vadd.f32 %v2622, %v2837
      %v2839 = vpop.f32.mrb[0].mxu0
      %v2840 = vadd.f32 %v2626, %v2839
      %2841 = vdwg.mxu0
      %2842 = vmatprep.subr.bf16.mxu0 %v2738
      %2843 = vmatpush1.bf16.msra.mxu0 %v2737
      %2844 = vmatprep.subr.bf16.mxu0 %v2742
      %2845 = vmatpush1.bf16.msra.mxu0 %v2741
      %2846 = vmatprep.subr.bf16.mxu0 %v2746
      %2847 = vmatpush1.bf16.msra.mxu0 %v2745
      %2848 = vmatprep.subr.bf16.mxu0 %v2750
      %2849 = vmatpush1.bf16.msra.mxu0 %v2749
      %2850 = vmatprep.subr.bf16.mxu0 %v2754
      %2851 = vmatpush1.bf16.msra.mxu0 %v2753
      %2852 = vmatprep.subr.bf16.mxu0 %v2758
      %2853 = vmatpush1.bf16.msra.mxu0 %v2757
      %2854 = vmatprep.subr.bf16.mxu0 %v2762
      %2855 = vmatpush1.bf16.msra.mxu0 %v2761
      %2856 = vmatprep.subr.bf16.mxu0 %v2766
      %2857 = vmatpush1.bf16.msra.mxu0 %v2765
      %2858 = vmatprep.subr.bf16.mxu0 0
      %2859 = vmatpush1.bf16.msra.mxu0 0
      %2860 = vmatprep.subr.bf16.mxu0 0
      %2861 = vmatpush1.bf16.msra.mxu0 0
      %2862 = vmatprep.subr.bf16.mxu0 0
      %2863 = vmatpush1.bf16.msra.mxu0 0
      %2864 = vmatprep.subr.bf16.mxu0 0
      %2865 = vmatpush1.bf16.msra.mxu0 0
      %2866 = vmatprep.subr.bf16.mxu0 0
      %2867 = vmatpush1.bf16.msra.mxu0 0
      %2868 = vmatprep.subr.bf16.mxu0 0
      %2869 = vmatpush1.bf16.msra.mxu0 0
      %2870 = vmatprep.subr.bf16.mxu0 0
      %2871 = vmatpush1.bf16.msra.mxu0 0
      %2872 = vmatprep.subr.bf16.mxu0 0
      %2873 = vmatpush1.bf16.msra.mxu0 0
      %2874 = vmatprep.mubr.bf16.mxu0 0
      %2875 = vmatmul.mubr.bf16.gmra.mrb[0].mxu0 %v2584
      %v2876 = vpop.f32.mrb[0].mxu0
      %v2877 = vadd.f32 %v2630, %v2876
      %v2878 = vpop.f32.mrb[0].mxu0
      %v2879 = vadd.f32 %v2634, %v2878
      %v2880 = vpop.f32.mrb[0].mxu0
      %v2881 = vadd.f32 %v2630, %v2880
      %v2882 = vpop.f32.mrb[0].mxu0
      %v2883 = vadd.f32 %v2634, %v2882
      %2884 = vdwg.mxu0
      %v2885 = vmul.f32 %v2834, 0.5
      %v2886 = vmul.f32 %v2836, 0.5
      %v2887 = vmul.f32 %v2877, 0.5
      %v2888 = vmul.f32 %v2879, 0.5
      %v2889 = vmul.f32 %v2838, 0.5
      %v2890 = vmul.f32 %v2840, 0.5
      %v2891 = vmul.f32 %v2881, 0.5
      %v2892 = vmul.f32 %v2883, 0.5
      %v2893 = vmul.f32 %v2834, 0.70710677
      %v2894 = vmul.f32 %v2836, 0.70710677
      %v2895 = vmul.f32 %v2877, 0.70710677
      %v2896 = vmul.f32 %v2879, 0.70710677
      %v2897 = vmul.f32 %v2838, 0.70710677
      %v2898 = vmul.f32 %v2840, 0.70710677
      %v2899 = vmul.f32 %v2881, 0.70710677
      %v2900 = vmul.f32 %v2883, 0.70710677
      %v2901 = verf.f32.pop %v2893
      %v2902 = verf.f32.pop %v2894
      %v2903 = verf.f32.pop %v2895
      %v2904 = verf.f32.pop %v2896
      %v2905 = verf.f32.pop %v2897
      %v2906 = verf.f32.pop %v2898
      %v2907 = verf.f32.pop %v2899
      %v2908 = verf.f32.pop %v2900
      %v2909 = vadd.f32 %v2901, 1.0
      %v2910 = vadd.f32 %v2902, 1.0
      %v2911 = vadd.f32 %v2903, 1.0
      %v2912 = vadd.f32 %v2904, 1.0
      %v2913 = vadd.f32 %v2905, 1.0
      %v2914 = vadd.f32 %v2906, 1.0
      %v2915 = vadd.f32 %v2907, 1.0
      %v2916 = vadd.f32 %v2908, 1.0
      %v2917 = vmul.f32 %v2885, %v2909
      %v2918 = vmul.f32 %v2886, %v2910
      %v2919 = vmul.f32 %v2887, %v2911
      %v2920 = vmul.f32 %v2888, %v2912
      %v2921 = vmul.f32 %v2889, %v2913
      %v2922 = vmul.f32 %v2890, %v2914
      %v2923 = vmul.f32 %v2891, %v2915
      %v2924 = vmul.f32 %v2892, %v2916
      %v2925 = vpack.c.bf16 %v2921, %v2917
      %v2926 = vpack.c.bf16 %v2922, %v2918
      %v2927 = vpack.c.bf16 %v2923, %v2919
      %v2928 = vpack.c.bf16 %v2924, %v2920
      %v2929 = vld [vmem:[%s8] sm:$0xf]
      %v2930 = vld [vmem:[%s8 + $0x4] sm:$0xf]
      %v2931 = vld [vmem:[%s8 + $0x8] sm:$0xf]
      %v2932 = vld [vmem:[%s8 + $0xc] sm:$0xf]
      %v2933 = vld [vmem:[%s8 + $0x10] sm:$0xf]
      %v2934 = vld [vmem:[%s8 + $0x14] sm:$0xf]
      %v2935 = vld [vmem:[%s8 + $0x18] sm:$0xf]
      %v2936 = vld [vmem:[%s8 + $0x1c] sm:$0xf]
      %v2937 = vld [vmem:[%s8 + $0x20] sm:$0xf]
      %v2938 = vld [vmem:[%s8 + $0x24] sm:$0xf]
      %v2939 = vld [vmem:[%s8 + $0x28] sm:$0xf]
      %v2940 = vld [vmem:[%s8 + $0x2c] sm:$0xf]
      %v2941 = vld [vmem:[%s8 + $0x30] sm:$0xf]
      %v2942 = vld [vmem:[%s8 + $0x34] sm:$0xf]
      %v2943 = vld [vmem:[%s8 + $0x38] sm:$0xf]
      %v2944 = vld [vmem:[%s8 + $0x3c] sm:$0xf]
      %v2945 = vld [vmem:[%s8 + $0x40] sm:$0xf]
      %v2946 = vld [vmem:[%s8 + $0x44] sm:$0xf]
      %v2947 = vld [vmem:[%s8 + $0x48] sm:$0xf]
      %v2948 = vld [vmem:[%s8 + $0x4c] sm:$0xf]
      %v2949 = vld [vmem:[%s8 + $0x50] sm:$0xf]
      %v2950 = vld [vmem:[%s8 + $0x54] sm:$0xf]
      %v2951 = vld [vmem:[%s8 + $0x58] sm:$0xf]
      %v2952 = vld [vmem:[%s8 + $0x5c] sm:$0xf]
      %v2953 = vld [vmem:[%s8 + $0x60] sm:$0xf]
      %v2954 = vld [vmem:[%s8 + $0x64] sm:$0xf]
      %v2955 = vld [vmem:[%s8 + $0x68] sm:$0xf]
      %v2956 = vld [vmem:[%s8 + $0x6c] sm:$0xf]
      %v2957 = vld [vmem:[%s8 + $0x70] sm:$0xf]
      %v2958 = vld [vmem:[%s8 + $0x74] sm:$0xf]
      %v2959 = vld [vmem:[%s8 + $0x78] sm:$0xf]
      %v2960 = vld [vmem:[%s8 + $0x7c] sm:$0xf]
      %v2961 = vld [vmem:[%s8 + $0x80] sm:$0xf]
      %v2962 = vld [vmem:[%s8 + $0x84] sm:$0xf]
      %v2963 = vld [vmem:[%s8 + $0x88] sm:$0xf]
      %v2964 = vld [vmem:[%s8 + $0x8c] sm:$0xf]
      %v2965 = vld [vmem:[%s8 + $0x90] sm:$0xf]
      %v2966 = vld [vmem:[%s8 + $0x94] sm:$0xf]
      %v2967 = vld [vmem:[%s8 + $0x98] sm:$0xf]
      %v2968 = vld [vmem:[%s8 + $0x9c] sm:$0xf]
      %v2969 = vld [vmem:[%s8 + $0xa0] sm:$0xf]
      %v2970 = vld [vmem:[%s8 + $0xa4] sm:$0xf]
      %v2971 = vld [vmem:[%s8 + $0xa8] sm:$0xf]
      %v2972 = vld [vmem:[%s8 + $0xac] sm:$0xf]
      %v2973 = vld [vmem:[%s8 + $0xb0] sm:$0xf]
      %v2974 = vld [vmem:[%s8 + $0xb4] sm:$0xf]
      %v2975 = vld [vmem:[%s8 + $0xb8] sm:$0xf]
      %v2976 = vld [vmem:[%s8 + $0xbc] sm:$0xf]
      %v2977 = vld [vmem:[%s8 + $0xc0] sm:$0xf]
      %v2978 = vld [vmem:[%s8 + $0xc4] sm:$0xf]
      %v2979 = vld [vmem:[%s8 + $0xc8] sm:$0xf]
      %v2980 = vld [vmem:[%s8 + $0xcc] sm:$0xf]
      %v2981 = vld [vmem:[%s8 + $0xd0] sm:$0xf]
      %v2982 = vld [vmem:[%s8 + $0xd4] sm:$0xf]
      %v2983 = vld [vmem:[%s8 + $0xd8] sm:$0xf]
      %v2984 = vld [vmem:[%s8 + $0xdc] sm:$0xf]
      %v2985 = vld [vmem:[%s8 + $0xe0] sm:$0xf]
      %v2986 = vld [vmem:[%s8 + $0xe4] sm:$0xf]
      %v2987 = vld [vmem:[%s8 + $0xe8] sm:$0xf]
      %v2988 = vld [vmem:[%s8 + $0xec] sm:$0xf]
      %v2989 = vld [vmem:[%s8 + $0xf0] sm:$0xf]
      %v2990 = vld [vmem:[%s8 + $0xf4] sm:$0xf]
      %v2991 = vld [vmem:[%s8 + $0xf8] sm:$0xf]
      %v2992 = vld [vmem:[%s8 + $0xfc] sm:$0xf]
      %v2993 = vld [vmem:[%s9] sm:$0x1]
      %v2995 = vlaneseq
      %v2996 = vshrl.u32 %v2995, 7
      %v2997 = vsub.s32 0, %v2996
      %v2998 = vrot.slane %v2993, %v2997
      %v3064 = vunpack.c.l.b16 %v2929
      %v3065 = vunpack.c.l.b16 %v2930
      %v3066 = vunpack.c.l.b16 %v2931
      %v3067 = vunpack.c.l.b16 %v2932
      %v3068 = vunpack.c.l.b16 %v2933
      %v3069 = vunpack.c.l.b16 %v2934
      %v3070 = vunpack.c.l.b16 %v2935
      %v3071 = vunpack.c.l.b16 %v2936
      %v3072 = vunpack.c.l.b16 %v2937
      %v3073 = vunpack.c.l.b16 %v2938
      %v3074 = vunpack.c.l.b16 %v2939
      %v3075 = vunpack.c.l.b16 %v2940
      %v3076 = vunpack.c.l.b16 %v2941
      %v3077 = vunpack.c.l.b16 %v2942
      %v3078 = vunpack.c.l.b16 %v2943
      %v3079 = vunpack.c.l.b16 %v2944
      %v3080 = vunpack.c.l.b16 %v2945
      %v3081 = vunpack.c.l.b16 %v2946
      %v3082 = vunpack.c.l.b16 %v2947
      %v3083 = vunpack.c.l.b16 %v2948
      %v3084 = vunpack.c.l.b16 %v2949
      %v3085 = vunpack.c.l.b16 %v2950
      %v3086 = vunpack.c.l.b16 %v2951
      %v3087 = vunpack.c.l.b16 %v2952
      %v3088 = vunpack.c.l.b16 %v2953
      %v3089 = vunpack.c.l.b16 %v2954
      %v3090 = vunpack.c.l.b16 %v2955
      %v3091 = vunpack.c.l.b16 %v2956
      %v3092 = vunpack.c.l.b16 %v2957
      %v3093 = vunpack.c.l.b16 %v2958
      %v3094 = vunpack.c.l.b16 %v2959
      %v3095 = vunpack.c.l.b16 %v2960
      %v3096 = vunpack.c.l.b16 %v2961
      %v3097 = vunpack.c.l.b16 %v2962
      %v3098 = vunpack.c.l.b16 %v2963
      %v3099 = vunpack.c.l.b16 %v2964
      %v3100 = vunpack.c.l.b16 %v2965
      %v3101 = vunpack.c.l.b16 %v2966
      %v3102 = vunpack.c.l.b16 %v2967
      %v3103 = vunpack.c.l.b16 %v2968
      %v3104 = vunpack.c.l.b16 %v2969
      %v3105 = vunpack.c.l.b16 %v2970
      %v3106 = vunpack.c.l.b16 %v2971
      %v3107 = vunpack.c.l.b16 %v2972
      %v3108 = vunpack.c.l.b16 %v2973
      %v3109 = vunpack.c.l.b16 %v2974
      %v3110 = vunpack.c.l.b16 %v2975
      %v3111 = vunpack.c.l.b16 %v2976
      %v3112 = vunpack.c.l.b16 %v2977
      %v3113 = vunpack.c.l.b16 %v2978
      %v3114 = vunpack.c.l.b16 %v2979
      %v3115 = vunpack.c.l.b16 %v2980
      %v3116 = vunpack.c.l.b16 %v2981
      %v3117 = vunpack.c.l.b16 %v2982
      %v3118 = vunpack.c.l.b16 %v2983
      %v3119 = vunpack.c.l.b16 %v2984
      %v3120 = vunpack.c.l.b16 %v2985
      %v3121 = vunpack.c.l.b16 %v2986
      %v3122 = vunpack.c.l.b16 %v2987
      %v3123 = vunpack.c.l.b16 %v2988
      %v3124 = vunpack.c.l.b16 %v2989
      %v3125 = vunpack.c.l.b16 %v2990
      %v3126 = vunpack.c.l.b16 %v2991
      %v3127 = vunpack.c.l.b16 %v2992
      %v3128 = vpack.c.b16 %v3065, %v3064
      %v3129 = vpack.c.b16 %v3067, %v3066
      %v3130 = vpack.c.b16 %v3069, %v3068
      %v3131 = vpack.c.b16 %v3071, %v3070
      %v3132 = vpack.c.b16 %v3073, %v3072
      %v3133 = vpack.c.b16 %v3075, %v3074
      %v3134 = vpack.c.b16 %v3077, %v3076
      %v3135 = vpack.c.b16 %v3079, %v3078
      %v3136 = vpack.c.b16 %v3081, %v3080
      %v3137 = vpack.c.b16 %v3083, %v3082
      %v3138 = vpack.c.b16 %v3085, %v3084
      %v3139 = vpack.c.b16 %v3087, %v3086
      %v3140 = vpack.c.b16 %v3089, %v3088
      %v3141 = vpack.c.b16 %v3091, %v3090
      %v3142 = vpack.c.b16 %v3093, %v3092
      %v3143 = vpack.c.b16 %v3095, %v3094
      %v3144 = vpack.c.b16 %v3097, %v3096
      %v3145 = vpack.c.b16 %v3099, %v3098
      %v3146 = vpack.c.b16 %v3101, %v3100
      %v3147 = vpack.c.b16 %v3103, %v3102
      %v3148 = vpack.c.b16 %v3105, %v3104
      %v3149 = vpack.c.b16 %v3107, %v3106
      %v3150 = vpack.c.b16 %v3109, %v3108
      %v3151 = vpack.c.b16 %v3111, %v3110
      %v3152 = vpack.c.b16 %v3113, %v3112
      %v3153 = vpack.c.b16 %v3115, %v3114
      %v3154 = vpack.c.b16 %v3117, %v3116
      %v3155 = vpack.c.b16 %v3119, %v3118
      %v3156 = vpack.c.b16 %v3121, %v3120
      %v3157 = vpack.c.b16 %v3123, %v3122
      %v3158 = vpack.c.b16 %v3125, %v3124
      %v3159 = vpack.c.b16 %v3127, %v3126
      %3192 = vmatprep.subr.bf16.mxu0 0
      %3193 = vmatpush1.bf16.msra.mxu0 %v3128
      %3194 = vmatprep.subr.bf16.mxu0 0
      %3195 = vmatpush1.bf16.msra.mxu0 %v3129
      %3196 = vmatprep.subr.bf16.mxu0 0
      %3197 = vmatpush1.bf16.msra.mxu0 %v3130
      %3198 = vmatprep.subr.bf16.mxu0 0
      %3199 = vmatpush1.bf16.msra.mxu0 %v3131
      %3200 = vmatprep.subr.bf16.mxu0 0
      %3201 = vmatpush1.bf16.msra.mxu0 %v3132
      %3202 = vmatprep.subr.bf16.mxu0 0
      %3203 = vmatpush1.bf16.msra.mxu0 %v3133
      %3204 = vmatprep.subr.bf16.mxu0 0
      %3205 = vmatpush1.bf16.msra.mxu0 %v3134
      %3206 = vmatprep.subr.bf16.mxu0 0
      %3207 = vmatpush1.bf16.msra.mxu0 %v3135
      %3208 = vmatprep.subr.bf16.mxu0 0
      %3209 = vmatpush1.bf16.msra.mxu0 %v3136
      %3210 = vmatprep.subr.bf16.mxu0 0
      %3211 = vmatpush1.bf16.msra.mxu0 %v3137
      %3212 = vmatprep.subr.bf16.mxu0 0
      %3213 = vmatpush1.bf16.msra.mxu0 %v3138
      %3214 = vmatprep.subr.bf16.mxu0 0
      %3215 = vmatpush1.bf16.msra.mxu0 %v3139
      %3216 = vmatprep.subr.bf16.mxu0 0
      %3217 = vmatpush1.bf16.msra.mxu0 %v3140
      %3218 = vmatprep.subr.bf16.mxu0 0
      %3219 = vmatpush1.bf16.msra.mxu0 %v3141
      %3220 = vmatprep.subr.bf16.mxu0 0
      %3221 = vmatpush1.bf16.msra.mxu0 %v3142
      %3222 = vmatprep.subr.bf16.mxu0 0
      %3223 = vmatpush1.bf16.msra.mxu0 %v3143
      %3224 = vmatprep.mubr.bf16.mxu0 %v2926
      %3225 = vmatmul.mubr.bf16.gmra.mrb[0].mxu0 %v2925
      %v3226 = vpop.f32.mrb[0].mxu0
      %v3227 = vadd.f32 %v2998, %v3226
      %v3228 = vpop.f32.mrb[0].mxu0
      %v3229 = vpop.f32.mrb[0].mxu0
      %v3230 = vadd.f32 %v2998, %v3229
      %v3231 = vpop.f32.mrb[0].mxu0
      %3232 = vdwg.mxu0
      %3233 = vmatprep.subr.bf16.mxu0 0
      %3234 = vmatpush1.bf16.msra.mxu0 %v3144
      %3235 = vmatprep.subr.bf16.mxu0 0
      %3236 = vmatpush1.bf16.msra.mxu0 %v3145
      %3237 = vmatprep.subr.bf16.mxu0 0
      %3238 = vmatpush1.bf16.msra.mxu0 %v3146
      %3239 = vmatprep.subr.bf16.mxu0 0
      %3240 = vmatpush1.bf16.msra.mxu0 %v3147
      %3241 = vmatprep.subr.bf16.mxu0 0
      %3242 = vmatpush1.bf16.msra.mxu0 %v3148
      %3243 = vmatprep.subr.bf16.mxu0 0
      %3244 = vmatpush1.bf16.msra.mxu0 %v3149
      %3245 = vmatprep.subr.bf16.mxu0 0
      %3246 = vmatpush1.bf16.msra.mxu0 %v3150
      %3247 = vmatprep.subr.bf16.mxu0 0
      %3248 = vmatpush1.bf16.msra.mxu0 %v3151
      %3249 = vmatprep.subr.bf16.mxu0 0
      %3250 = vmatpush1.bf16.msra.mxu0 %v3152
      %3251 = vmatprep.subr.bf16.mxu0 0
      %3252 = vmatpush1.bf16.msra.mxu0 %v3153
      %3253 = vmatprep.subr.bf16.mxu0 0
      %3254 = vmatpush1.bf16.msra.mxu0 %v3154
      %3255 = vmatprep.subr.bf16.mxu0 0
      %3256 = vmatpush1.bf16.msra.mxu0 %v3155
      %3257 = vmatprep.subr.bf16.mxu0 0
      %3258 = vmatpush1.bf16.msra.mxu0 %v3156
      %3259 = vmatprep.subr.bf16.mxu0 0
      %3260 = vmatpush1.bf16.msra.mxu0 %v3157
      %3261 = vmatprep.subr.bf16.mxu0 0
      %3262 = vmatpush1.bf16.msra.mxu0 %v3158
      %3263 = vmatprep.subr.bf16.mxu0 0
      %3264 = vmatpush1.bf16.msra.mxu0 %v3159
      %3265 = vmatprep.mubr.bf16.mxu0 %v2928
      %3266 = vmatmul.mubr.bf16.gmra.mrb[0].mxu0 %v2927
      %v3267 = vpop.f32.mrb[0].mxu0
      %v3268 = vadd.f32 %v3227, %v3267
      %v3269 = vpop.f32.mrb[0].mxu0
      %v3270 = vpop.f32.mrb[0].mxu0
      %v3271 = vadd.f32 %v3230, %v3270
      %v3272 = vpop.f32.mrb[0].mxu0
      %3273 = vdwg.mxu0
      %v3274 = vld [vmem:[%s10] sm:$0x1]
      %v3276 = vlaneseq
      %v3277 = vshrl.u32 %v3276, 7
      %v3278 = vsub.s32 0, %v3277
      %v3279 = vrot.slane %v3274, %v3278
      %v3281 = vmul.f32 %v3268, %v3279
      %v3282 = vmul.f32 %v3271, %v3279
      %v3283 = vadd.f32 %v3281, %v388
      %v3284 = vadd.f32 %v3282, %v389
      %3285 = vst [vmem:[%s386] sm:$0xff] %v3283
      %3286 = vst [vmem:[%s386 + $0x8] sm:$0xff] %v3284
      %p3287 = scmp.lt.s32.totalorder %s22, 1
      %s3288 = scalar_select %p3287, %s22, 1
      %s3289 = smul.addr %s3288, 2
      %s3290 = smul.addr %s3289, 8
      %s3291 = scalar_lea.vmem %s11, %s3290
      // Predicated region
      $region65: #{convnext_block.1} parent=63 // pred_check
        %p3292 = pneg %p276
      $region66: #{convnext_block.1} parent=63 // pred_check_branch
        %3294 = sbr.rel (%p3292) target = $region68
      $region67: #{convnext_block.1} parent=63 // pred_region
        _
      $region68: #{convnext_block.1} parent=63 // pred_fallthru
        _
    $region64: #{convnext_block.1} parent=5 // pred_fallthru
      _
    %p3295 = scmp.le.s32.totalorder 2, %s17
    // Predicated region
    $region69: #{convnext_block.1} parent=5 // pred_check
      %p3296 = pneg %p3295
    $region70: #{convnext_block.1} parent=5 // pred_check_branch
      %3298 = sbr.rel (%p3296) target = $region72
    $region71: #{convnext_block.1} parent=5 // pred_region
      %s3299 = ssub.s32 %s17, 2
      // Predicated region
      $region73: #{convnext_block.1} parent=71 // pred_check
        %p3300 = pneg %p282
      $region74: #{convnext_block.1} parent=71 // pred_check_branch
        %3302 = sbr.rel (%p3300) target = $region76
      $region75: #{convnext_block.1} parent=71 // pred_region
        %p3303 = scmp.lt.s32.totalorder %s23, 1
        %s3304 = scalar_select %p3303, %s23, 1
        %s3305 = smul.addr %s3304, 2
        %s3306 = smul.addr %s3305, 8
        %s3307 = scalar_lea.vmem %s11, %s3306
      $region76: #{convnext_block.1} parent=71 // pred_fallthru
        _
    $region72: #{convnext_block.1} parent=5 // pred_fallthru
      _
  $region6: #{convnext_block.1} parent=0 // loop_footer
    %s21 = sadd.s32 1, %s17
  $region7: #{convnext_block.1} parent=0 // loop_footer_branch
    %16 = sbr.rel target = $region3
  $region8: #{convnext_block.1} parent=0 // loop_exit
    _

</llo_original>
